<compile_context>
chip_gen: v7x
topology: tpu7x:2x2x1
jax: 0.10.0
libtpu: 0.0.40
codegen_flags: <defaults>
</compile_context>

<pallas_src>
import functools
import math

import jax
import jax.numpy as jnp
from jax import lax
from jax.experimental import pallas as pl
from jax.experimental.pallas import tpu as pltpu


def _round_up(n, m):
    return ((n + m - 1) // m) * m


def _conv3x3(x, w_ref, b_ref, head, masks_ref, W, mxu_dtype):
    """3x3 'SAME' conv on a (Cin, Nb*HW) slab: 9 lane-rolls (XLU) + 9 per-tap MXU matmuls.

    x:         (Cin, NbHW) f32 value, spatial(+batch) flattened onto the lane axis.
    w_ref:     (2, 9, Cout, Cin) Ref; [head, tap] with tap = ky*3 + kx (HWIO order).
    b_ref:     (2, Cout, 1) Ref.
    masks_ref: (9, NbHW) Ref of per-tap border-validity masks (corner taps pre-combined).
    Returns (Cout, NbHW) f32.
    """
    nbhw = x.shape[1]
    accs = [None, None, None]                      # break the serial f32 add chain (ILP)
    for k in range(9):
        dy = k // 3 - 1
        dx = k % 3 - 1
        off = dy * W + dx
        # shifted[c, p] == x[c, p + off] for in-bounds taps (static shift -> XLU rotate).
        shifted = x if off == 0 else pltpu.roll(x, shift=(-off) % nbhw, axis=1)
        if off != 0:
            # Zero taps that read across an image border (also kills cross-sample wraps).
            shifted = shifted * masks_ref[k:k + 1, :]
        term = jnp.dot(w_ref[head, k].astype(mxu_dtype),
                       shifted.astype(mxu_dtype),
                       preferred_element_type=jnp.float32)     # (Cout, NbHW) on the MXU
        i = k % 3
        accs[i] = term if accs[i] is None else accs[i] + term
    return (accs[0] + accs[1]) + (accs[2] + b_ref[head])        # bias folded in once


def _concat_model_kernel(x_ref, masks_ref, w1_ref, b1_ref, w2_ref, b2_ref, out_ref,
                         *, W, logit_threshold, mxu_dtype):
    x = x_ref[...].astype(jnp.float32)                          # (C_p, NbHW)

    # ---- binary_unet(x): Conv3x3 -> ReLU -> Conv3x3 ----
    h = jnp.maximum(_conv3x3(x, w1_ref, b1_ref, 0, masks_ref, W, mxu_dtype), 0.0)
    binary_out = _conv3x3(h, w2_ref, b2_ref, 0, masks_ref, W, mxu_dtype)   # (COUT=1, NbHW)

    # ---- gate: (sigmoid(b) > t) <=> (b > logit(t))  (sigmoid strictly monotone) ----
    mult = (binary_out > logit_threshold).astype(jnp.float32)   # (1, NbHW)
    regr_in = x * mult                                          # broadcast over channels

    # ---- regression_unet(x * multiplier) ----
    h2 = jnp.maximum(_conv3x3(regr_in, w1_ref, b1_ref, 1, masks_ref, W, mxu_dtype), 0.0)
    regr_out = _conv3x3(h2, w2_ref, b2_ref, 1, masks_ref, W, mxu_dtype)

    # Single lane-dense sublane-2 store of both heads.
    out_ref[...] = jnp.concatenate([binary_out, regr_out], axis=0).astype(out_ref.dtype)


def concatenated_model_forward(x_nchw, params, threshold=0.5, nb_target=16,
                               mxu_dtype=jnp.float32):
    """x_nchw: (N, C, H, W) float32.  Returns (binary_out, regr_out) in NCHW."""
    N, C, H, W = x_nchw.shape
    HW = H * W
    F = params["wb1"].shape[-1]
    COUT = params["wb2"].shape[-1]
    assert COUT == 1, "gating broadcast assumes a single-channel binary map (COUT == 1)"

    C_p = _round_up(C, 8)     # fill sublanes / give the MXU full-width contractions
    F_p = _round_up(F, 8)

    # ---- choose samples-per-grid-step Nb (divisor of N) ----
    #  * keep >= 2 grid steps when N >= 2 so v7x's two TensorCores both get work
    #  * keep the per-step VMEM estimate under ~12 MiB (fits every generation's default)
    vmem_budget = 12 * 1024 * 1024
    bytes_per_lane = 4 * (3 * C_p + 2 * F_p + 2 * 9 + 4 * (2 * COUT) + 8)
    nb_vmem_cap = max(1, vmem_budget // (HW * bytes_per_lane))
    nb_cap = min(nb_target, nb_vmem_cap, N if N < 2 else max(1, N // 2))
    Nb = max(d for d in range(1, N + 1) if N % d == 0 and d <= nb_cap)
    Ng = N // Nb
    NbHW = Nb * HW

    # ---- layout prep: batch onto the lane axis, channels padded to sublane multiple ----
    x3 = x_nchw.reshape(N, C, HW).astype(jnp.float32)
    x3 = x3.reshape(Ng, Nb, C, HW).transpose(0, 2, 1, 3).reshape(Ng, C, NbHW)
    x3 = jnp.pad(x3, ((0, 0), (0, C_p - C), (0, 0)))

    # ---- per-tap border-validity masks, precomputed host-side (corner taps pre-combined) ----
    pos = jnp.arange(NbHW, dtype=jnp.int32) % HW
    row = pos // W
    col = pos % W
    mask_rows = []
    for k in range(9):
        dy = k // 3 - 1
        dx = k % 3 - 1
        ok = ((row + dy >= 0) & (row + dy <= H - 1) &
              (col + dx >= 0) & (col + dx <= W - 1))
        mask_rows.append(ok.astype(jnp.float32))
    masks = jnp.stack(mask_rows, axis=0)                         # (9, NbHW)

    # ---- weights: HWIO (3,3,Cin,Cout) -> per-tap (9, Cout_p, Cin_p), heads stacked ----
    def wtaps(w, cin_p, cout_p):
        kh, kw, cin, cout = w.shape
        wt = jnp.transpose(w.reshape(kh * kw, cin, cout), (0, 2, 1)).astype(jnp.float32)
        return jnp.pad(wt, ((0, 0), (0, cout_p - cout), (0, cin_p - cin)))

    def bcol(b, cout_p):
        bb = b.reshape(-1, 1).astype(jnp.float32)
        return jnp.pad(bb, ((0, cout_p - bb.shape[0]), (0, 0)))

    w1 = jnp.stack([wtaps(params["wb1"], C_p, F_p), wtaps(params["wr1"], C_p, F_p)])   # (2,9,F_p,C_p)
    w2 = jnp.stack([wtaps(params["wb2"], F_p, COUT), wtaps(params["wr2"], F_p, COUT)])  # (2,9,COUT,F_p)
    b1 = jnp.stack([bcol(params["bb1"], F_p), bcol(params["br1"], F_p)])                # (2,F_p,1)
    b2 = jnp.stack([bcol(params["bb2"], COUT), bcol(params["br2"], COUT)])              # (2,COUT,1)

    # ---- threshold -> logit (monotone sigmoid => exact gate equivalence) ----
    t = float(threshold)
    if 0.0 < t < 1.0:
        logit_t = math.log(t / (1.0 - t))
    elif t <= 0.0:
        logit_t = float("-inf")
    else:
        logit_t = float("inf")

    kernel = functools.partial(_concat_model_kernel, W=W,
                               logit_threshold=logit_t, mxu_dtype=mxu_dtype)

    x_spec = pl.BlockSpec((None, C_p, NbHW), lambda g: (g, 0, 0))
    out_spec = pl.BlockSpec((None, 2 * COUT, NbHW), lambda g: (g, 0, 0))

    def const_spec(a):   # small constant arrays: full-array block, constant index map
        nd = a.ndim
        return pl.BlockSpec(a.shape, lambda g, _nd=nd: (0,) * _nd)

    packed = pl.pallas_call(
        kernel,
        grid=(Ng,),
        out_shape=jax.ShapeDtypeStruct((Ng, 2 * COUT, NbHW), jnp.float32),
        in_specs=[x_spec, const_spec(masks),
                  const_spec(w1), const_spec(b1), const_spec(w2), const_spec(b2)],
        out_specs=out_spec,
        compiler_params=pltpu.CompilerParams(
            dimension_semantics=("parallel",)),
    )(x3, masks, w1, b1, w2, b2)

    # ---- unpack: (Ng, 2*COUT, Nb*HW) -> two NCHW tensors ----
    packed = packed.reshape(Ng, 2 * COUT, Nb, HW).transpose(0, 2, 1, 3).reshape(N, 2 * COUT, H, W)
    return packed[:, :COUT], packed[:, COUT:]


# ------------------------- pure-JAX reference (for verification) -------------------------

def _conv_ref(x_nhwc, w_hwio, b):
    y = lax.conv_general_dilated(x_nhwc, w_hwio, (1, 1), "SAME",
                                 dimension_numbers=("NHWC", "HWIO", "NHWC"))
    return y + b.reshape(1, 1, 1, -1)


def _model_ref(x_nchw, params, threshold=0.5):
    x = jnp.transpose(x_nchw, (0, 2, 3, 1)).astype(jnp.float32)
    h = jnp.maximum(_conv_ref(x, params["wb1"], params["bb1"]), 0.0)
    binary_out = _conv_ref(h, params["wb2"], params["bb2"])
    mult = (jax.nn.sigmoid(binary_out) > threshold).astype(jnp.float32)
    ri = x * mult
    h2 = jnp.maximum(_conv_ref(ri, params["wr1"], params["br1"]), 0.0)
    regr_out = _conv_ref(h2, params["wr2"], params["br2"])
    return (jnp.transpose(binary_out, (0, 3, 1, 2)),
            jnp.transpose(regr_out, (0, 3, 1, 2)))


if __name__ == "__main__":
    # Small shapes consistent with the module's forward: NCHW image input.
    N, C, H, W = 2, 4, 16, 16
    F, COUT = 8, 1
    threshold = 0.5

    key = jax.random.PRNGKey(0)
    keys = jax.random.split(key, 9)
    x = jax.random.normal(keys[0], (N, C, H, W), dtype=jnp.float32)

    def winit(k, shape, scale=0.2):
        return (scale * jax.random.normal(k, shape)).astype(jnp.float32)

    params = {
        "wb1": winit(keys[1], (3, 3, C, F)), "bb1": winit(keys[2], (F,)),
        "wb2": winit(keys[3], (3, 3, F, COUT)), "bb2": winit(keys[4], (COUT,)),
        "wr1": winit(keys[5], (3, 3, C, F)), "br1": winit(keys[6], (F,)),
        "wr2": winit(keys[7], (3, 3, F, COUT)), "br2": winit(keys[8], (COUT,)),
    }

    bin_out, regr_out = jax.jit(
        lambda xx: concatenated_model_forward(xx, params, threshold))(x)
    jax.block_until_ready((bin_out, regr_out))

    bin_ref, regr_ref = _model_ref(x, params, threshold)
    assert bin_out.shape == (N, COUT, H, W) and regr_out.shape == (N, COUT, H, W)
    assert jnp.allclose(bin_out, bin_ref, atol=1e-3, rtol=1e-3)
    assert jnp.allclose(regr_out, regr_ref, atol=1e-3, rtol=1e-3)

    print("KERNEL_OK")
</pallas_src>

<mosaic_0001>
module attributes {stable_mosaic.version = 11 : i64} {
  func.func @_concat_model_kernel(%arg0: i32, %arg1: memref<1x8x256xf32, #tpu.memory_space<vmem>>, %arg2: memref<9x256xf32, #tpu.memory_space<vmem>>, %arg3: memref<2x9x8x8xf32, #tpu.memory_space<vmem>>, %arg4: memref<2x8x1xf32, #tpu.memory_space<vmem>>, %arg5: memref<2x9x1x8xf32, #tpu.memory_space<vmem>>, %arg6: memref<2x1x1xf32, #tpu.memory_space<vmem>>, %arg7: memref<1x2x256xf32, #tpu.memory_space<vmem>>) attributes {dimension_semantics = [#tpu.dimension_semantics<parallel>], iteration_bounds = array<i64: 2>, scalar_prefetch = 0 : i64, scratch_operands = 0 : i64, tpu.core_type = #tpu.core_type<tc>, window_params = [{transform_indices = @transform_0, window_bounds = array<i64: 1, 8, 256>}, {pipeline_mode = #tpu.pipeline_mode<synchronous>, transform_indices = @transform_1, window_bounds = array<i64: 9, 256>}, {pipeline_mode = #tpu.pipeline_mode<synchronous>, transform_indices = @transform_2, window_bounds = array<i64: 2, 9, 8, 8>}, {pipeline_mode = #tpu.pipeline_mode<synchronous>, transform_indices = @transform_3, window_bounds = array<i64: 2, 8, 1>}, {pipeline_mode = #tpu.pipeline_mode<synchronous>, transform_indices = @transform_4, window_bounds = array<i64: 2, 9, 1, 8>}, {pipeline_mode = #tpu.pipeline_mode<synchronous>, transform_indices = @transform_5, window_bounds = array<i64: 2, 1, 1>}, {transform_indices = @transform_6, window_bounds = array<i64: 1, 2, 256>}]} {
    %c0 = arith.constant 0 : index
    %c0_0 = arith.constant 0 : index
    %c0_1 = arith.constant 0 : index
    %0 = vector.load %arg1[%c0, %c0_0, %c0_1] : memref<1x8x256xf32, #tpu.memory_space<vmem>>, vector<1x8x256xf32>
    %1 = vector.shape_cast %0 : vector<1x8x256xf32> to vector<8x256xf32>
    %c17_i32 = arith.constant 17 : i32
    %2 = tpu.dynamic_rotate %1 by %c17_i32 dim 1 : vector<8x256xf32>, i32 -> vector<8x256xf32>
    %c0_2 = arith.constant 0 : index
    %c0_3 = arith.constant 0 : index
    %3 = vector.load %arg2[%c0_2, %c0_3] : memref<9x256xf32, #tpu.memory_space<vmem>>, vector<1x256xf32>
    %4 = vector.broadcast %3 : vector<1x256xf32> to vector<8x256xf32>
    %5 = arith.mulf %2, %4 : vector<8x256xf32>
    %c0_4 = arith.constant 0 : index
    %c0_5 = arith.constant 0 : index
    %c0_6 = arith.constant 0 : index
    %c0_7 = arith.constant 0 : index
    %6 = vector.load %arg3[%c0_4, %c0_5, %c0_6, %c0_7] : memref<2x9x8x8xf32, #tpu.memory_space<vmem>>, vector<1x1x8x8xf32>
    %7 = vector.shape_cast %6 : vector<1x1x8x8xf32> to vector<8x8xf32>
    %cst = arith.constant dense<0.000000e+00> : vector<8x256xf32>
    %8 = tpu.matmul %7, %5, %cst {dimension_numbers = #tpu.dot_dimension_numbers<[1], [0], [0], [1], [0, 0, 1, 1], [], []>} : vector<8x8xf32>, vector<8x256xf32>, vector<8x256xf32> -> vector<8x256xf32>
    %c16_i32 = arith.constant 16 : i32
    %9 = tpu.dynamic_rotate %1 by %c16_i32 dim 1 : vector<8x256xf32>, i32 -> vector<8x256xf32>
    %c1 = arith.constant 1 : index
    %c0_8 = arith.constant 0 : index
    %10 = vector.load %arg2[%c1, %c0_8] : memref<9x256xf32, #tpu.memory_space<vmem>>, vector<1x256xf32>
    %11 = vector.broadcast %10 : vector<1x256xf32> to vector<8x256xf32>
    %12 = arith.mulf %9, %11 : vector<8x256xf32>
    %c0_9 = arith.constant 0 : index
    %c1_10 = arith.constant 1 : index
    %c0_11 = arith.constant 0 : index
    %c0_12 = arith.constant 0 : index
    %13 = vector.load %arg3[%c0_9, %c1_10, %c0_11, %c0_12] : memref<2x9x8x8xf32, #tpu.memory_space<vmem>>, vector<1x1x8x8xf32>
    %14 = vector.shape_cast %13 : vector<1x1x8x8xf32> to vector<8x8xf32>
    %cst_13 = arith.constant dense<0.000000e+00> : vector<8x256xf32>
    %15 = tpu.matmul %14, %12, %cst_13 {dimension_numbers = #tpu.dot_dimension_numbers<[1], [0], [0], [1], [0, 0, 1, 1], [], []>} : vector<8x8xf32>, vector<8x256xf32>, vector<8x256xf32> -> vector<8x256xf32>
    %c15_i32 = arith.constant 15 : i32
    %16 = tpu.dynamic_rotate %1 by %c15_i32 dim 1 : vector<8x256xf32>, i32 -> vector<8x256xf32>
    %c2 = arith.constant 2 : index
    %c0_14 = arith.constant 0 : index
    %17 = vector.load %arg2[%c2, %c0_14] : memref<9x256xf32, #tpu.memory_space<vmem>>, vector<1x256xf32>
    %18 = vector.broadcast %17 : vector<1x256xf32> to vector<8x256xf32>
    %19 = arith.mulf %16, %18 : vector<8x256xf32>
    %c0_15 = arith.constant 0 : index
    %c2_16 = arith.constant 2 : index
    %c0_17 = arith.constant 0 : index
    %c0_18 = arith.constant 0 : index
    %20 = vector.load %arg3[%c0_15, %c2_16, %c0_17, %c0_18] : memref<2x9x8x8xf32, #tpu.memory_space<vmem>>, vector<1x1x8x8xf32>
    %21 = vector.shape_cast %20 : vector<1x1x8x8xf32> to vector<8x8xf32>
    %cst_19 = arith.constant dense<0.000000e+00> : vector<8x256xf32>
    %22 = tpu.matmul %21, %19, %cst_19 {dimension_numbers = #tpu.dot_dimension_numbers<[1], [0], [0], [1], [0, 0, 1, 1], [], []>} : vector<8x8xf32>, vector<8x256xf32>, vector<8x256xf32> -> vector<8x256xf32>
    %c1_i32 = arith.constant 1 : i32
    %23 = tpu.dynamic_rotate %1 by %c1_i32 dim 1 : vector<8x256xf32>, i32 -> vector<8x256xf32>
    %c3 = arith.constant 3 : index
    %c0_20 = arith.constant 0 : index
    %24 = vector.load %arg2[%c3, %c0_20] : memref<9x256xf32, #tpu.memory_space<vmem>>, vector<1x256xf32>
    %25 = vector.broadcast %24 : vector<1x256xf32> to vector<8x256xf32>
    %26 = arith.mulf %23, %25 : vector<8x256xf32>
    %c0_21 = arith.constant 0 : index
    %c3_22 = arith.constant 3 : index
    %c0_23 = arith.constant 0 : index
    %c0_24 = arith.constant 0 : index
    %27 = vector.load %arg3[%c0_21, %c3_22, %c0_23, %c0_24] : memref<2x9x8x8xf32, #tpu.memory_space<vmem>>, vector<1x1x8x8xf32>
    %28 = vector.shape_cast %27 : vector<1x1x8x8xf32> to vector<8x8xf32>
    %cst_25 = arith.constant dense<0.000000e+00> : vector<8x256xf32>
    %29 = tpu.matmul %28, %26, %cst_25 {dimension_numbers = #tpu.dot_dimension_numbers<[1], [0], [0], [1], [0, 0, 1, 1], [], []>} : vector<8x8xf32>, vector<8x256xf32>, vector<8x256xf32> -> vector<8x256xf32>
    %30 = arith.addf %8, %29 : vector<8x256xf32>
    %c0_26 = arith.constant 0 : index
    %c4 = arith.constant 4 : index
    %c0_27 = arith.constant 0 : index
    %c0_28 = arith.constant 0 : index
    %31 = vector.load %arg3[%c0_26, %c4, %c0_27, %c0_28] : memref<2x9x8x8xf32, #tpu.memory_space<vmem>>, vector<1x1x8x8xf32>
    %32 = vector.shape_cast %31 : vector<1x1x8x8xf32> to vector<8x8xf32>
    %cst_29 = arith.constant dense<0.000000e+00> : vector<8x256xf32>
    %33 = tpu.matmul %32, %1, %cst_29 {dimension_numbers = #tpu.dot_dimension_numbers<[1], [0], [0], [1], [0, 0, 1, 1], [], []>} : vector<8x8xf32>, vector<8x256xf32>, vector<8x256xf32> -> vector<8x256xf32>
    %34 = arith.addf %15, %33 : vector<8x256xf32>
    %c255_i32 = arith.constant 255 : i32
    %35 = tpu.dynamic_rotate %1 by %c255_i32 dim 1 : vector<8x256xf32>, i32 -> vector<8x256xf32>
    %c5 = arith.constant 5 : index
    %c0_30 = arith.constant 0 : index
    %36 = vector.load %arg2[%c5, %c0_30] : memref<9x256xf32, #tpu.memory_space<vmem>>, vector<1x256xf32>
    %37 = vector.broadcast %36 : vector<1x256xf32> to vector<8x256xf32>
    %38 = arith.mulf %35, %37 : vector<8x256xf32>
    %c0_31 = arith.constant 0 : index
    %c5_32 = arith.constant 5 : index
    %c0_33 = arith.constant 0 : index
    %c0_34 = arith.constant 0 : index
    %39 = vector.load %arg3[%c0_31, %c5_32, %c0_33, %c0_34] : memref<2x9x8x8xf32, #tpu.memory_space<vmem>>, vector<1x1x8x8xf32>
    %40 = vector.shape_cast %39 : vector<1x1x8x8xf32> to vector<8x8xf32>
    %cst_35 = arith.constant dense<0.000000e+00> : vector<8x256xf32>
    %41 = tpu.matmul %40, %38, %cst_35 {dimension_numbers = #tpu.dot_dimension_numbers<[1], [0], [0], [1], [0, 0, 1, 1], [], []>} : vector<8x8xf32>, vector<8x256xf32>, vector<8x256xf32> -> vector<8x256xf32>
    %42 = arith.addf %22, %41 : vector<8x256xf32>
    %c241_i32 = arith.constant 241 : i32
    %43 = tpu.dynamic_rotate %1 by %c241_i32 dim 1 : vector<8x256xf32>, i32 -> vector<8x256xf32>
    %c6 = arith.constant 6 : index
    %c0_36 = arith.constant 0 : index
    %44 = vector.load %arg2[%c6, %c0_36] : memref<9x256xf32, #tpu.memory_space<vmem>>, vector<1x256xf32>
    %45 = vector.broadcast %44 : vector<1x256xf32> to vector<8x256xf32>
    %46 = arith.mulf %43, %45 : vector<8x256xf32>
    %c0_37 = arith.constant 0 : index
    %c6_38 = arith.constant 6 : index
    %c0_39 = arith.constant 0 : index
    %c0_40 = arith.constant 0 : index
    %47 = vector.load %arg3[%c0_37, %c6_38, %c0_39, %c0_40] : memref<2x9x8x8xf32, #tpu.memory_space<vmem>>, vector<1x1x8x8xf32>
    %48 = vector.shape_cast %47 : vector<1x1x8x8xf32> to vector<8x8xf32>
    %cst_41 = arith.constant dense<0.000000e+00> : vector<8x256xf32>
    %49 = tpu.matmul %48, %46, %cst_41 {dimension_numbers = #tpu.dot_dimension_numbers<[1], [0], [0], [1], [0, 0, 1, 1], [], []>} : vector<8x8xf32>, vector<8x256xf32>, vector<8x256xf32> -> vector<8x256xf32>
    %50 = arith.addf %30, %49 : vector<8x256xf32>
    %c240_i32 = arith.constant 240 : i32
    %51 = tpu.dynamic_rotate %1 by %c240_i32 dim 1 : vector<8x256xf32>, i32 -> vector<8x256xf32>
    %c7 = arith.constant 7 : index
    %c0_42 = arith.constant 0 : index
    %52 = vector.load %arg2[%c7, %c0_42] : memref<9x256xf32, #tpu.memory_space<vmem>>, vector<1x256xf32>
    %53 = vector.broadcast %52 : vector<1x256xf32> to vector<8x256xf32>
    %54 = arith.mulf %51, %53 : vector<8x256xf32>
    %c0_43 = arith.constant 0 : index
    %c7_44 = arith.constant 7 : index
    %c0_45 = arith.constant 0 : index
    %c0_46 = arith.constant 0 : index
    %55 = vector.load %arg3[%c0_43, %c7_44, %c0_45, %c0_46] : memref<2x9x8x8xf32, #tpu.memory_space<vmem>>, vector<1x1x8x8xf32>
    %56 = vector.shape_cast %55 : vector<1x1x8x8xf32> to vector<8x8xf32>
    %cst_47 = arith.constant dense<0.000000e+00> : vector<8x256xf32>
    %57 = tpu.matmul %56, %54, %cst_47 {dimension_numbers = #tpu.dot_dimension_numbers<[1], [0], [0], [1], [0, 0, 1, 1], [], []>} : vector<8x8xf32>, vector<8x256xf32>, vector<8x256xf32> -> vector<8x256xf32>
    %58 = arith.addf %34, %57 : vector<8x256xf32>
    %c239_i32 = arith.constant 239 : i32
    %59 = tpu.dynamic_rotate %1 by %c239_i32 dim 1 : vector<8x256xf32>, i32 -> vector<8x256xf32>
    %c8 = arith.constant 8 : index
    %c0_48 = arith.constant 0 : index
    %60 = vector.load %arg2[%c8, %c0_48] : memref<9x256xf32, #tpu.memory_space<vmem>>, vector<1x256xf32>
    %61 = vector.broadcast %60 : vector<1x256xf32> to vector<8x256xf32>
    %62 = arith.mulf %59, %61 : vector<8x256xf32>
    %c0_49 = arith.constant 0 : index
    %c8_50 = arith.constant 8 : index
    %c0_51 = arith.constant 0 : index
    %c0_52 = arith.constant 0 : index
    %63 = vector.load %arg3[%c0_49, %c8_50, %c0_51, %c0_52] : memref<2x9x8x8xf32, #tpu.memory_space<vmem>>, vector<1x1x8x8xf32>
    %64 = vector.shape_cast %63 : vector<1x1x8x8xf32> to vector<8x8xf32>
    %cst_53 = arith.constant dense<0.000000e+00> : vector<8x256xf32>
    %65 = tpu.matmul %64, %62, %cst_53 {dimension_numbers = #tpu.dot_dimension_numbers<[1], [0], [0], [1], [0, 0, 1, 1], [], []>} : vector<8x8xf32>, vector<8x256xf32>, vector<8x256xf32> -> vector<8x256xf32>
    %66 = arith.addf %42, %65 : vector<8x256xf32>
    %67 = arith.addf %50, %58 : vector<8x256xf32>
    %c0_54 = arith.constant 0 : index
    %c0_55 = arith.constant 0 : index
    %c0_56 = arith.constant 0 : index
    %68 = vector.load %arg4[%c0_54, %c0_55, %c0_56] : memref<2x8x1xf32, #tpu.memory_space<vmem>>, vector<1x8x1xf32>
    %69 = vector.shape_cast %68 : vector<1x8x1xf32> to vector<8x1xf32>
    %70 = vector.broadcast %69 : vector<8x1xf32> to vector<8x256xf32>
    %71 = arith.addf %66, %70 : vector<8x256xf32>
    %72 = arith.addf %67, %71 : vector<8x256xf32>
    %cst_57 = arith.constant 0.000000e+00 : f32
    %73 = vector.broadcast %cst_57 : f32 to vector<8x256xf32>
    %74 = arith.maximumf %72, %73 : vector<8x256xf32>
    %c17_i32_58 = arith.constant 17 : i32
    %75 = tpu.dynamic_rotate %74 by %c17_i32_58 dim 1 : vector<8x256xf32>, i32 -> vector<8x256xf32>
    %c0_59 = arith.constant 0 : index
    %c0_60 = arith.constant 0 : index
    %76 = vector.load %arg2[%c0_59, %c0_60] : memref<9x256xf32, #tpu.memory_space<vmem>>, vector<1x256xf32>
    %77 = vector.broadcast %76 : vector<1x256xf32> to vector<8x256xf32>
    %78 = arith.mulf %75, %77 : vector<8x256xf32>
    %c0_61 = arith.constant 0 : index
    %c0_62 = arith.constant 0 : index
    %c0_63 = arith.constant 0 : index
    %c0_64 = arith.constant 0 : index
    %79 = vector.load %arg5[%c0_61, %c0_62, %c0_63, %c0_64] : memref<2x9x1x8xf32, #tpu.memory_space<vmem>>, vector<1x1x1x8xf32>
    %80 = vector.shape_cast %79 : vector<1x1x1x8xf32> to vector<1x8xf32>
    %cst_65 = arith.constant dense<0.000000e+00> : vector<1x256xf32>
    %81 = tpu.matmul %80, %78, %cst_65 {dimension_numbers = #tpu.dot_dimension_numbers<[1], [0], [0], [1], [0, 0, 1, 1], [], []>} : vector<1x8xf32>, vector<8x256xf32>, vector<1x256xf32> -> vector<1x256xf32>
    %c16_i32_66 = arith.constant 16 : i32
    %82 = tpu.dynamic_rotate %74 by %c16_i32_66 dim 1 : vector<8x256xf32>, i32 -> vector<8x256xf32>
    %c1_67 = arith.constant 1 : index
    %c0_68 = arith.constant 0 : index
    %83 = vector.load %arg2[%c1_67, %c0_68] : memref<9x256xf32, #tpu.memory_space<vmem>>, vector<1x256xf32>
    %84 = vector.broadcast %83 : vector<1x256xf32> to vector<8x256xf32>
    %85 = arith.mulf %82, %84 : vector<8x256xf32>
    %c0_69 = arith.constant 0 : index
    %c1_70 = arith.constant 1 : index
    %c0_71 = arith.constant 0 : index
    %c0_72 = arith.constant 0 : index
    %86 = vector.load %arg5[%c0_69, %c1_70, %c0_71, %c0_72] : memref<2x9x1x8xf32, #tpu.memory_space<vmem>>, vector<1x1x1x8xf32>
    %87 = vector.shape_cast %86 : vector<1x1x1x8xf32> to vector<1x8xf32>
    %cst_73 = arith.constant dense<0.000000e+00> : vector<1x256xf32>
    %88 = tpu.matmul %87, %85, %cst_73 {dimension_numbers = #tpu.dot_dimension_numbers<[1], [0], [0], [1], [0, 0, 1, 1], [], []>} : vector<1x8xf32>, vector<8x256xf32>, vector<1x256xf32> -> vector<1x256xf32>
    %c15_i32_74 = arith.constant 15 : i32
    %89 = tpu.dynamic_rotate %74 by %c15_i32_74 dim 1 : vector<8x256xf32>, i32 -> vector<8x256xf32>
    %c2_75 = arith.constant 2 : index
    %c0_76 = arith.constant 0 : index
    %90 = vector.load %arg2[%c2_75, %c0_76] : memref<9x256xf32, #tpu.memory_space<vmem>>, vector<1x256xf32>
    %91 = vector.broadcast %90 : vector<1x256xf32> to vector<8x256xf32>
    %92 = arith.mulf %89, %91 : vector<8x256xf32>
    %c0_77 = arith.constant 0 : index
    %c2_78 = arith.constant 2 : index
    %c0_79 = arith.constant 0 : index
    %c0_80 = arith.constant 0 : index
    %93 = vector.load %arg5[%c0_77, %c2_78, %c0_79, %c0_80] : memref<2x9x1x8xf32, #tpu.memory_space<vmem>>, vector<1x1x1x8xf32>
    %94 = vector.shape_cast %93 : vector<1x1x1x8xf32> to vector<1x8xf32>
    %cst_81 = arith.constant dense<0.000000e+00> : vector<1x256xf32>
    %95 = tpu.matmul %94, %92, %cst_81 {dimension_numbers = #tpu.dot_dimension_numbers<[1], [0], [0], [1], [0, 0, 1, 1], [], []>} : vector<1x8xf32>, vector<8x256xf32>, vector<1x256xf32> -> vector<1x256xf32>
    %c1_i32_82 = arith.constant 1 : i32
    %96 = tpu.dynamic_rotate %74 by %c1_i32_82 dim 1 : vector<8x256xf32>, i32 -> vector<8x256xf32>
    %c3_83 = arith.constant 3 : index
    %c0_84 = arith.constant 0 : index
    %97 = vector.load %arg2[%c3_83, %c0_84] : memref<9x256xf32, #tpu.memory_space<vmem>>, vector<1x256xf32>
    %98 = vector.broadcast %97 : vector<1x256xf32> to vector<8x256xf32>
    %99 = arith.mulf %96, %98 : vector<8x256xf32>
    %c0_85 = arith.constant 0 : index
    %c3_86 = arith.constant 3 : index
    %c0_87 = arith.constant 0 : index
    %c0_88 = arith.constant 0 : index
    %100 = vector.load %arg5[%c0_85, %c3_86, %c0_87, %c0_88] : memref<2x9x1x8xf32, #tpu.memory_space<vmem>>, vector<1x1x1x8xf32>
    %101 = vector.shape_cast %100 : vector<1x1x1x8xf32> to vector<1x8xf32>
    %cst_89 = arith.constant dense<0.000000e+00> : vector<1x256xf32>
    %102 = tpu.matmul %101, %99, %cst_89 {dimension_numbers = #tpu.dot_dimension_numbers<[1], [0], [0], [1], [0, 0, 1, 1], [], []>} : vector<1x8xf32>, vector<8x256xf32>, vector<1x256xf32> -> vector<1x256xf32>
    %103 = arith.addf %81, %102 : vector<1x256xf32>
    %c0_90 = arith.constant 0 : index
    %c4_91 = arith.constant 4 : index
    %c0_92 = arith.constant 0 : index
    %c0_93 = arith.constant 0 : index
    %104 = vector.load %arg5[%c0_90, %c4_91, %c0_92, %c0_93] : memref<2x9x1x8xf32, #tpu.memory_space<vmem>>, vector<1x1x1x8xf32>
    %105 = vector.shape_cast %104 : vector<1x1x1x8xf32> to vector<1x8xf32>
    %cst_94 = arith.constant dense<0.000000e+00> : vector<1x256xf32>
    %106 = tpu.matmul %105, %74, %cst_94 {dimension_numbers = #tpu.dot_dimension_numbers<[1], [0], [0], [1], [0, 0, 1, 1], [], []>} : vector<1x8xf32>, vector<8x256xf32>, vector<1x256xf32> -> vector<1x256xf32>
    %107 = arith.addf %88, %106 : vector<1x256xf32>
    %c255_i32_95 = arith.constant 255 : i32
    %108 = tpu.dynamic_rotate %74 by %c255_i32_95 dim 1 : vector<8x256xf32>, i32 -> vector<8x256xf32>
    %c5_96 = arith.constant 5 : index
    %c0_97 = arith.constant 0 : index
    %109 = vector.load %arg2[%c5_96, %c0_97] : memref<9x256xf32, #tpu.memory_space<vmem>>, vector<1x256xf32>
    %110 = vector.broadcast %109 : vector<1x256xf32> to vector<8x256xf32>
    %111 = arith.mulf %108, %110 : vector<8x256xf32>
    %c0_98 = arith.constant 0 : index
    %c5_99 = arith.constant 5 : index
    %c0_100 = arith.constant 0 : index
    %c0_101 = arith.constant 0 : index
    %112 = vector.load %arg5[%c0_98, %c5_99, %c0_100, %c0_101] : memref<2x9x1x8xf32, #tpu.memory_space<vmem>>, vector<1x1x1x8xf32>
    %113 = vector.shape_cast %112 : vector<1x1x1x8xf32> to vector<1x8xf32>
    %cst_102 = arith.constant dense<0.000000e+00> : vector<1x256xf32>
    %114 = tpu.matmul %113, %111, %cst_102 {dimension_numbers = #tpu.dot_dimension_numbers<[1], [0], [0], [1], [0, 0, 1, 1], [], []>} : vector<1x8xf32>, vector<8x256xf32>, vector<1x256xf32> -> vector<1x256xf32>
    %115 = arith.addf %95, %114 : vector<1x256xf32>
    %c241_i32_103 = arith.constant 241 : i32
    %116 = tpu.dynamic_rotate %74 by %c241_i32_103 dim 1 : vector<8x256xf32>, i32 -> vector<8x256xf32>
    %c6_104 = arith.constant 6 : index
    %c0_105 = arith.constant 0 : index
    %117 = vector.load %arg2[%c6_104, %c0_105] : memref<9x256xf32, #tpu.memory_space<vmem>>, vector<1x256xf32>
    %118 = vector.broadcast %117 : vector<1x256xf32> to vector<8x256xf32>
    %119 = arith.mulf %116, %118 : vector<8x256xf32>
    %c0_106 = arith.constant 0 : index
    %c6_107 = arith.constant 6 : index
    %c0_108 = arith.constant 0 : index
    %c0_109 = arith.constant 0 : index
    %120 = vector.load %arg5[%c0_106, %c6_107, %c0_108, %c0_109] : memref<2x9x1x8xf32, #tpu.memory_space<vmem>>, vector<1x1x1x8xf32>
    %121 = vector.shape_cast %120 : vector<1x1x1x8xf32> to vector<1x8xf32>
    %cst_110 = arith.constant dense<0.000000e+00> : vector<1x256xf32>
    %122 = tpu.matmul %121, %119, %cst_110 {dimension_numbers = #tpu.dot_dimension_numbers<[1], [0], [0], [1], [0, 0, 1, 1], [], []>} : vector<1x8xf32>, vector<8x256xf32>, vector<1x256xf32> -> vector<1x256xf32>
    %123 = arith.addf %103, %122 : vector<1x256xf32>
    %c240_i32_111 = arith.constant 240 : i32
    %124 = tpu.dynamic_rotate %74 by %c240_i32_111 dim 1 : vector<8x256xf32>, i32 -> vector<8x256xf32>
    %c7_112 = arith.constant 7 : index
    %c0_113 = arith.constant 0 : index
    %125 = vector.load %arg2[%c7_112, %c0_113] : memref<9x256xf32, #tpu.memory_space<vmem>>, vector<1x256xf32>
    %126 = vector.broadcast %125 : vector<1x256xf32> to vector<8x256xf32>
    %127 = arith.mulf %124, %126 : vector<8x256xf32>
    %c0_114 = arith.constant 0 : index
    %c7_115 = arith.constant 7 : index
    %c0_116 = arith.constant 0 : index
    %c0_117 = arith.constant 0 : index
    %128 = vector.load %arg5[%c0_114, %c7_115, %c0_116, %c0_117] : memref<2x9x1x8xf32, #tpu.memory_space<vmem>>, vector<1x1x1x8xf32>
    %129 = vector.shape_cast %128 : vector<1x1x1x8xf32> to vector<1x8xf32>
    %cst_118 = arith.constant dense<0.000000e+00> : vector<1x256xf32>
    %130 = tpu.matmul %129, %127, %cst_118 {dimension_numbers = #tpu.dot_dimension_numbers<[1], [0], [0], [1], [0, 0, 1, 1], [], []>} : vector<1x8xf32>, vector<8x256xf32>, vector<1x256xf32> -> vector<1x256xf32>
    %131 = arith.addf %107, %130 : vector<1x256xf32>
    %c239_i32_119 = arith.constant 239 : i32
    %132 = tpu.dynamic_rotate %74 by %c239_i32_119 dim 1 : vector<8x256xf32>, i32 -> vector<8x256xf32>
    %c8_120 = arith.constant 8 : index
    %c0_121 = arith.constant 0 : index
    %133 = vector.load %arg2[%c8_120, %c0_121] : memref<9x256xf32, #tpu.memory_space<vmem>>, vector<1x256xf32>
    %134 = vector.broadcast %133 : vector<1x256xf32> to vector<8x256xf32>
    %135 = arith.mulf %132, %134 : vector<8x256xf32>
    %c0_122 = arith.constant 0 : index
    %c8_123 = arith.constant 8 : index
    %c0_124 = arith.constant 0 : index
    %c0_125 = arith.constant 0 : index
    %136 = vector.load %arg5[%c0_122, %c8_123, %c0_124, %c0_125] : memref<2x9x1x8xf32, #tpu.memory_space<vmem>>, vector<1x1x1x8xf32>
    %137 = vector.shape_cast %136 : vector<1x1x1x8xf32> to vector<1x8xf32>
    %cst_126 = arith.constant dense<0.000000e+00> : vector<1x256xf32>
    %138 = tpu.matmul %137, %135, %cst_126 {dimension_numbers = #tpu.dot_dimension_numbers<[1], [0], [0], [1], [0, 0, 1, 1], [], []>} : vector<1x8xf32>, vector<8x256xf32>, vector<1x256xf32> -> vector<1x256xf32>
    %139 = arith.addf %115, %138 : vector<1x256xf32>
    %140 = arith.addf %123, %131 : vector<1x256xf32>
    %c0_127 = arith.constant 0 : index
    %c0_128 = arith.constant 0 : index
    %c0_129 = arith.constant 0 : index
    %141 = vector.load %arg6[%c0_127, %c0_128, %c0_129] : memref<2x1x1xf32, #tpu.memory_space<vmem>>, vector<1x1x1xf32>
    %142 = vector.shape_cast %141 : vector<1x1x1xf32> to vector<1x1xf32>
    %143 = vector.broadcast %142 : vector<1x1xf32> to vector<1x256xf32>
    %144 = arith.addf %139, %143 : vector<1x256xf32>
    %145 = arith.addf %140, %144 : vector<1x256xf32>
    %cst_130 = arith.constant 0.000000e+00 : f32
    %146 = vector.broadcast %cst_130 : f32 to vector<1x256xf32>
    %147 = arith.cmpf ogt, %145, %146 : vector<1x256xf32>
    %148 = arith.extui %147 : vector<1x256xi1> to vector<1x256xi32>
    %149 = arith.sitofp %148 : vector<1x256xi32> to vector<1x256xf32>
    %150 = vector.broadcast %149 : vector<1x256xf32> to vector<8x256xf32>
    %151 = arith.mulf %1, %150 : vector<8x256xf32>
    %c17_i32_131 = arith.constant 17 : i32
    %152 = tpu.dynamic_rotate %151 by %c17_i32_131 dim 1 : vector<8x256xf32>, i32 -> vector<8x256xf32>
    %c0_132 = arith.constant 0 : index
    %c0_133 = arith.constant 0 : index
    %153 = vector.load %arg2[%c0_132, %c0_133] : memref<9x256xf32, #tpu.memory_space<vmem>>, vector<1x256xf32>
    %154 = vector.broadcast %153 : vector<1x256xf32> to vector<8x256xf32>
    %155 = arith.mulf %152, %154 : vector<8x256xf32>
    %c1_134 = arith.constant 1 : index
    %c0_135 = arith.constant 0 : index
    %c0_136 = arith.constant 0 : index
    %c0_137 = arith.constant 0 : index
    %156 = vector.load %arg3[%c1_134, %c0_135, %c0_136, %c0_137] : memref<2x9x8x8xf32, #tpu.memory_space<vmem>>, vector<1x1x8x8xf32>
    %157 = vector.shape_cast %156 : vector<1x1x8x8xf32> to vector<8x8xf32>
    %cst_138 = arith.constant dense<0.000000e+00> : vector<8x256xf32>
    %158 = tpu.matmul %157, %155, %cst_138 {dimension_numbers = #tpu.dot_dimension_numbers<[1], [0], [0], [1], [0, 0, 1, 1], [], []>} : vector<8x8xf32>, vector<8x256xf32>, vector<8x256xf32> -> vector<8x256xf32>
    %c16_i32_139 = arith.constant 16 : i32
    %159 = tpu.dynamic_rotate %151 by %c16_i32_139 dim 1 : vector<8x256xf32>, i32 -> vector<8x256xf32>
    %c1_140 = arith.constant 1 : index
    %c0_141 = arith.constant 0 : index
    %160 = vector.load %arg2[%c1_140, %c0_141] : memref<9x256xf32, #tpu.memory_space<vmem>>, vector<1x256xf32>
    %161 = vector.broadcast %160 : vector<1x256xf32> to vector<8x256xf32>
    %162 = arith.mulf %159, %161 : vector<8x256xf32>
    %c1_142 = arith.constant 1 : index
    %c1_143 = arith.constant 1 : index
    %c0_144 = arith.constant 0 : index
    %c0_145 = arith.constant 0 : index
    %163 = vector.load %arg3[%c1_142, %c1_143, %c0_144, %c0_145] : memref<2x9x8x8xf32, #tpu.memory_space<vmem>>, vector<1x1x8x8xf32>
    %164 = vector.shape_cast %163 : vector<1x1x8x8xf32> to vector<8x8xf32>
    %cst_146 = arith.constant dense<0.000000e+00> : vector<8x256xf32>
    %165 = tpu.matmul %164, %162, %cst_146 {dimension_numbers = #tpu.dot_dimension_numbers<[1], [0], [0], [1], [0, 0, 1, 1], [], []>} : vector<8x8xf32>, vector<8x256xf32>, vector<8x256xf32> -> vector<8x256xf32>
    %c15_i32_147 = arith.constant 15 : i32
    %166 = tpu.dynamic_rotate %151 by %c15_i32_147 dim 1 : vector<8x256xf32>, i32 -> vector<8x256xf32>
    %c2_148 = arith.constant 2 : index
    %c0_149 = arith.constant 0 : index
    %167 = vector.load %arg2[%c2_148, %c0_149] : memref<9x256xf32, #tpu.memory_space<vmem>>, vector<1x256xf32>
    %168 = vector.broadcast %167 : vector<1x256xf32> to vector<8x256xf32>
    %169 = arith.mulf %166, %168 : vector<8x256xf32>
    %c1_150 = arith.constant 1 : index
    %c2_151 = arith.constant 2 : index
    %c0_152 = arith.constant 0 : index
    %c0_153 = arith.constant 0 : index
    %170 = vector.load %arg3[%c1_150, %c2_151, %c0_152, %c0_153] : memref<2x9x8x8xf32, #tpu.memory_space<vmem>>, vector<1x1x8x8xf32>
    %171 = vector.shape_cast %170 : vector<1x1x8x8xf32> to vector<8x8xf32>
    %cst_154 = arith.constant dense<0.000000e+00> : vector<8x256xf32>
    %172 = tpu.matmul %171, %169, %cst_154 {dimension_numbers = #tpu.dot_dimension_numbers<[1], [0], [0], [1], [0, 0, 1, 1], [], []>} : vector<8x8xf32>, vector<8x256xf32>, vector<8x256xf32> -> vector<8x256xf32>
    %c1_i32_155 = arith.constant 1 : i32
    %173 = tpu.dynamic_rotate %151 by %c1_i32_155 dim 1 : vector<8x256xf32>, i32 -> vector<8x256xf32>
    %c3_156 = arith.constant 3 : index
    %c0_157 = arith.constant 0 : index
    %174 = vector.load %arg2[%c3_156, %c0_157] : memref<9x256xf32, #tpu.memory_space<vmem>>, vector<1x256xf32>
    %175 = vector.broadcast %174 : vector<1x256xf32> to vector<8x256xf32>
    %176 = arith.mulf %173, %175 : vector<8x256xf32>
    %c1_158 = arith.constant 1 : index
    %c3_159 = arith.constant 3 : index
    %c0_160 = arith.constant 0 : index
    %c0_161 = arith.constant 0 : index
    %177 = vector.load %arg3[%c1_158, %c3_159, %c0_160, %c0_161] : memref<2x9x8x8xf32, #tpu.memory_space<vmem>>, vector<1x1x8x8xf32>
    %178 = vector.shape_cast %177 : vector<1x1x8x8xf32> to vector<8x8xf32>
    %cst_162 = arith.constant dense<0.000000e+00> : vector<8x256xf32>
    %179 = tpu.matmul %178, %176, %cst_162 {dimension_numbers = #tpu.dot_dimension_numbers<[1], [0], [0], [1], [0, 0, 1, 1], [], []>} : vector<8x8xf32>, vector<8x256xf32>, vector<8x256xf32> -> vector<8x256xf32>
    %180 = arith.addf %158, %179 : vector<8x256xf32>
    %c1_163 = arith.constant 1 : index
    %c4_164 = arith.constant 4 : index
    %c0_165 = arith.constant 0 : index
    %c0_166 = arith.constant 0 : index
    %181 = vector.load %arg3[%c1_163, %c4_164, %c0_165, %c0_166] : memref<2x9x8x8xf32, #tpu.memory_space<vmem>>, vector<1x1x8x8xf32>
    %182 = vector.shape_cast %181 : vector<1x1x8x8xf32> to vector<8x8xf32>
    %cst_167 = arith.constant dense<0.000000e+00> : vector<8x256xf32>
    %183 = tpu.matmul %182, %151, %cst_167 {dimension_numbers = #tpu.dot_dimension_numbers<[1], [0], [0], [1], [0, 0, 1, 1], [], []>} : vector<8x8xf32>, vector<8x256xf32>, vector<8x256xf32> -> vector<8x256xf32>
    %184 = arith.addf %165, %183 : vector<8x256xf32>
    %c255_i32_168 = arith.constant 255 : i32
    %185 = tpu.dynamic_rotate %151 by %c255_i32_168 dim 1 : vector<8x256xf32>, i32 -> vector<8x256xf32>
    %c5_169 = arith.constant 5 : index
    %c0_170 = arith.constant 0 : index
    %186 = vector.load %arg2[%c5_169, %c0_170] : memref<9x256xf32, #tpu.memory_space<vmem>>, vector<1x256xf32>
    %187 = vector.broadcast %186 : vector<1x256xf32> to vector<8x256xf32>
    %188 = arith.mulf %185, %187 : vector<8x256xf32>
    %c1_171 = arith.constant 1 : index
    %c5_172 = arith.constant 5 : index
    %c0_173 = arith.constant 0 : index
    %c0_174 = arith.constant 0 : index
    %189 = vector.load %arg3[%c1_171, %c5_172, %c0_173, %c0_174] : memref<2x9x8x8xf32, #tpu.memory_space<vmem>>, vector<1x1x8x8xf32>
    %190 = vector.shape_cast %189 : vector<1x1x8x8xf32> to vector<8x8xf32>
    %cst_175 = arith.constant dense<0.000000e+00> : vector<8x256xf32>
    %191 = tpu.matmul %190, %188, %cst_175 {dimension_numbers = #tpu.dot_dimension_numbers<[1], [0], [0], [1], [0, 0, 1, 1], [], []>} : vector<8x8xf32>, vector<8x256xf32>, vector<8x256xf32> -> vector<8x256xf32>
    %192 = arith.addf %172, %191 : vector<8x256xf32>
    %c241_i32_176 = arith.constant 241 : i32
    %193 = tpu.dynamic_rotate %151 by %c241_i32_176 dim 1 : vector<8x256xf32>, i32 -> vector<8x256xf32>
    %c6_177 = arith.constant 6 : index
    %c0_178 = arith.constant 0 : index
    %194 = vector.load %arg2[%c6_177, %c0_178] : memref<9x256xf32, #tpu.memory_space<vmem>>, vector<1x256xf32>
    %195 = vector.broadcast %194 : vector<1x256xf32> to vector<8x256xf32>
    %196 = arith.mulf %193, %195 : vector<8x256xf32>
    %c1_179 = arith.constant 1 : index
    %c6_180 = arith.constant 6 : index
    %c0_181 = arith.constant 0 : index
    %c0_182 = arith.constant 0 : index
    %197 = vector.load %arg3[%c1_179, %c6_180, %c0_181, %c0_182] : memref<2x9x8x8xf32, #tpu.memory_space<vmem>>, vector<1x1x8x8xf32>
    %198 = vector.shape_cast %197 : vector<1x1x8x8xf32> to vector<8x8xf32>
    %cst_183 = arith.constant dense<0.000000e+00> : vector<8x256xf32>
    %199 = tpu.matmul %198, %196, %cst_183 {dimension_numbers = #tpu.dot_dimension_numbers<[1], [0], [0], [1], [0, 0, 1, 1], [], []>} : vector<8x8xf32>, vector<8x256xf32>, vector<8x256xf32> -> vector<8x256xf32>
    %200 = arith.addf %180, %199 : vector<8x256xf32>
    %c240_i32_184 = arith.constant 240 : i32
    %201 = tpu.dynamic_rotate %151 by %c240_i32_184 dim 1 : vector<8x256xf32>, i32 -> vector<8x256xf32>
    %c7_185 = arith.constant 7 : index
    %c0_186 = arith.constant 0 : index
    %202 = vector.load %arg2[%c7_185, %c0_186] : memref<9x256xf32, #tpu.memory_space<vmem>>, vector<1x256xf32>
    %203 = vector.broadcast %202 : vector<1x256xf32> to vector<8x256xf32>
    %204 = arith.mulf %201, %203 : vector<8x256xf32>
    %c1_187 = arith.constant 1 : index
    %c7_188 = arith.constant 7 : index
    %c0_189 = arith.constant 0 : index
    %c0_190 = arith.constant 0 : index
    %205 = vector.load %arg3[%c1_187, %c7_188, %c0_189, %c0_190] : memref<2x9x8x8xf32, #tpu.memory_space<vmem>>, vector<1x1x8x8xf32>
    %206 = vector.shape_cast %205 : vector<1x1x8x8xf32> to vector<8x8xf32>
    %cst_191 = arith.constant dense<0.000000e+00> : vector<8x256xf32>
    %207 = tpu.matmul %206, %204, %cst_191 {dimension_numbers = #tpu.dot_dimension_numbers<[1], [0], [0], [1], [0, 0, 1, 1], [], []>} : vector<8x8xf32>, vector<8x256xf32>, vector<8x256xf32> -> vector<8x256xf32>
    %208 = arith.addf %184, %207 : vector<8x256xf32>
    %c239_i32_192 = arith.constant 239 : i32
    %209 = tpu.dynamic_rotate %151 by %c239_i32_192 dim 1 : vector<8x256xf32>, i32 -> vector<8x256xf32>
    %c8_193 = arith.constant 8 : index
    %c0_194 = arith.constant 0 : index
    %210 = vector.load %arg2[%c8_193, %c0_194] : memref<9x256xf32, #tpu.memory_space<vmem>>, vector<1x256xf32>
    %211 = vector.broadcast %210 : vector<1x256xf32> to vector<8x256xf32>
    %212 = arith.mulf %209, %211 : vector<8x256xf32>
    %c1_195 = arith.constant 1 : index
    %c8_196 = arith.constant 8 : index
    %c0_197 = arith.constant 0 : index
    %c0_198 = arith.constant 0 : index
    %213 = vector.load %arg3[%c1_195, %c8_196, %c0_197, %c0_198] : memref<2x9x8x8xf32, #tpu.memory_space<vmem>>, vector<1x1x8x8xf32>
    %214 = vector.shape_cast %213 : vector<1x1x8x8xf32> to vector<8x8xf32>
    %cst_199 = arith.constant dense<0.000000e+00> : vector<8x256xf32>
    %215 = tpu.matmul %214, %212, %cst_199 {dimension_numbers = #tpu.dot_dimension_numbers<[1], [0], [0], [1], [0, 0, 1, 1], [], []>} : vector<8x8xf32>, vector<8x256xf32>, vector<8x256xf32> -> vector<8x256xf32>
    %216 = arith.addf %192, %215 : vector<8x256xf32>
    %217 = arith.addf %200, %208 : vector<8x256xf32>
    %c1_200 = arith.constant 1 : index
    %c0_201 = arith.constant 0 : index
    %c0_202 = arith.constant 0 : index
    %218 = vector.load %arg4[%c1_200, %c0_201, %c0_202] : memref<2x8x1xf32, #tpu.memory_space<vmem>>, vector<1x8x1xf32>
    %219 = vector.shape_cast %218 : vector<1x8x1xf32> to vector<8x1xf32>
    %220 = vector.broadcast %219 : vector<8x1xf32> to vector<8x256xf32>
    %221 = arith.addf %216, %220 : vector<8x256xf32>
    %222 = arith.addf %217, %221 : vector<8x256xf32>
    %cst_203 = arith.constant 0.000000e+00 : f32
    %223 = vector.broadcast %cst_203 : f32 to vector<8x256xf32>
    %224 = arith.maximumf %222, %223 : vector<8x256xf32>
    %c17_i32_204 = arith.constant 17 : i32
    %225 = tpu.dynamic_rotate %224 by %c17_i32_204 dim 1 : vector<8x256xf32>, i32 -> vector<8x256xf32>
    %c0_205 = arith.constant 0 : index
    %c0_206 = arith.constant 0 : index
    %226 = vector.load %arg2[%c0_205, %c0_206] : memref<9x256xf32, #tpu.memory_space<vmem>>, vector<1x256xf32>
    %227 = vector.broadcast %226 : vector<1x256xf32> to vector<8x256xf32>
    %228 = arith.mulf %225, %227 : vector<8x256xf32>
    %c1_207 = arith.constant 1 : index
    %c0_208 = arith.constant 0 : index
    %c0_209 = arith.constant 0 : index
    %c0_210 = arith.constant 0 : index
    %229 = vector.load %arg5[%c1_207, %c0_208, %c0_209, %c0_210] : memref<2x9x1x8xf32, #tpu.memory_space<vmem>>, vector<1x1x1x8xf32>
    %230 = vector.shape_cast %229 : vector<1x1x1x8xf32> to vector<1x8xf32>
    %cst_211 = arith.constant dense<0.000000e+00> : vector<1x256xf32>
    %231 = tpu.matmul %230, %228, %cst_211 {dimension_numbers = #tpu.dot_dimension_numbers<[1], [0], [0], [1], [0, 0, 1, 1], [], []>} : vector<1x8xf32>, vector<8x256xf32>, vector<1x256xf32> -> vector<1x256xf32>
    %c16_i32_212 = arith.constant 16 : i32
    %232 = tpu.dynamic_rotate %224 by %c16_i32_212 dim 1 : vector<8x256xf32>, i32 -> vector<8x256xf32>
    %c1_213 = arith.constant 1 : index
    %c0_214 = arith.constant 0 : index
    %233 = vector.load %arg2[%c1_213, %c0_214] : memref<9x256xf32, #tpu.memory_space<vmem>>, vector<1x256xf32>
    %234 = vector.broadcast %233 : vector<1x256xf32> to vector<8x256xf32>
    %235 = arith.mulf %232, %234 : vector<8x256xf32>
    %c1_215 = arith.constant 1 : index
    %c1_216 = arith.constant 1 : index
    %c0_217 = arith.constant 0 : index
    %c0_218 = arith.constant 0 : index
    %236 = vector.load %arg5[%c1_215, %c1_216, %c0_217, %c0_218] : memref<2x9x1x8xf32, #tpu.memory_space<vmem>>, vector<1x1x1x8xf32>
    %237 = vector.shape_cast %236 : vector<1x1x1x8xf32> to vector<1x8xf32>
    %cst_219 = arith.constant dense<0.000000e+00> : vector<1x256xf32>
    %238 = tpu.matmul %237, %235, %cst_219 {dimension_numbers = #tpu.dot_dimension_numbers<[1], [0], [0], [1], [0, 0, 1, 1], [], []>} : vector<1x8xf32>, vector<8x256xf32>, vector<1x256xf32> -> vector<1x256xf32>
    %c15_i32_220 = arith.constant 15 : i32
    %239 = tpu.dynamic_rotate %224 by %c15_i32_220 dim 1 : vector<8x256xf32>, i32 -> vector<8x256xf32>
    %c2_221 = arith.constant 2 : index
    %c0_222 = arith.constant 0 : index
    %240 = vector.load %arg2[%c2_221, %c0_222] : memref<9x256xf32, #tpu.memory_space<vmem>>, vector<1x256xf32>
    %241 = vector.broadcast %240 : vector<1x256xf32> to vector<8x256xf32>
    %242 = arith.mulf %239, %241 : vector<8x256xf32>
    %c1_223 = arith.constant 1 : index
    %c2_224 = arith.constant 2 : index
    %c0_225 = arith.constant 0 : index
    %c0_226 = arith.constant 0 : index
    %243 = vector.load %arg5[%c1_223, %c2_224, %c0_225, %c0_226] : memref<2x9x1x8xf32, #tpu.memory_space<vmem>>, vector<1x1x1x8xf32>
    %244 = vector.shape_cast %243 : vector<1x1x1x8xf32> to vector<1x8xf32>
    %cst_227 = arith.constant dense<0.000000e+00> : vector<1x256xf32>
    %245 = tpu.matmul %244, %242, %cst_227 {dimension_numbers = #tpu.dot_dimension_numbers<[1], [0], [0], [1], [0, 0, 1, 1], [], []>} : vector<1x8xf32>, vector<8x256xf32>, vector<1x256xf32> -> vector<1x256xf32>
    %c1_i32_228 = arith.constant 1 : i32
    %246 = tpu.dynamic_rotate %224 by %c1_i32_228 dim 1 : vector<8x256xf32>, i32 -> vector<8x256xf32>
    %c3_229 = arith.constant 3 : index
    %c0_230 = arith.constant 0 : index
    %247 = vector.load %arg2[%c3_229, %c0_230] : memref<9x256xf32, #tpu.memory_space<vmem>>, vector<1x256xf32>
    %248 = vector.broadcast %247 : vector<1x256xf32> to vector<8x256xf32>
    %249 = arith.mulf %246, %248 : vector<8x256xf32>
    %c1_231 = arith.constant 1 : index
    %c3_232 = arith.constant 3 : index
    %c0_233 = arith.constant 0 : index
    %c0_234 = arith.constant 0 : index
    %250 = vector.load %arg5[%c1_231, %c3_232, %c0_233, %c0_234] : memref<2x9x1x8xf32, #tpu.memory_space<vmem>>, vector<1x1x1x8xf32>
    %251 = vector.shape_cast %250 : vector<1x1x1x8xf32> to vector<1x8xf32>
    %cst_235 = arith.constant dense<0.000000e+00> : vector<1x256xf32>
    %252 = tpu.matmul %251, %249, %cst_235 {dimension_numbers = #tpu.dot_dimension_numbers<[1], [0], [0], [1], [0, 0, 1, 1], [], []>} : vector<1x8xf32>, vector<8x256xf32>, vector<1x256xf32> -> vector<1x256xf32>
    %253 = arith.addf %231, %252 : vector<1x256xf32>
    %c1_236 = arith.constant 1 : index
    %c4_237 = arith.constant 4 : index
    %c0_238 = arith.constant 0 : index
    %c0_239 = arith.constant 0 : index
    %254 = vector.load %arg5[%c1_236, %c4_237, %c0_238, %c0_239] : memref<2x9x1x8xf32, #tpu.memory_space<vmem>>, vector<1x1x1x8xf32>
    %255 = vector.shape_cast %254 : vector<1x1x1x8xf32> to vector<1x8xf32>
    %cst_240 = arith.constant dense<0.000000e+00> : vector<1x256xf32>
    %256 = tpu.matmul %255, %224, %cst_240 {dimension_numbers = #tpu.dot_dimension_numbers<[1], [0], [0], [1], [0, 0, 1, 1], [], []>} : vector<1x8xf32>, vector<8x256xf32>, vector<1x256xf32> -> vector<1x256xf32>
    %257 = arith.addf %238, %256 : vector<1x256xf32>
    %c255_i32_241 = arith.constant 255 : i32
    %258 = tpu.dynamic_rotate %224 by %c255_i32_241 dim 1 : vector<8x256xf32>, i32 -> vector<8x256xf32>
    %c5_242 = arith.constant 5 : index
    %c0_243 = arith.constant 0 : index
    %259 = vector.load %arg2[%c5_242, %c0_243] : memref<9x256xf32, #tpu.memory_space<vmem>>, vector<1x256xf32>
    %260 = vector.broadcast %259 : vector<1x256xf32> to vector<8x256xf32>
    %261 = arith.mulf %258, %260 : vector<8x256xf32>
    %c1_244 = arith.constant 1 : index
    %c5_245 = arith.constant 5 : index
    %c0_246 = arith.constant 0 : index
    %c0_247 = arith.constant 0 : index
    %262 = vector.load %arg5[%c1_244, %c5_245, %c0_246, %c0_247] : memref<2x9x1x8xf32, #tpu.memory_space<vmem>>, vector<1x1x1x8xf32>
    %263 = vector.shape_cast %262 : vector<1x1x1x8xf32> to vector<1x8xf32>
    %cst_248 = arith.constant dense<0.000000e+00> : vector<1x256xf32>
    %264 = tpu.matmul %263, %261, %cst_248 {dimension_numbers = #tpu.dot_dimension_numbers<[1], [0], [0], [1], [0, 0, 1, 1], [], []>} : vector<1x8xf32>, vector<8x256xf32>, vector<1x256xf32> -> vector<1x256xf32>
    %265 = arith.addf %245, %264 : vector<1x256xf32>
    %c241_i32_249 = arith.constant 241 : i32
    %266 = tpu.dynamic_rotate %224 by %c241_i32_249 dim 1 : vector<8x256xf32>, i32 -> vector<8x256xf32>
    %c6_250 = arith.constant 6 : index
    %c0_251 = arith.constant 0 : index
    %267 = vector.load %arg2[%c6_250, %c0_251] : memref<9x256xf32, #tpu.memory_space<vmem>>, vector<1x256xf32>
    %268 = vector.broadcast %267 : vector<1x256xf32> to vector<8x256xf32>
    %269 = arith.mulf %266, %268 : vector<8x256xf32>
    %c1_252 = arith.constant 1 : index
    %c6_253 = arith.constant 6 : index
    %c0_254 = arith.constant 0 : index
    %c0_255 = arith.constant 0 : index
    %270 = vector.load %arg5[%c1_252, %c6_253, %c0_254, %c0_255] : memref<2x9x1x8xf32, #tpu.memory_space<vmem>>, vector<1x1x1x8xf32>
    %271 = vector.shape_cast %270 : vector<1x1x1x8xf32> to vector<1x8xf32>
    %cst_256 = arith.constant dense<0.000000e+00> : vector<1x256xf32>
    %272 = tpu.matmul %271, %269, %cst_256 {dimension_numbers = #tpu.dot_dimension_numbers<[1], [0], [0], [1], [0, 0, 1, 1], [], []>} : vector<1x8xf32>, vector<8x256xf32>, vector<1x256xf32> -> vector<1x256xf32>
    %273 = arith.addf %253, %272 : vector<1x256xf32>
    %c240_i32_257 = arith.constant 240 : i32
    %274 = tpu.dynamic_rotate %224 by %c240_i32_257 dim 1 : vector<8x256xf32>, i32 -> vector<8x256xf32>
    %c7_258 = arith.constant 7 : index
    %c0_259 = arith.constant 0 : index
    %275 = vector.load %arg2[%c7_258, %c0_259] : memref<9x256xf32, #tpu.memory_space<vmem>>, vector<1x256xf32>
    %276 = vector.broadcast %275 : vector<1x256xf32> to vector<8x256xf32>
    %277 = arith.mulf %274, %276 : vector<8x256xf32>
    %c1_260 = arith.constant 1 : index
    %c7_261 = arith.constant 7 : index
    %c0_262 = arith.constant 0 : index
    %c0_263 = arith.constant 0 : index
    %278 = vector.load %arg5[%c1_260, %c7_261, %c0_262, %c0_263] : memref<2x9x1x8xf32, #tpu.memory_space<vmem>>, vector<1x1x1x8xf32>
    %279 = vector.shape_cast %278 : vector<1x1x1x8xf32> to vector<1x8xf32>
    %cst_264 = arith.constant dense<0.000000e+00> : vector<1x256xf32>
    %280 = tpu.matmul %279, %277, %cst_264 {dimension_numbers = #tpu.dot_dimension_numbers<[1], [0], [0], [1], [0, 0, 1, 1], [], []>} : vector<1x8xf32>, vector<8x256xf32>, vector<1x256xf32> -> vector<1x256xf32>
    %281 = arith.addf %257, %280 : vector<1x256xf32>
    %c239_i32_265 = arith.constant 239 : i32
    %282 = tpu.dynamic_rotate %224 by %c239_i32_265 dim 1 : vector<8x256xf32>, i32 -> vector<8x256xf32>
    %c8_266 = arith.constant 8 : index
    %c0_267 = arith.constant 0 : index
    %283 = vector.load %arg2[%c8_266, %c0_267] : memref<9x256xf32, #tpu.memory_space<vmem>>, vector<1x256xf32>
    %284 = vector.broadcast %283 : vector<1x256xf32> to vector<8x256xf32>
    %285 = arith.mulf %282, %284 : vector<8x256xf32>
    %c1_268 = arith.constant 1 : index
    %c8_269 = arith.constant 8 : index
    %c0_270 = arith.constant 0 : index
    %c0_271 = arith.constant 0 : index
    %286 = vector.load %arg5[%c1_268, %c8_269, %c0_270, %c0_271] : memref<2x9x1x8xf32, #tpu.memory_space<vmem>>, vector<1x1x1x8xf32>
    %287 = vector.shape_cast %286 : vector<1x1x1x8xf32> to vector<1x8xf32>
    %cst_272 = arith.constant dense<0.000000e+00> : vector<1x256xf32>
    %288 = tpu.matmul %287, %285, %cst_272 {dimension_numbers = #tpu.dot_dimension_numbers<[1], [0], [0], [1], [0, 0, 1, 1], [], []>} : vector<1x8xf32>, vector<8x256xf32>, vector<1x256xf32> -> vector<1x256xf32>
    %289 = arith.addf %265, %288 : vector<1x256xf32>
    %290 = arith.addf %273, %281 : vector<1x256xf32>
    %c1_273 = arith.constant 1 : index
    %c0_274 = arith.constant 0 : index
    %c0_275 = arith.constant 0 : index
    %291 = vector.load %arg6[%c1_273, %c0_274, %c0_275] : memref<2x1x1xf32, #tpu.memory_space<vmem>>, vector<1x1x1xf32>
    %292 = vector.shape_cast %291 : vector<1x1x1xf32> to vector<1x1xf32>
    %293 = vector.broadcast %292 : vector<1x1xf32> to vector<1x256xf32>
    %294 = arith.addf %289, %293 : vector<1x256xf32>
    %295 = arith.addf %290, %294 : vector<1x256xf32>
    %296 = tpu.concatenate %145, %295 in 0 : vector<1x256xf32>, vector<1x256xf32> -> vector<2x256xf32>
    %c0_276 = arith.constant 0 : index
    %c0_277 = arith.constant 0 : index
    %c0_278 = arith.constant 0 : index
    %297 = vector.load %arg7[%c0_276, %c0_277, %c0_278] : memref<1x2x256xf32, #tpu.memory_space<vmem>>, vector<1x2x256xf32>
    %298 = vector.shape_cast %297 : vector<1x2x256xf32> to vector<2x256xf32>
    %299 = vector.shape_cast %296 : vector<2x256xf32> to vector<1x2x256xf32>
    tpu.vector_store %arg7[%c0_276, %c0_277, %c0_278], %299 {strides = array<i32>} : memref<1x2x256xf32, #tpu.memory_space<vmem>>, vector<1x2x256xf32>,
    return
  }
  func.func @transform_0(%arg0: i32) -> (i32, i32, i32) {
    %c0_i32 = arith.constant 0 : i32
    %c0_i32_0 = arith.constant 0 : i32
    %c0_i32_1 = arith.constant 0 : i32
    return %arg0, %c0_i32, %c0_i32_0 : i32, i32, i32
  }
  func.func @transform_1(%arg0: i32) -> (i32, i32) {
    %c0_i32 = arith.constant 0 : i32
    %c0_i32_0 = arith.constant 0 : i32
    %c0_i32_1 = arith.constant 0 : i32
    return %c0_i32, %c0_i32_0 : i32, i32
  }
  func.func @transform_2(%arg0: i32) -> (i32, i32, i32, i32) {
    %c0_i32 = arith.constant 0 : i32
    %c0_i32_0 = arith.constant 0 : i32
    %c0_i32_1 = arith.constant 0 : i32
    %c0_i32_2 = arith.constant 0 : i32
    %c0_i32_3 = arith.constant 0 : i32
    return %c0_i32, %c0_i32_0, %c0_i32_1, %c0_i32_2 : i32, i32, i32, i32
  }
  func.func @transform_3(%arg0: i32) -> (i32, i32, i32) {
    %c0_i32 = arith.constant 0 : i32
    %c0_i32_0 = arith.constant 0 : i32
    %c0_i32_1 = arith.constant 0 : i32
    %c0_i32_2 = arith.constant 0 : i32
    return %c0_i32, %c0_i32_0, %c0_i32_1 : i32, i32, i32
  }
  func.func @transform_4(%arg0: i32) -> (i32, i32, i32, i32) {
    %c0_i32 = arith.constant 0 : i32
    %c0_i32_0 = arith.constant 0 : i32
    %c0_i32_1 = arith.constant 0 : i32
    %c0_i32_2 = arith.constant 0 : i32
    %c0_i32_3 = arith.constant 0 : i32
    return %c0_i32, %c0_i32_0, %c0_i32_1, %c0_i32_2 : i32, i32, i32, i32
  }
  func.func @transform_5(%arg0: i32) -> (i32, i32, i32) {
    %c0_i32 = arith.constant 0 : i32
    %c0_i32_0 = arith.constant 0 : i32
    %c0_i32_1 = arith.constant 0 : i32
    %c0_i32_2 = arith.constant 0 : i32
    return %c0_i32, %c0_i32_0, %c0_i32_1 : i32, i32, i32
  }
  func.func @transform_6(%arg0: i32) -> (i32, i32, i32) {
    %c0_i32 = arith.constant 0 : i32
    %c0_i32_0 = arith.constant 0 : i32
    %c0_i32_1 = arith.constant 0 : i32
    return %arg0, %c0_i32, %c0_i32_0 : i32, i32, i32
  }
}

</mosaic_0001>

<llo_original>
// kernel: _lambda_.1
$region0: #{_lambda_.1}
  #allocation0 [shape = 'u32[]', space=smem, size = 0x4, offset = 0x4, fixed_abs, tag = 'smem constant byte address 0x4 - core index']
  #allocation1 [shape = 'u32[144,128]{1,0:T(1,128)}', space=vmem, size = 0x12000, scoped, tag = 'internal scratch']
  %s0 = inlined_call_operand.vmem [shape: f32[2,8,256], index: 0, kind: input, shape index: {}]
  %s1 = inlined_call_operand.vmem [shape: f32[9,256], index: 1, kind: input, shape index: {}]
  %s2 = inlined_call_operand.vmem [shape: f32[2,9,8,8], index: 2, kind: input, shape index: {}]
  %s3 = inlined_call_operand.vmem [shape: f32[2,8,1], index: 3, kind: input, shape index: {}]
  %s4 = inlined_call_operand.vmem [shape: f32[2,9,1,8], index: 4, kind: input, shape index: {}]
  %s5 = inlined_call_operand.vmem [shape: f32[2,1,1], index: 5, kind: input, shape index: {}]
  %s6 = inlined_call_operand.vmem [shape: f32[2,2,256], index: 6, kind: output, shape index: {}]
  %s7 = sld [smem:[#allocation0]]
  $region57: #{_lambda_.1} parent=0
    _
  %s9 = ssub.s32 1, %s7
  %s10 = scalar_select 0, %s9, %s7
  loop: start=0, step=1, limit=4
  $region2: #{_lambda_.1} parent=0 // loop_pre_header
    _
  $region3: #{_lambda_.1} parent=0 // loop_header
    %s12 = sphi 0, %s16
    %p13 = scmp.ge.s32.totalorder %s12, 4
    %s22 = sphi 0, %s24
    %s25 = sphi 0, %s22
    %s26 = sphi 0, %s25
    %s42 = sphi 0, %s26
    %s46 = sphi 0, %s46
    %s48 = sphi 0, %s46
    %s49 = sphi 0, %s48
    %s63 = sphi 0, %s49
    %s67 = sphi 0, %s67
    %s69 = sphi 0, %s67
    %s70 = sphi 0, %s69
    %s84 = sphi 0, %s70
    %s88 = sphi 0, %s88
    %s90 = sphi 0, %s88
    %s91 = sphi 0, %s90
    %s105 = sphi 0, %s91
    %s109 = sphi 0, %s109
    %s111 = sphi 0, %s109
    %s112 = sphi 0, %s111
    %s126 = sphi 0, %s112
    %s130 = sphi 0, %s130
    %s132 = sphi 0, %s130
    %s133 = sphi 0, %s132
    %s147 = sphi 0, %s133
    %s153 = sphi 0, %s155
    %s156 = sphi 0, %s153
    %s157 = sphi 0, %s156
    %s173 = sphi 0, %s157
  $region4: #{_lambda_.1} parent=0 // loop_header_branch
    %15 = sbr.rel (%p13) target = $region8
  $region5: #{_lambda_.1} parent=0 // loop_body
    %s17 = ssub.s32 %s12, 1
    %s18 = ssub.s32 %s12, 2
    %s19 = sadd.s32 %s12, 1
    %s20 = ssub.s32 %s12, %s19
    %p21 = scmp.eq.s32.totalorder %s20, 0
    %s23 = sadd.s32 %s22, 1
    %s24 = scalar_select %p21, %s22, %s23
    %p27 = pneg %p21
    %p28 = scmp.eq.s32.totalorder %s12, 1
    %p29 = por %p27, %p28
    %p30 = scmp.ne.s32.totalorder %s22, %s25
    %p31 = scmp.eq.s32.totalorder %s12, 0
    %p32 = por %p30, %p31
    %p33 = scmp.ne.s32.totalorder %s22, %s25
    %p34 = scmp.eq.s32.totalorder %s17, 1
    %p35 = por %p33, %p34
    %p36 = scmp.ne.s32.totalorder %s25, %s26
    %p37 = scmp.eq.s32.totalorder %s17, 0
    %p38 = por %p36, %p37
    %p39 = scmp.ne.s32.totalorder %s25, %s26
    %p40 = scmp.eq.s32.totalorder %s18, 1
    %p41 = por %p39, %p40
    %p43 = scmp.ne.s32.totalorder %s26, %s42
    %p44 = scmp.eq.s32.totalorder %s18, 0
    %p45 = por %p43, %p44
    %s47 = sadd.s32 %s46, 1
    %p50 = scmp.eq.s32.totalorder %s12, 1
    %p51 = scmp.ne.s32.totalorder %s46, %s48
    %p52 = scmp.eq.s32.totalorder %s12, 0
    %p53 = por %p51, %p52
    %p54 = scmp.ne.s32.totalorder %s46, %s48
    %p55 = scmp.eq.s32.totalorder %s17, 1
    %p56 = por %p54, %p55
    %p57 = scmp.ne.s32.totalorder %s48, %s49
    %p58 = scmp.eq.s32.totalorder %s17, 0
    %p59 = por %p57, %p58
    %p60 = scmp.ne.s32.totalorder %s48, %s49
    %p61 = scmp.eq.s32.totalorder %s18, 1
    %p62 = por %p60, %p61
    %p64 = scmp.ne.s32.totalorder %s49, %s63
    %p65 = scmp.eq.s32.totalorder %s18, 0
    %p66 = por %p64, %p65
    %s68 = sadd.s32 %s67, 1
    %p71 = scmp.eq.s32.totalorder %s12, 1
    %p72 = scmp.ne.s32.totalorder %s67, %s69
    %p73 = scmp.eq.s32.totalorder %s12, 0
    %p74 = por %p72, %p73
    %p75 = scmp.ne.s32.totalorder %s67, %s69
    %p76 = scmp.eq.s32.totalorder %s17, 1
    %p77 = por %p75, %p76
    %p78 = scmp.ne.s32.totalorder %s69, %s70
    %p79 = scmp.eq.s32.totalorder %s17, 0
    %p80 = por %p78, %p79
    %p81 = scmp.ne.s32.totalorder %s69, %s70
    %p82 = scmp.eq.s32.totalorder %s18, 1
    %p83 = por %p81, %p82
    %p85 = scmp.ne.s32.totalorder %s70, %s84
    %p86 = scmp.eq.s32.totalorder %s18, 0
    %p87 = por %p85, %p86
    %s89 = sadd.s32 %s88, 1
    %p92 = scmp.eq.s32.totalorder %s12, 1
    %p93 = scmp.ne.s32.totalorder %s88, %s90
    %p94 = scmp.eq.s32.totalorder %s12, 0
    %p95 = por %p93, %p94
    %p96 = scmp.ne.s32.totalorder %s88, %s90
    %p97 = scmp.eq.s32.totalorder %s17, 1
    %p98 = por %p96, %p97
    %p99 = scmp.ne.s32.totalorder %s90, %s91
    %p100 = scmp.eq.s32.totalorder %s17, 0
    %p101 = por %p99, %p100
    %p102 = scmp.ne.s32.totalorder %s90, %s91
    %p103 = scmp.eq.s32.totalorder %s18, 1
    %p104 = por %p102, %p103
    %p106 = scmp.ne.s32.totalorder %s91, %s105
    %p107 = scmp.eq.s32.totalorder %s18, 0
    %p108 = por %p106, %p107
    %s110 = sadd.s32 %s109, 1
    %p113 = scmp.eq.s32.totalorder %s12, 1
    %p114 = scmp.ne.s32.totalorder %s109, %s111
    %p115 = scmp.eq.s32.totalorder %s12, 0
    %p116 = por %p114, %p115
    %p117 = scmp.ne.s32.totalorder %s109, %s111
    %p118 = scmp.eq.s32.totalorder %s17, 1
    %p119 = por %p117, %p118
    %p120 = scmp.ne.s32.totalorder %s111, %s112
    %p121 = scmp.eq.s32.totalorder %s17, 0
    %p122 = por %p120, %p121
    %p123 = scmp.ne.s32.totalorder %s111, %s112
    %p124 = scmp.eq.s32.totalorder %s18, 1
    %p125 = por %p123, %p124
    %p127 = scmp.ne.s32.totalorder %s112, %s126
    %p128 = scmp.eq.s32.totalorder %s18, 0
    %p129 = por %p127, %p128
    %s131 = sadd.s32 %s130, 1
    %p134 = scmp.eq.s32.totalorder %s12, 1
    %p135 = scmp.ne.s32.totalorder %s130, %s132
    %p136 = scmp.eq.s32.totalorder %s12, 0
    %p137 = por %p135, %p136
    %p138 = scmp.ne.s32.totalorder %s130, %s132
    %p139 = scmp.eq.s32.totalorder %s17, 1
    %p140 = por %p138, %p139
    %p141 = scmp.ne.s32.totalorder %s132, %s133
    %p142 = scmp.eq.s32.totalorder %s17, 0
    %p143 = por %p141, %p142
    %p144 = scmp.ne.s32.totalorder %s132, %s133
    %p145 = scmp.eq.s32.totalorder %s18, 1
    %p146 = por %p144, %p145
    %p148 = scmp.ne.s32.totalorder %s133, %s147
    %p149 = scmp.eq.s32.totalorder %s18, 0
    %p150 = por %p148, %p149
    %s151 = ssub.s32 %s12, %s19
    %p152 = scmp.eq.s32.totalorder %s151, 0
    %s154 = sadd.s32 %s153, 1
    %s155 = scalar_select %p152, %s153, %s154
    %p158 = pneg %p152
    %p159 = scmp.eq.s32.totalorder %s12, 1
    %p160 = por %p158, %p159
    %p161 = scmp.ne.s32.totalorder %s153, %s156
    %p162 = scmp.eq.s32.totalorder %s12, 0
    %p163 = por %p161, %p162
    %p164 = scmp.ne.s32.totalorder %s153, %s156
    %p165 = scmp.eq.s32.totalorder %s17, 1
    %p166 = por %p164, %p165
    %p167 = scmp.ne.s32.totalorder %s156, %s157
    %p168 = scmp.eq.s32.totalorder %s17, 0
    %p169 = por %p167, %p168
    %p170 = scmp.ne.s32.totalorder %s156, %s157
    %p171 = scmp.eq.s32.totalorder %s18, 1
    %p172 = por %p170, %p171
    %p174 = scmp.ne.s32.totalorder %s157, %s173
    %p175 = scmp.eq.s32.totalorder %s18, 0
    %p176 = por %p174, %p175
    %p177 = scmp.le.s32.totalorder 1, %s12
    %p178 = scmp.lt.s32.totalorder %s12, 3
    %p179 = pnand %p177, %p178
    %p180 = pneg %p179
    // Predicated region
    $region9: #{_lambda_.1} parent=5 // pred_check
      _
    $region10: #{_lambda_.1} parent=5 // pred_check_branch
      %182 = sbr.rel (%p179) target = $region12
    $region11: #{_lambda_.1} parent=5 // pred_region
      %s183 = ssub.s32 %s12, 1
      // Predicated region
      $region13: #{_lambda_.1} parent=11 // pred_check
        %p184 = pneg %p59
      $region14: #{_lambda_.1} parent=11 // pred_check_branch
        %186 = sbr.rel (%p184) target = $region16
      $region15: #{_lambda_.1} parent=11 // pred_region
        _
      $region16: #{_lambda_.1} parent=11 // pred_fallthru
        _
      // Predicated region
      $region17: #{_lambda_.1} parent=11 // pred_check
        %p187 = pneg %p80
      $region18: #{_lambda_.1} parent=11 // pred_check_branch
        %189 = sbr.rel (%p187) target = $region20
      $region19: #{_lambda_.1} parent=11 // pred_region
        _
      $region20: #{_lambda_.1} parent=11 // pred_fallthru
        _
      // Predicated region
      $region21: #{_lambda_.1} parent=11 // pred_check
        %p190 = pneg %p101
      $region22: #{_lambda_.1} parent=11 // pred_check_branch
        %192 = sbr.rel (%p190) target = $region24
      $region23: #{_lambda_.1} parent=11 // pred_region
        _
      $region24: #{_lambda_.1} parent=11 // pred_fallthru
        _
      // Predicated region
      $region25: #{_lambda_.1} parent=11 // pred_check
        %p193 = pneg %p122
      $region26: #{_lambda_.1} parent=11 // pred_check_branch
        %195 = sbr.rel (%p193) target = $region28
      $region27: #{_lambda_.1} parent=11 // pred_region
        _
      $region28: #{_lambda_.1} parent=11 // pred_fallthru
        _
      // Predicated region
      $region29: #{_lambda_.1} parent=11 // pred_check
        %p196 = pneg %p143
      $region30: #{_lambda_.1} parent=11 // pred_check_branch
        %198 = sbr.rel (%p196) target = $region32
      $region31: #{_lambda_.1} parent=11 // pred_region
        _
      $region32: #{_lambda_.1} parent=11 // pred_fallthru
        _
    $region12: #{_lambda_.1} parent=5 // pred_fallthru
      _
    %p199 = scmp.lt.s32.totalorder %s12, 2
    // Predicated region
    $region33: #{_lambda_.1} parent=5 // pred_check
      %p200 = pneg %p199
    $region34: #{_lambda_.1} parent=5 // pred_check_branch
      %202 = sbr.rel (%p200) target = $region36
    $region35: #{_lambda_.1} parent=5 // pred_region
      // Predicated region
      $region37: #{_lambda_.1} parent=35 // pred_check
        %p203 = pneg %p32
      $region38: #{_lambda_.1} parent=35 // pred_check_branch
        %205 = sbr.rel (%p203) target = $region40
      $region39: #{_lambda_.1} parent=35 // pred_region
        %p206 = scmp.lt.s32.totalorder %s12, 1
        %s207 = scalar_select %p206, %s12, 1
        %s208 = smul.addr %s207, 2
        %s209 = smul.addr %s208, 8
        %s210 = scalar_lea.vmem %s0, %s209
      $region40: #{_lambda_.1} parent=35 // pred_fallthru
        _
    $region36: #{_lambda_.1} parent=5 // pred_fallthru
      _
    %p211 = scmp.le.s32.totalorder 1, %s12
    %p212 = scmp.lt.s32.totalorder %s12, 3
    %p213 = pnand %p211, %p212
    %p214 = pneg %p213
    // Predicated region
    $region41: #{_lambda_.1} parent=5 // pred_check
      _
    $region42: #{_lambda_.1} parent=5 // pred_check_branch
      %216 = sbr.rel (%p213) target = $region44
    $region43: #{_lambda_.1} parent=5 // pred_region
      %s217 = ssub.s32 %s12, 1
      %p218 = scmp.lt.s32.totalorder %s17, 1
      %s219 = scalar_select %p218, %s17, 1
      %s220 = smul.addr %s219, 2
      %s221 = smul.addr %s220, 8
      %s222 = scalar_lea.vmem %s0, %s221
      %p223 = pneg %p38
      %p224 = pneg %p35
      %p225 = pneg %p59
      %p226 = pneg %p56
      %p227 = pneg %p80
      %p228 = pneg %p77
      %p229 = pneg %p101
      %p230 = pneg %p98
      %p231 = pneg %p122
      %p232 = pneg %p119
      %p233 = pneg %p143
      %p234 = pneg %p140
      %p235 = pneg %p169
      %p236 = pneg %p166
      %p237 = scmp.lt.s32.totalorder %s17, 1
      %s238 = scalar_select %p237, %s17, 1
      %s239 = smul.addr %s238, 2
      %s240 = smul.addr %s239, 2
      %s241 = scalar_lea.vmem %s6, %s240
      %p242 = scmp.lt.s32.totalorder %s17, 1
      %s243 = scalar_select %p242, %s17, 1
      %s244 = smul.addr %s243, 2
      %s245 = smul.addr %s244, 8
      %s246 = scalar_lea.vmem %s0, %s245
      %p247 = scmp.lt.s32.totalorder %s17, 1
      %s248 = scalar_select %p247, %s17, 1
      %s249 = smul.addr %s248, 2
      %s250 = smul.addr %s249, 2
      %s251 = scalar_lea.vmem %s6, %s250
      %v252 = vld [vmem:[%s246] sm:$0xff]
      %v253 = vld [vmem:[%s246 + $0x8] sm:$0xff]
      %254 = vrot.lane.b32.xlu0 %v252, 17
      %v255 = vpop.permute.xlu0 %254
      %256 = vrot.lane.b32.xlu0 %v253, 17
      %v257 = vpop.permute.xlu0 %256
      %v258 = vlaneseq
      %v259 = vand.u32 %v258, 127
      %vm260 = vcmp.lt.s32.totalorder %v259, 17
      %v261 = vsel %vm260, %v255, %v257
      %v262 = vsel %vm260, %v257, %v255
      %v263 = vld [vmem:[%s1] ss:$8 sm:$0x3]
      %v265 = vlaneseq
      %v266 = vshrl.u32 %v265, 7
      %v267 = vsub.s32 0, %v266
      %v268 = vrot.slane %v263, %v267
      %v269 = vlaneseq
      %v270 = vshrl.u32 %v269, 7
      %v271 = vsub.s32 1, %v270
      %v272 = vrot.slane %v263, %v271
      %v275 = vmul.f32 %v262, %v268
      %v276 = vmul.f32 %v261, %v272
      %v277 = vld [vmem:[%s2] sm:$0xff]
      %278 = vrot.lane.b32.xlu0 %v252, 16
      %v279 = vpop.permute.xlu0 %278
      %280 = vrot.lane.b32.xlu0 %v253, 16
      %v281 = vpop.permute.xlu0 %280
      %vm282 = vcmp.lt.s32.totalorder %v259, 16
      %v283 = vsel %vm282, %v279, %v281
      %v284 = vsel %vm282, %v281, %v279
      %s285 = scalar_lea.vmem %s1, 1
      %v286 = vld [vmem:[%s285] ss:$8 sm:$0x3]
      %v288 = vlaneseq
      %v289 = vshrl.u32 %v288, 7
      %v290 = vsub.s32 0, %v289
      %v291 = vrot.slane %v286, %v290
      %v292 = vlaneseq
      %v293 = vshrl.u32 %v292, 7
      %v294 = vsub.s32 1, %v293
      %v295 = vrot.slane %v286, %v294
      %v298 = vmul.f32 %v284, %v291
      %v299 = vmul.f32 %v283, %v295
      %s300 = scalar_lea.vmem %s2, 8
      %v301 = vld [vmem:[%s300] sm:$0xff]
      %302 = vrot.lane.b32.xlu0 %v252, 15
      %v303 = vpop.permute.xlu0 %302
      %304 = vrot.lane.b32.xlu0 %v253, 15
      %v305 = vpop.permute.xlu0 %304
      %vm306 = vcmp.lt.s32.totalorder %v259, 15
      %v307 = vsel %vm306, %v303, %v305
      %v308 = vsel %vm306, %v305, %v303
      %s309 = scalar_lea.vmem %s1, 2
      %v310 = vld [vmem:[%s309] ss:$8 sm:$0x3]
      %v312 = vlaneseq
      %v313 = vshrl.u32 %v312, 7
      %v314 = vsub.s32 0, %v313
      %v315 = vrot.slane %v310, %v314
      %v316 = vlaneseq
      %v317 = vshrl.u32 %v316, 7
      %v318 = vsub.s32 1, %v317
      %v319 = vrot.slane %v310, %v318
      %v322 = vmul.f32 %v308, %v315
      %v323 = vmul.f32 %v307, %v319
      %s324 = scalar_lea.vmem %s2, 16
      %v325 = vld [vmem:[%s324] sm:$0xff]
      %326 = vrot.lane.b32.xlu0 %v252, 1
      %v327 = vpop.permute.xlu0 %326
      %328 = vrot.lane.b32.xlu0 %v253, 1
      %v329 = vpop.permute.xlu0 %328
      %vm330 = vcmp.lt.s32.totalorder %v259, 1
      %v331 = vsel %vm330, %v327, %v329
      %v332 = vsel %vm330, %v329, %v327
      %s333 = scalar_lea.vmem %s1, 3
      %v334 = vld [vmem:[%s333] ss:$8 sm:$0x3]
      %v336 = vlaneseq
      %v337 = vshrl.u32 %v336, 7
      %v338 = vsub.s32 0, %v337
      %v339 = vrot.slane %v334, %v338
      %v340 = vlaneseq
      %v341 = vshrl.u32 %v340, 7
      %v342 = vsub.s32 1, %v341
      %v343 = vrot.slane %v334, %v342
      %v346 = vmul.f32 %v332, %v339
      %v347 = vmul.f32 %v331, %v343
      %s348 = scalar_lea.vmem %s2, 24
      %v349 = vld [vmem:[%s348] sm:$0xff]
      %vm350 = vcmask 64512
      %v352 = vsel %vm350, %v349, 0
      %354 = vmatprep.subr.mxu0 %v347
      %355 = vmatpush1.msra.mxu0 %v346
      %356 = vmatprep.subr.mxu0 0.0
      %357 = vmatpush1.msra.mxu0 0.0
      %358 = vmatprep.subr.mxu0 0.0
      %359 = vmatpush1.msra.mxu0 0.0
      %360 = vmatprep.subr.mxu0 0.0
      %361 = vmatpush1.msra.mxu0 0.0
      %362 = vmatprep.subr.mxu0 0.0
      %363 = vmatpush1.msra.mxu0 0.0
      %364 = vmatprep.subr.mxu0 0.0
      %365 = vmatpush1.msra.mxu0 0.0
      %366 = vmatprep.subr.mxu0 0.0
      %367 = vmatpush1.msra.mxu0 0.0
      %368 = vmatprep.subr.mxu0 0.0
      %369 = vmatpush1.msra.mxu0 0.0
      %370 = vmatprep.subr.mxu0 0.0
      %371 = vmatpush1.msra.mxu0 0.0
      %372 = vmatprep.subr.mxu0 0.0
      %373 = vmatpush1.msra.mxu0 0.0
      %374 = vmatprep.subr.mxu0 0.0
      %375 = vmatpush1.msra.mxu0 0.0
      %376 = vmatprep.subr.mxu0 0.0
      %377 = vmatpush1.msra.mxu0 0.0
      %378 = vmatprep.subr.mxu0 0.0
      %379 = vmatpush1.msra.mxu0 0.0
      %380 = vmatprep.subr.mxu0 0.0
      %381 = vmatpush1.msra.mxu0 0.0
      %382 = vmatprep.subr.mxu0 0.0
      %383 = vmatpush1.msra.mxu0 0.0
      %384 = vmatprep.subr.mxu0 0.0
      %385 = vmatpush1.msra.mxu0 0.0
      %386 = vmatprep.subr.mxu0 0.0
      %387 = vmatpush1.msra.mxu0 0.0
      %388 = vmatprep.subr.mxu0 0.0
      %389 = vmatpush1.msra.mxu0 0.0
      %390 = vmatprep.subr.mxu0 0.0
      %391 = vmatpush1.msra.mxu0 0.0
      %392 = vmatprep.subr.mxu0 0.0
      %393 = vmatpush1.msra.mxu0 0.0
      %394 = vmatprep.subr.mxu0 0.0
      %395 = vmatpush1.msra.mxu0 0.0
      %396 = vmatprep.subr.mxu0 0.0
      %397 = vmatpush1.msra.mxu0 0.0
      %398 = vmatprep.subr.mxu0 0.0
      %399 = vmatpush1.msra.mxu0 0.0
      %400 = vmatprep.subr.mxu0 0.0
      %401 = vmatpush1.msra.mxu0 0.0
      %402 = vmatprep.subr.mxu0 0.0
      %403 = vmatpush1.msra.mxu0 0.0
      %404 = vmatprep.subr.mxu0 0.0
      %405 = vmatpush1.msra.mxu0 0.0
      %406 = vmatprep.subr.mxu0 0.0
      %407 = vmatpush1.msra.mxu0 0.0
      %408 = vmatprep.subr.mxu0 0.0
      %409 = vmatpush1.msra.mxu0 0.0
      %410 = vmatprep.subr.mxu0 0.0
      %411 = vmatpush1.msra.mxu0 0.0
      %412 = vmatprep.subr.mxu0 0.0
      %413 = vmatpush1.msra.mxu0 0.0
      %414 = vmatprep.subr.mxu0 0.0
      %415 = vmatpush1.msra.mxu0 0.0
      %416 = vmatprep.subr.mxu0 0.0
      %417 = vmatpush1.msra.mxu0 0.0
      %418 = vmatprep.mubr.f32.mxu0 0.0
      %419 = vmatmul.mubr.f32.gmra.mrb[0].mxu0 %v352
      %v420 = vpop.f32.mrb[0].mxu0
      %v421 = vadd.f32 0.0, %v420
      %v422 = vpop.f32.mrb[0].mxu0
      %v423 = vadd.f32 0.0, %v422
      %424 = vdwg.mxu0
      %v426 = vsel %vm350, %v277, 0
      %428 = vmatprep.subr.mxu0 %v276
      %429 = vmatpush1.msra.mxu0 %v275
      %430 = vmatprep.subr.mxu0 0.0
      %431 = vmatpush1.msra.mxu0 0.0
      %432 = vmatprep.subr.mxu0 0.0
      %433 = vmatpush1.msra.mxu0 0.0
      %434 = vmatprep.subr.mxu0 0.0
      %435 = vmatpush1.msra.mxu0 0.0
      %436 = vmatprep.subr.mxu0 0.0
      %437 = vmatpush1.msra.mxu0 0.0
      %438 = vmatprep.subr.mxu0 0.0
      %439 = vmatpush1.msra.mxu0 0.0
      %440 = vmatprep.subr.mxu0 0.0
      %441 = vmatpush1.msra.mxu0 0.0
      %442 = vmatprep.subr.mxu0 0.0
      %443 = vmatpush1.msra.mxu0 0.0
      %444 = vmatprep.subr.mxu0 0.0
      %445 = vmatpush1.msra.mxu0 0.0
      %446 = vmatprep.subr.mxu0 0.0
      %447 = vmatpush1.msra.mxu0 0.0
      %448 = vmatprep.subr.mxu0 0.0
      %449 = vmatpush1.msra.mxu0 0.0
      %450 = vmatprep.subr.mxu0 0.0
      %451 = vmatpush1.msra.mxu0 0.0
      %452 = vmatprep.subr.mxu0 0.0
      %453 = vmatpush1.msra.mxu0 0.0
      %454 = vmatprep.subr.mxu0 0.0
      %455 = vmatpush1.msra.mxu0 0.0
      %456 = vmatprep.subr.mxu0 0.0
      %457 = vmatpush1.msra.mxu0 0.0
      %458 = vmatprep.subr.mxu0 0.0
      %459 = vmatpush1.msra.mxu0 0.0
      %460 = vmatprep.subr.mxu0 0.0
      %461 = vmatpush1.msra.mxu0 0.0
      %462 = vmatprep.subr.mxu0 0.0
      %463 = vmatpush1.msra.mxu0 0.0
      %464 = vmatprep.subr.mxu0 0.0
      %465 = vmatpush1.msra.mxu0 0.0
      %466 = vmatprep.subr.mxu0 0.0
      %467 = vmatpush1.msra.mxu0 0.0
      %468 = vmatprep.subr.mxu0 0.0
      %469 = vmatpush1.msra.mxu0 0.0
      %470 = vmatprep.subr.mxu0 0.0
      %471 = vmatpush1.msra.mxu0 0.0
      %472 = vmatprep.subr.mxu0 0.0
      %473 = vmatpush1.msra.mxu0 0.0
      %474 = vmatprep.subr.mxu0 0.0
      %475 = vmatpush1.msra.mxu0 0.0
      %476 = vmatprep.subr.mxu0 0.0
      %477 = vmatpush1.msra.mxu0 0.0
      %478 = vmatprep.subr.mxu0 0.0
      %479 = vmatpush1.msra.mxu0 0.0
      %480 = vmatprep.subr.mxu0 0.0
      %481 = vmatpush1.msra.mxu0 0.0
      %482 = vmatprep.subr.mxu0 0.0
      %483 = vmatpush1.msra.mxu0 0.0
      %484 = vmatprep.subr.mxu0 0.0
      %485 = vmatpush1.msra.mxu0 0.0
      %486 = vmatprep.subr.mxu0 0.0
      %487 = vmatpush1.msra.mxu0 0.0
      %488 = vmatprep.subr.mxu0 0.0
      %489 = vmatpush1.msra.mxu0 0.0
      %490 = vmatprep.subr.mxu0 0.0
      %491 = vmatpush1.msra.mxu0 0.0
      %492 = vmatprep.mubr.f32.mxu0 0.0
      %493 = vmatmul.mubr.f32.gmra.mrb[0].mxu0 %v426
      %v494 = vpop.f32.mrb[0].mxu0
      %v495 = vadd.f32 %v421, %v494
      %v496 = vpop.f32.mrb[0].mxu0
      %v497 = vadd.f32 %v423, %v496
      %498 = vdwg.mxu0
      %s499 = scalar_lea.vmem %s2, 32
      %v500 = vld [vmem:[%s499] sm:$0xff]
      %v502 = vsel %vm350, %v500, 0
      %504 = vmatprep.subr.mxu0 %v253
      %505 = vmatpush1.msra.mxu0 %v252
      %506 = vmatprep.subr.mxu0 0.0
      %507 = vmatpush1.msra.mxu0 0.0
      %508 = vmatprep.subr.mxu0 0.0
      %509 = vmatpush1.msra.mxu0 0.0
      %510 = vmatprep.subr.mxu0 0.0
      %511 = vmatpush1.msra.mxu0 0.0
      %512 = vmatprep.subr.mxu0 0.0
      %513 = vmatpush1.msra.mxu0 0.0
      %514 = vmatprep.subr.mxu0 0.0
      %515 = vmatpush1.msra.mxu0 0.0
      %516 = vmatprep.subr.mxu0 0.0
      %517 = vmatpush1.msra.mxu0 0.0
      %518 = vmatprep.subr.mxu0 0.0
      %519 = vmatpush1.msra.mxu0 0.0
      %520 = vmatprep.subr.mxu0 0.0
      %521 = vmatpush1.msra.mxu0 0.0
      %522 = vmatprep.subr.mxu0 0.0
      %523 = vmatpush1.msra.mxu0 0.0
      %524 = vmatprep.subr.mxu0 0.0
      %525 = vmatpush1.msra.mxu0 0.0
      %526 = vmatprep.subr.mxu0 0.0
      %527 = vmatpush1.msra.mxu0 0.0
      %528 = vmatprep.subr.mxu0 0.0
      %529 = vmatpush1.msra.mxu0 0.0
      %530 = vmatprep.subr.mxu0 0.0
      %531 = vmatpush1.msra.mxu0 0.0
      %532 = vmatprep.subr.mxu0 0.0
      %533 = vmatpush1.msra.mxu0 0.0
      %534 = vmatprep.subr.mxu0 0.0
      %535 = vmatpush1.msra.mxu0 0.0
      %536 = vmatprep.subr.mxu0 0.0
      %537 = vmatpush1.msra.mxu0 0.0
      %538 = vmatprep.subr.mxu0 0.0
      %539 = vmatpush1.msra.mxu0 0.0
      %540 = vmatprep.subr.mxu0 0.0
      %541 = vmatpush1.msra.mxu0 0.0
      %542 = vmatprep.subr.mxu0 0.0
      %543 = vmatpush1.msra.mxu0 0.0
      %544 = vmatprep.subr.mxu0 0.0
      %545 = vmatpush1.msra.mxu0 0.0
      %546 = vmatprep.subr.mxu0 0.0
      %547 = vmatpush1.msra.mxu0 0.0
      %548 = vmatprep.subr.mxu0 0.0
      %549 = vmatpush1.msra.mxu0 0.0
      %550 = vmatprep.subr.mxu0 0.0
      %551 = vmatpush1.msra.mxu0 0.0
      %552 = vmatprep.subr.mxu0 0.0
      %553 = vmatpush1.msra.mxu0 0.0
      %554 = vmatprep.subr.mxu0 0.0
      %555 = vmatpush1.msra.mxu0 0.0
      %556 = vmatprep.subr.mxu0 0.0
      %557 = vmatpush1.msra.mxu0 0.0
      %558 = vmatprep.subr.mxu0 0.0
      %559 = vmatpush1.msra.mxu0 0.0
      %560 = vmatprep.subr.mxu0 0.0
      %561 = vmatpush1.msra.mxu0 0.0
      %562 = vmatprep.subr.mxu0 0.0
      %563 = vmatpush1.msra.mxu0 0.0
      %564 = vmatprep.subr.mxu0 0.0
      %565 = vmatpush1.msra.mxu0 0.0
      %566 = vmatprep.subr.mxu0 0.0
      %567 = vmatpush1.msra.mxu0 0.0
      %568 = vmatprep.mubr.f32.mxu0 0.0
      %569 = vmatmul.mubr.f32.gmra.mrb[0].mxu0 %v502
      %v570 = vpop.f32.mrb[0].mxu0
      %v571 = vadd.f32 0.0, %v570
      %v572 = vpop.f32.mrb[0].mxu0
      %v573 = vadd.f32 0.0, %v572
      %574 = vdwg.mxu0
      %v576 = vsel %vm350, %v301, 0
      %578 = vmatprep.subr.mxu0 %v299
      %579 = vmatpush1.msra.mxu0 %v298
      %580 = vmatprep.subr.mxu0 0.0
      %581 = vmatpush1.msra.mxu0 0.0
      %582 = vmatprep.subr.mxu0 0.0
      %583 = vmatpush1.msra.mxu0 0.0
      %584 = vmatprep.subr.mxu0 0.0
      %585 = vmatpush1.msra.mxu0 0.0
      %586 = vmatprep.subr.mxu0 0.0
      %587 = vmatpush1.msra.mxu0 0.0
      %588 = vmatprep.subr.mxu0 0.0
      %589 = vmatpush1.msra.mxu0 0.0
      %590 = vmatprep.subr.mxu0 0.0
      %591 = vmatpush1.msra.mxu0 0.0
      %592 = vmatprep.subr.mxu0 0.0
      %593 = vmatpush1.msra.mxu0 0.0
      %594 = vmatprep.subr.mxu0 0.0
      %595 = vmatpush1.msra.mxu0 0.0
      %596 = vmatprep.subr.mxu0 0.0
      %597 = vmatpush1.msra.mxu0 0.0
      %598 = vmatprep.subr.mxu0 0.0
      %599 = vmatpush1.msra.mxu0 0.0
      %600 = vmatprep.subr.mxu0 0.0
      %601 = vmatpush1.msra.mxu0 0.0
      %602 = vmatprep.subr.mxu0 0.0
      %603 = vmatpush1.msra.mxu0 0.0
      %604 = vmatprep.subr.mxu0 0.0
      %605 = vmatpush1.msra.mxu0 0.0
      %606 = vmatprep.subr.mxu0 0.0
      %607 = vmatpush1.msra.mxu0 0.0
      %608 = vmatprep.subr.mxu0 0.0
      %609 = vmatpush1.msra.mxu0 0.0
      %610 = vmatprep.subr.mxu0 0.0
      %611 = vmatpush1.msra.mxu0 0.0
      %612 = vmatprep.subr.mxu0 0.0
      %613 = vmatpush1.msra.mxu0 0.0
      %614 = vmatprep.subr.mxu0 0.0
      %615 = vmatpush1.msra.mxu0 0.0
      %616 = vmatprep.subr.mxu0 0.0
      %617 = vmatpush1.msra.mxu0 0.0
      %618 = vmatprep.subr.mxu0 0.0
      %619 = vmatpush1.msra.mxu0 0.0
      %620 = vmatprep.subr.mxu0 0.0
      %621 = vmatpush1.msra.mxu0 0.0
      %622 = vmatprep.subr.mxu0 0.0
      %623 = vmatpush1.msra.mxu0 0.0
      %624 = vmatprep.subr.mxu0 0.0
      %625 = vmatpush1.msra.mxu0 0.0
      %626 = vmatprep.subr.mxu0 0.0
      %627 = vmatpush1.msra.mxu0 0.0
      %628 = vmatprep.subr.mxu0 0.0
      %629 = vmatpush1.msra.mxu0 0.0
      %630 = vmatprep.subr.mxu0 0.0
      %631 = vmatpush1.msra.mxu0 0.0
      %632 = vmatprep.subr.mxu0 0.0
      %633 = vmatpush1.msra.mxu0 0.0
      %634 = vmatprep.subr.mxu0 0.0
      %635 = vmatpush1.msra.mxu0 0.0
      %636 = vmatprep.subr.mxu0 0.0
      %637 = vmatpush1.msra.mxu0 0.0
      %638 = vmatprep.subr.mxu0 0.0
      %639 = vmatpush1.msra.mxu0 0.0
      %640 = vmatprep.subr.mxu0 0.0
      %641 = vmatpush1.msra.mxu0 0.0
      %642 = vmatprep.mubr.f32.mxu0 0.0
      %643 = vmatmul.mubr.f32.gmra.mrb[0].mxu0 %v576
      %v644 = vpop.f32.mrb[0].mxu0
      %v645 = vadd.f32 %v571, %v644
      %v646 = vpop.f32.mrb[0].mxu0
      %v647 = vadd.f32 %v573, %v646
      %648 = vdwg.mxu0
      %649 = vrot.lane.b32.xlu0 %v252, 127
      %v650 = vpop.permute.xlu0 %649
      %651 = vrot.lane.b32.xlu0 %v253, 127
      %v652 = vpop.permute.xlu0 %651
      %vm653 = vcmp.lt.s32.totalorder %v259, 127
      %v654 = vsel %vm653, %v650, %v652
      %v655 = vsel %vm653, %v652, %v650
      %s656 = scalar_lea.vmem %s1, 5
      %v657 = vld [vmem:[%s656] ss:$8 sm:$0x3]
      %v659 = vlaneseq
      %v660 = vshrl.u32 %v659, 7
      %v661 = vsub.s32 0, %v660
      %v662 = vrot.slane %v657, %v661
      %v663 = vlaneseq
      %v664 = vshrl.u32 %v663, 7
      %v665 = vsub.s32 1, %v664
      %v666 = vrot.slane %v657, %v665
      %v669 = vmul.f32 %v654, %v662
      %v670 = vmul.f32 %v655, %v666
      %s671 = scalar_lea.vmem %s2, 40
      %v672 = vld [vmem:[%s671] sm:$0xff]
      %v674 = vsel %vm350, %v672, 0
      %676 = vmatprep.subr.mxu0 %v670
      %677 = vmatpush1.msra.mxu0 %v669
      %678 = vmatprep.subr.mxu0 0.0
      %679 = vmatpush1.msra.mxu0 0.0
      %680 = vmatprep.subr.mxu0 0.0
      %681 = vmatpush1.msra.mxu0 0.0
      %682 = vmatprep.subr.mxu0 0.0
      %683 = vmatpush1.msra.mxu0 0.0
      %684 = vmatprep.subr.mxu0 0.0
      %685 = vmatpush1.msra.mxu0 0.0
      %686 = vmatprep.subr.mxu0 0.0
      %687 = vmatpush1.msra.mxu0 0.0
      %688 = vmatprep.subr.mxu0 0.0
      %689 = vmatpush1.msra.mxu0 0.0
      %690 = vmatprep.subr.mxu0 0.0
      %691 = vmatpush1.msra.mxu0 0.0
      %692 = vmatprep.subr.mxu0 0.0
      %693 = vmatpush1.msra.mxu0 0.0
      %694 = vmatprep.subr.mxu0 0.0
      %695 = vmatpush1.msra.mxu0 0.0
      %696 = vmatprep.subr.mxu0 0.0
      %697 = vmatpush1.msra.mxu0 0.0
      %698 = vmatprep.subr.mxu0 0.0
      %699 = vmatpush1.msra.mxu0 0.0
      %700 = vmatprep.subr.mxu0 0.0
      %701 = vmatpush1.msra.mxu0 0.0
      %702 = vmatprep.subr.mxu0 0.0
      %703 = vmatpush1.msra.mxu0 0.0
      %704 = vmatprep.subr.mxu0 0.0
      %705 = vmatpush1.msra.mxu0 0.0
      %706 = vmatprep.subr.mxu0 0.0
      %707 = vmatpush1.msra.mxu0 0.0
      %708 = vmatprep.subr.mxu0 0.0
      %709 = vmatpush1.msra.mxu0 0.0
      %710 = vmatprep.subr.mxu0 0.0
      %711 = vmatpush1.msra.mxu0 0.0
      %712 = vmatprep.subr.mxu0 0.0
      %713 = vmatpush1.msra.mxu0 0.0
      %714 = vmatprep.subr.mxu0 0.0
      %715 = vmatpush1.msra.mxu0 0.0
      %716 = vmatprep.subr.mxu0 0.0
      %717 = vmatpush1.msra.mxu0 0.0
      %718 = vmatprep.subr.mxu0 0.0
      %719 = vmatpush1.msra.mxu0 0.0
      %720 = vmatprep.subr.mxu0 0.0
      %721 = vmatpush1.msra.mxu0 0.0
      %722 = vmatprep.subr.mxu0 0.0
      %723 = vmatpush1.msra.mxu0 0.0
      %724 = vmatprep.subr.mxu0 0.0
      %725 = vmatpush1.msra.mxu0 0.0
      %726 = vmatprep.subr.mxu0 0.0
      %727 = vmatpush1.msra.mxu0 0.0
      %728 = vmatprep.subr.mxu0 0.0
      %729 = vmatpush1.msra.mxu0 0.0
      %730 = vmatprep.subr.mxu0 0.0
      %731 = vmatpush1.msra.mxu0 0.0
      %732 = vmatprep.subr.mxu0 0.0
      %733 = vmatpush1.msra.mxu0 0.0
      %734 = vmatprep.subr.mxu0 0.0
      %735 = vmatpush1.msra.mxu0 0.0
      %736 = vmatprep.subr.mxu0 0.0
      %737 = vmatpush1.msra.mxu0 0.0
      %738 = vmatprep.subr.mxu0 0.0
      %739 = vmatpush1.msra.mxu0 0.0
      %740 = vmatprep.mubr.f32.mxu0 0.0
      %741 = vmatmul.mubr.f32.gmra.mrb[0].mxu0 %v674
      %v742 = vpop.f32.mrb[0].mxu0
      %v743 = vadd.f32 0.0, %v742
      %v744 = vpop.f32.mrb[0].mxu0
      %v745 = vadd.f32 0.0, %v744
      %746 = vdwg.mxu0
      %v748 = vsel %vm350, %v325, 0
      %750 = vmatprep.subr.mxu0 %v323
      %751 = vmatpush1.msra.mxu0 %v322
      %752 = vmatprep.subr.mxu0 0.0
      %753 = vmatpush1.msra.mxu0 0.0
      %754 = vmatprep.subr.mxu0 0.0
      %755 = vmatpush1.msra.mxu0 0.0
      %756 = vmatprep.subr.mxu0 0.0
      %757 = vmatpush1.msra.mxu0 0.0
      %758 = vmatprep.subr.mxu0 0.0
      %759 = vmatpush1.msra.mxu0 0.0
      %760 = vmatprep.subr.mxu0 0.0
      %761 = vmatpush1.msra.mxu0 0.0
      %762 = vmatprep.subr.mxu0 0.0
      %763 = vmatpush1.msra.mxu0 0.0
      %764 = vmatprep.subr.mxu0 0.0
      %765 = vmatpush1.msra.mxu0 0.0
      %766 = vmatprep.subr.mxu0 0.0
      %767 = vmatpush1.msra.mxu0 0.0
      %768 = vmatprep.subr.mxu0 0.0
      %769 = vmatpush1.msra.mxu0 0.0
      %770 = vmatprep.subr.mxu0 0.0
      %771 = vmatpush1.msra.mxu0 0.0
      %772 = vmatprep.subr.mxu0 0.0
      %773 = vmatpush1.msra.mxu0 0.0
      %774 = vmatprep.subr.mxu0 0.0
      %775 = vmatpush1.msra.mxu0 0.0
      %776 = vmatprep.subr.mxu0 0.0
      %777 = vmatpush1.msra.mxu0 0.0
      %778 = vmatprep.subr.mxu0 0.0
      %779 = vmatpush1.msra.mxu0 0.0
      %780 = vmatprep.subr.mxu0 0.0
      %781 = vmatpush1.msra.mxu0 0.0
      %782 = vmatprep.subr.mxu0 0.0
      %783 = vmatpush1.msra.mxu0 0.0
      %784 = vmatprep.subr.mxu0 0.0
      %785 = vmatpush1.msra.mxu0 0.0
      %786 = vmatprep.subr.mxu0 0.0
      %787 = vmatpush1.msra.mxu0 0.0
      %788 = vmatprep.subr.mxu0 0.0
      %789 = vmatpush1.msra.mxu0 0.0
      %790 = vmatprep.subr.mxu0 0.0
      %791 = vmatpush1.msra.mxu0 0.0
      %792 = vmatprep.subr.mxu0 0.0
      %793 = vmatpush1.msra.mxu0 0.0
      %794 = vmatprep.subr.mxu0 0.0
      %795 = vmatpush1.msra.mxu0 0.0
      %796 = vmatprep.subr.mxu0 0.0
      %797 = vmatpush1.msra.mxu0 0.0
      %798 = vmatprep.subr.mxu0 0.0
      %799 = vmatpush1.msra.mxu0 0.0
      %800 = vmatprep.subr.mxu0 0.0
      %801 = vmatpush1.msra.mxu0 0.0
      %802 = vmatprep.subr.mxu0 0.0
      %803 = vmatpush1.msra.mxu0 0.0
      %804 = vmatprep.subr.mxu0 0.0
      %805 = vmatpush1.msra.mxu0 0.0
      %806 = vmatprep.subr.mxu0 0.0
      %807 = vmatpush1.msra.mxu0 0.0
      %808 = vmatprep.subr.mxu0 0.0
      %809 = vmatpush1.msra.mxu0 0.0
      %810 = vmatprep.subr.mxu0 0.0
      %811 = vmatpush1.msra.mxu0 0.0
      %812 = vmatprep.subr.mxu0 0.0
      %813 = vmatpush1.msra.mxu0 0.0
      %814 = vmatprep.mubr.f32.mxu0 0.0
      %815 = vmatmul.mubr.f32.gmra.mrb[0].mxu0 %v748
      %v816 = vpop.f32.mrb[0].mxu0
      %v817 = vadd.f32 %v743, %v816
      %v818 = vpop.f32.mrb[0].mxu0
      %v819 = vadd.f32 %v745, %v818
      %820 = vdwg.mxu0
      %821 = vrot.lane.b32.xlu0 %v252, 113
      %v822 = vpop.permute.xlu0 %821
      %823 = vrot.lane.b32.xlu0 %v253, 113
      %v824 = vpop.permute.xlu0 %823
      %vm825 = vcmp.lt.s32.totalorder %v259, 113
      %v826 = vsel %vm825, %v822, %v824
      %v827 = vsel %vm825, %v824, %v822
      %s828 = scalar_lea.vmem %s1, 6
      %v829 = vld [vmem:[%s828] ss:$8 sm:$0x3]
      %v831 = vlaneseq
      %v832 = vshrl.u32 %v831, 7
      %v833 = vsub.s32 0, %v832
      %v834 = vrot.slane %v829, %v833
      %v835 = vlaneseq
      %v836 = vshrl.u32 %v835, 7
      %v837 = vsub.s32 1, %v836
      %v838 = vrot.slane %v829, %v837
      %v841 = vmul.f32 %v826, %v834
      %v842 = vmul.f32 %v827, %v838
      %s843 = scalar_lea.vmem %s2, 48
      %v844 = vld [vmem:[%s843] sm:$0xff]
      %v846 = vsel %vm350, %v844, 0
      %848 = vmatprep.subr.mxu0 %v842
      %849 = vmatpush1.msra.mxu0 %v841
      %850 = vmatprep.subr.mxu0 0.0
      %851 = vmatpush1.msra.mxu0 0.0
      %852 = vmatprep.subr.mxu0 0.0
      %853 = vmatpush1.msra.mxu0 0.0
      %854 = vmatprep.subr.mxu0 0.0
      %855 = vmatpush1.msra.mxu0 0.0
      %856 = vmatprep.subr.mxu0 0.0
      %857 = vmatpush1.msra.mxu0 0.0
      %858 = vmatprep.subr.mxu0 0.0
      %859 = vmatpush1.msra.mxu0 0.0
      %860 = vmatprep.subr.mxu0 0.0
      %861 = vmatpush1.msra.mxu0 0.0
      %862 = vmatprep.subr.mxu0 0.0
      %863 = vmatpush1.msra.mxu0 0.0
      %864 = vmatprep.subr.mxu0 0.0
      %865 = vmatpush1.msra.mxu0 0.0
      %866 = vmatprep.subr.mxu0 0.0
      %867 = vmatpush1.msra.mxu0 0.0
      %868 = vmatprep.subr.mxu0 0.0
      %869 = vmatpush1.msra.mxu0 0.0
      %870 = vmatprep.subr.mxu0 0.0
      %871 = vmatpush1.msra.mxu0 0.0
      %872 = vmatprep.subr.mxu0 0.0
      %873 = vmatpush1.msra.mxu0 0.0
      %874 = vmatprep.subr.mxu0 0.0
      %875 = vmatpush1.msra.mxu0 0.0
      %876 = vmatprep.subr.mxu0 0.0
      %877 = vmatpush1.msra.mxu0 0.0
      %878 = vmatprep.subr.mxu0 0.0
      %879 = vmatpush1.msra.mxu0 0.0
      %880 = vmatprep.subr.mxu0 0.0
      %881 = vmatpush1.msra.mxu0 0.0
      %882 = vmatprep.subr.mxu0 0.0
      %883 = vmatpush1.msra.mxu0 0.0
      %884 = vmatprep.subr.mxu0 0.0
      %885 = vmatpush1.msra.mxu0 0.0
      %886 = vmatprep.subr.mxu0 0.0
      %887 = vmatpush1.msra.mxu0 0.0
      %888 = vmatprep.subr.mxu0 0.0
      %889 = vmatpush1.msra.mxu0 0.0
      %890 = vmatprep.subr.mxu0 0.0
      %891 = vmatpush1.msra.mxu0 0.0
      %892 = vmatprep.subr.mxu0 0.0
      %893 = vmatpush1.msra.mxu0 0.0
      %894 = vmatprep.subr.mxu0 0.0
      %895 = vmatpush1.msra.mxu0 0.0
      %896 = vmatprep.subr.mxu0 0.0
      %897 = vmatpush1.msra.mxu0 0.0
      %898 = vmatprep.subr.mxu0 0.0
      %899 = vmatpush1.msra.mxu0 0.0
      %900 = vmatprep.subr.mxu0 0.0
      %901 = vmatpush1.msra.mxu0 0.0
      %902 = vmatprep.subr.mxu0 0.0
      %903 = vmatpush1.msra.mxu0 0.0
      %904 = vmatprep.subr.mxu0 0.0
      %905 = vmatpush1.msra.mxu0 0.0
      %906 = vmatprep.subr.mxu0 0.0
      %907 = vmatpush1.msra.mxu0 0.0
      %908 = vmatprep.subr.mxu0 0.0
      %909 = vmatpush1.msra.mxu0 0.0
      %910 = vmatprep.subr.mxu0 0.0
      %911 = vmatpush1.msra.mxu0 0.0
      %912 = vmatprep.mubr.f32.mxu0 0.0
      %913 = vmatmul.mubr.f32.gmra.mrb[0].mxu0 %v846
      %v914 = vpop.f32.mrb[0].mxu0
      %v915 = vadd.f32 0.0, %v914
      %v916 = vpop.f32.mrb[0].mxu0
      %v917 = vadd.f32 0.0, %v916
      %918 = vdwg.mxu0
      %v919 = vadd.f32 %v495, %v915
      %v920 = vadd.f32 %v497, %v917
      %921 = vrot.lane.b32.xlu0 %v252, 112
      %v922 = vpop.permute.xlu0 %921
      %923 = vrot.lane.b32.xlu0 %v253, 112
      %v924 = vpop.permute.xlu0 %923
      %vm925 = vcmp.lt.s32.totalorder %v259, 112
      %v926 = vsel %vm925, %v922, %v924
      %v927 = vsel %vm925, %v924, %v922
      %s928 = scalar_lea.vmem %s1, 7
      %v929 = vld [vmem:[%s928] ss:$8 sm:$0x3]
      %v931 = vlaneseq
      %v932 = vshrl.u32 %v931, 7
      %v933 = vsub.s32 0, %v932
      %v934 = vrot.slane %v929, %v933
      %v935 = vlaneseq
      %v936 = vshrl.u32 %v935, 7
      %v937 = vsub.s32 1, %v936
      %v938 = vrot.slane %v929, %v937
      %v941 = vmul.f32 %v926, %v934
      %v942 = vmul.f32 %v927, %v938
      %s943 = scalar_lea.vmem %s2, 56
      %v944 = vld [vmem:[%s943] sm:$0xff]
      %v946 = vsel %vm350, %v944, 0
      %948 = vmatprep.subr.mxu0 %v942
      %949 = vmatpush1.msra.mxu0 %v941
      %950 = vmatprep.subr.mxu0 0.0
      %951 = vmatpush1.msra.mxu0 0.0
      %952 = vmatprep.subr.mxu0 0.0
      %953 = vmatpush1.msra.mxu0 0.0
      %954 = vmatprep.subr.mxu0 0.0
      %955 = vmatpush1.msra.mxu0 0.0
      %956 = vmatprep.subr.mxu0 0.0
      %957 = vmatpush1.msra.mxu0 0.0
      %958 = vmatprep.subr.mxu0 0.0
      %959 = vmatpush1.msra.mxu0 0.0
      %960 = vmatprep.subr.mxu0 0.0
      %961 = vmatpush1.msra.mxu0 0.0
      %962 = vmatprep.subr.mxu0 0.0
      %963 = vmatpush1.msra.mxu0 0.0
      %964 = vmatprep.subr.mxu0 0.0
      %965 = vmatpush1.msra.mxu0 0.0
      %966 = vmatprep.subr.mxu0 0.0
      %967 = vmatpush1.msra.mxu0 0.0
      %968 = vmatprep.subr.mxu0 0.0
      %969 = vmatpush1.msra.mxu0 0.0
      %970 = vmatprep.subr.mxu0 0.0
      %971 = vmatpush1.msra.mxu0 0.0
      %972 = vmatprep.subr.mxu0 0.0
      %973 = vmatpush1.msra.mxu0 0.0
      %974 = vmatprep.subr.mxu0 0.0
      %975 = vmatpush1.msra.mxu0 0.0
      %976 = vmatprep.subr.mxu0 0.0
      %977 = vmatpush1.msra.mxu0 0.0
      %978 = vmatprep.subr.mxu0 0.0
      %979 = vmatpush1.msra.mxu0 0.0
      %980 = vmatprep.subr.mxu0 0.0
      %981 = vmatpush1.msra.mxu0 0.0
      %982 = vmatprep.subr.mxu0 0.0
      %983 = vmatpush1.msra.mxu0 0.0
      %984 = vmatprep.subr.mxu0 0.0
      %985 = vmatpush1.msra.mxu0 0.0
      %986 = vmatprep.subr.mxu0 0.0
      %987 = vmatpush1.msra.mxu0 0.0
      %988 = vmatprep.subr.mxu0 0.0
      %989 = vmatpush1.msra.mxu0 0.0
      %990 = vmatprep.subr.mxu0 0.0
      %991 = vmatpush1.msra.mxu0 0.0
      %992 = vmatprep.subr.mxu0 0.0
      %993 = vmatpush1.msra.mxu0 0.0
      %994 = vmatprep.subr.mxu0 0.0
      %995 = vmatpush1.msra.mxu0 0.0
      %996 = vmatprep.subr.mxu0 0.0
      %997 = vmatpush1.msra.mxu0 0.0
      %998 = vmatprep.subr.mxu0 0.0
      %999 = vmatpush1.msra.mxu0 0.0
      %1000 = vmatprep.subr.mxu0 0.0
      %1001 = vmatpush1.msra.mxu0 0.0
      %1002 = vmatprep.subr.mxu0 0.0
      %1003 = vmatpush1.msra.mxu0 0.0
      %1004 = vmatprep.subr.mxu0 0.0
      %1005 = vmatpush1.msra.mxu0 0.0
      %1006 = vmatprep.subr.mxu0 0.0
      %1007 = vmatpush1.msra.mxu0 0.0
      %1008 = vmatprep.subr.mxu0 0.0
      %1009 = vmatpush1.msra.mxu0 0.0
      %1010 = vmatprep.subr.mxu0 0.0
      %1011 = vmatpush1.msra.mxu0 0.0
      %1012 = vmatprep.mubr.f32.mxu0 0.0
      %1013 = vmatmul.mubr.f32.gmra.mrb[0].mxu0 %v946
      %v1014 = vpop.f32.mrb[0].mxu0
      %v1015 = vadd.f32 0.0, %v1014
      %v1016 = vpop.f32.mrb[0].mxu0
      %v1017 = vadd.f32 0.0, %v1016
      %1018 = vdwg.mxu0
      %v1019 = vadd.f32 %v645, %v1015
      %v1020 = vadd.f32 %v647, %v1017
      %1021 = vrot.lane.b32.xlu0 %v252, 111
      %v1022 = vpop.permute.xlu0 %1021
      %1023 = vrot.lane.b32.xlu0 %v253, 111
      %v1024 = vpop.permute.xlu0 %1023
      %vm1025 = vcmp.lt.s32.totalorder %v259, 111
      %v1026 = vsel %vm1025, %v1022, %v1024
      %v1027 = vsel %vm1025, %v1024, %v1022
      %s1028 = scalar_lea.vmem %s1, 16
      %v1029 = vld [vmem:[%s1028] ss:$8 sm:$0x3]
      %v1031 = vlaneseq
      %v1032 = vshrl.u32 %v1031, 7
      %v1033 = vsub.s32 0, %v1032
      %v1034 = vrot.slane %v1029, %v1033
      %v1035 = vlaneseq
      %v1036 = vshrl.u32 %v1035, 7
      %v1037 = vsub.s32 1, %v1036
      %v1038 = vrot.slane %v1029, %v1037
      %v1041 = vmul.f32 %v1026, %v1034
      %v1042 = vmul.f32 %v1027, %v1038
      %s1043 = scalar_lea.vmem %s2, 64
      %v1044 = vld [vmem:[%s1043] sm:$0xff]
      %v1046 = vsel %vm350, %v1044, 0
      %1048 = vmatprep.subr.mxu0 %v1042
      %1049 = vmatpush1.msra.mxu0 %v1041
      %1050 = vmatprep.subr.mxu0 0.0
      %1051 = vmatpush1.msra.mxu0 0.0
      %1052 = vmatprep.subr.mxu0 0.0
      %1053 = vmatpush1.msra.mxu0 0.0
      %1054 = vmatprep.subr.mxu0 0.0
      %1055 = vmatpush1.msra.mxu0 0.0
      %1056 = vmatprep.subr.mxu0 0.0
      %1057 = vmatpush1.msra.mxu0 0.0
      %1058 = vmatprep.subr.mxu0 0.0
      %1059 = vmatpush1.msra.mxu0 0.0
      %1060 = vmatprep.subr.mxu0 0.0
      %1061 = vmatpush1.msra.mxu0 0.0
      %1062 = vmatprep.subr.mxu0 0.0
      %1063 = vmatpush1.msra.mxu0 0.0
      %1064 = vmatprep.subr.mxu0 0.0
      %1065 = vmatpush1.msra.mxu0 0.0
      %1066 = vmatprep.subr.mxu0 0.0
      %1067 = vmatpush1.msra.mxu0 0.0
      %1068 = vmatprep.subr.mxu0 0.0
      %1069 = vmatpush1.msra.mxu0 0.0
      %1070 = vmatprep.subr.mxu0 0.0
      %1071 = vmatpush1.msra.mxu0 0.0
      %1072 = vmatprep.subr.mxu0 0.0
      %1073 = vmatpush1.msra.mxu0 0.0
      %1074 = vmatprep.subr.mxu0 0.0
      %1075 = vmatpush1.msra.mxu0 0.0
      %1076 = vmatprep.subr.mxu0 0.0
      %1077 = vmatpush1.msra.mxu0 0.0
      %1078 = vmatprep.subr.mxu0 0.0
      %1079 = vmatpush1.msra.mxu0 0.0
      %1080 = vmatprep.subr.mxu0 0.0
      %1081 = vmatpush1.msra.mxu0 0.0
      %1082 = vmatprep.subr.mxu0 0.0
      %1083 = vmatpush1.msra.mxu0 0.0
      %1084 = vmatprep.subr.mxu0 0.0
      %1085 = vmatpush1.msra.mxu0 0.0
      %1086 = vmatprep.subr.mxu0 0.0
      %1087 = vmatpush1.msra.mxu0 0.0
      %1088 = vmatprep.subr.mxu0 0.0
      %1089 = vmatpush1.msra.mxu0 0.0
      %1090 = vmatprep.subr.mxu0 0.0
      %1091 = vmatpush1.msra.mxu0 0.0
      %1092 = vmatprep.subr.mxu0 0.0
      %1093 = vmatpush1.msra.mxu0 0.0
      %1094 = vmatprep.subr.mxu0 0.0
      %1095 = vmatpush1.msra.mxu0 0.0
      %1096 = vmatprep.subr.mxu0 0.0
      %1097 = vmatpush1.msra.mxu0 0.0
      %1098 = vmatprep.subr.mxu0 0.0
      %1099 = vmatpush1.msra.mxu0 0.0
      %1100 = vmatprep.subr.mxu0 0.0
      %1101 = vmatpush1.msra.mxu0 0.0
      %1102 = vmatprep.subr.mxu0 0.0
      %1103 = vmatpush1.msra.mxu0 0.0
      %1104 = vmatprep.subr.mxu0 0.0
      %1105 = vmatpush1.msra.mxu0 0.0
      %1106 = vmatprep.subr.mxu0 0.0
      %1107 = vmatpush1.msra.mxu0 0.0
      %1108 = vmatprep.subr.mxu0 0.0
      %1109 = vmatpush1.msra.mxu0 0.0
      %1110 = vmatprep.subr.mxu0 0.0
      %1111 = vmatpush1.msra.mxu0 0.0
      %1112 = vmatprep.mubr.f32.mxu0 0.0
      %1113 = vmatmul.mubr.f32.gmra.mrb[0].mxu0 %v1046
      %v1114 = vpop.f32.mrb[0].mxu0
      %v1115 = vadd.f32 0.0, %v1114
      %v1116 = vpop.f32.mrb[0].mxu0
      %v1117 = vadd.f32 0.0, %v1116
      %1118 = vdwg.mxu0
      %v1119 = vadd.f32 %v817, %v1115
      %v1120 = vadd.f32 %v819, %v1117
      %v1121 = vadd.f32 %v919, %v1019
      %v1122 = vadd.f32 %v920, %v1020
      %v1123 = vld [vmem:[%s3] sm:$0xff]
      %1125 = vset.pattern.permute.xlu0 0
      %1126 = vperm.xlu0 %1125, %v1123
      %v1127 = vpop.permute.xlu0 %1126
      %v1129 = vadd.f32 %v1119, %v1127
      %v1130 = vadd.f32 %v1120, %v1127
      %v1131 = vadd.f32 %v1121, %v1129
      %v1132 = vadd.f32 %v1122, %v1130
      %v1133 = vmax.f32 %v1131, 0.0
      %v1134 = vmax.f32 %v1132, 0.0
      %1135 = vrot.lane.b32.xlu0 %v1133, 17
      %v1136 = vpop.permute.xlu0 %1135
      %1137 = vrot.lane.b32.xlu0 %v1134, 17
      %v1138 = vpop.permute.xlu0 %1137
      %v1139 = vsel %vm260, %v1136, %v1138
      %v1140 = vsel %vm260, %v1138, %v1136
      %v1141 = vmul.f32 %v1140, %v268
      %v1142 = vmul.f32 %v1139, %v272
      %v1143 = vld [vmem:[%s4] sm:$0x1]
      %1144 = vrot.lane.b32.xlu0 %v1133, 16
      %v1145 = vpop.permute.xlu0 %1144
      %1146 = vrot.lane.b32.xlu0 %v1134, 16
      %v1147 = vpop.permute.xlu0 %1146
      %v1148 = vsel %vm282, %v1145, %v1147
      %v1149 = vsel %vm282, %v1147, %v1145
      %v1150 = vmul.f32 %v1149, %v291
      %v1151 = vmul.f32 %v1148, %v295
      %s1152 = scalar_lea.vmem %s4, 1
      %v1153 = vld [vmem:[%s1152] sm:$0x1]
      %1154 = vrot.lane.b32.xlu0 %v1133, 15
      %v1155 = vpop.permute.xlu0 %1154
      %1156 = vrot.lane.b32.xlu0 %v1134, 15
      %v1157 = vpop.permute.xlu0 %1156
      %v1158 = vsel %vm306, %v1155, %v1157
      %v1159 = vsel %vm306, %v1157, %v1155
      %v1160 = vmul.f32 %v1159, %v315
      %v1161 = vmul.f32 %v1158, %v319
      %s1162 = scalar_lea.vmem %s4, 2
      %v1163 = vld [vmem:[%s1162] sm:$0x1]
      %1164 = vrot.lane.b32.xlu0 %v1133, 1
      %v1165 = vpop.permute.xlu0 %1164
      %1166 = vrot.lane.b32.xlu0 %v1134, 1
      %v1167 = vpop.permute.xlu0 %1166
      %v1168 = vsel %vm330, %v1165, %v1167
      %v1169 = vsel %vm330, %v1167, %v1165
      %v1170 = vmul.f32 %v1169, %v339
      %v1171 = vmul.f32 %v1168, %v343
      %s1172 = scalar_lea.vmem %s4, 3
      %v1173 = vld [vmem:[%s1172] sm:$0x1]
      %v1175 = vsel %vm350, %v1173, 0
      %1177 = vmatprep.subr.mxu0 %v1171
      %1178 = vmatpush1.msra.mxu0 %v1170
      %1179 = vmatprep.subr.mxu0 0.0
      %1180 = vmatpush1.msra.mxu0 0.0
      %1181 = vmatprep.subr.mxu0 0.0
      %1182 = vmatpush1.msra.mxu0 0.0
      %1183 = vmatprep.subr.mxu0 0.0
      %1184 = vmatpush1.msra.mxu0 0.0
      %1185 = vmatprep.subr.mxu0 0.0
      %1186 = vmatpush1.msra.mxu0 0.0
      %1187 = vmatprep.subr.mxu0 0.0
      %1188 = vmatpush1.msra.mxu0 0.0
      %1189 = vmatprep.subr.mxu0 0.0
      %1190 = vmatpush1.msra.mxu0 0.0
      %1191 = vmatprep.subr.mxu0 0.0
      %1192 = vmatpush1.msra.mxu0 0.0
      %1193 = vmatprep.subr.mxu0 0.0
      %1194 = vmatpush1.msra.mxu0 0.0
      %1195 = vmatprep.subr.mxu0 0.0
      %1196 = vmatpush1.msra.mxu0 0.0
      %1197 = vmatprep.subr.mxu0 0.0
      %1198 = vmatpush1.msra.mxu0 0.0
      %1199 = vmatprep.subr.mxu0 0.0
      %1200 = vmatpush1.msra.mxu0 0.0
      %1201 = vmatprep.subr.mxu0 0.0
      %1202 = vmatpush1.msra.mxu0 0.0
      %1203 = vmatprep.subr.mxu0 0.0
      %1204 = vmatpush1.msra.mxu0 0.0
      %1205 = vmatprep.subr.mxu0 0.0
      %1206 = vmatpush1.msra.mxu0 0.0
      %1207 = vmatprep.subr.mxu0 0.0
      %1208 = vmatpush1.msra.mxu0 0.0
      %1209 = vmatprep.subr.mxu0 0.0
      %1210 = vmatpush1.msra.mxu0 0.0
      %1211 = vmatprep.subr.mxu0 0.0
      %1212 = vmatpush1.msra.mxu0 0.0
      %1213 = vmatprep.subr.mxu0 0.0
      %1214 = vmatpush1.msra.mxu0 0.0
      %1215 = vmatprep.subr.mxu0 0.0
      %1216 = vmatpush1.msra.mxu0 0.0
      %1217 = vmatprep.subr.mxu0 0.0
      %1218 = vmatpush1.msra.mxu0 0.0
      %1219 = vmatprep.subr.mxu0 0.0
      %1220 = vmatpush1.msra.mxu0 0.0
      %1221 = vmatprep.subr.mxu0 0.0
      %1222 = vmatpush1.msra.mxu0 0.0
      %1223 = vmatprep.subr.mxu0 0.0
      %1224 = vmatpush1.msra.mxu0 0.0
      %1225 = vmatprep.subr.mxu0 0.0
      %1226 = vmatpush1.msra.mxu0 0.0
      %1227 = vmatprep.subr.mxu0 0.0
      %1228 = vmatpush1.msra.mxu0 0.0
      %1229 = vmatprep.subr.mxu0 0.0
      %1230 = vmatpush1.msra.mxu0 0.0
      %1231 = vmatprep.subr.mxu0 0.0
      %1232 = vmatpush1.msra.mxu0 0.0
      %1233 = vmatprep.subr.mxu0 0.0
      %1234 = vmatpush1.msra.mxu0 0.0
      %1235 = vmatprep.subr.mxu0 0.0
      %1236 = vmatpush1.msra.mxu0 0.0
      %1237 = vmatprep.subr.mxu0 0.0
      %1238 = vmatpush1.msra.mxu0 0.0
      %1239 = vmatprep.subr.mxu0 0.0
      %1240 = vmatpush1.msra.mxu0 0.0
      %1241 = vmatprep.mubr.f32.mxu0 0.0
      %1242 = vmatmul.mubr.f32.gmra.mrb[0].mxu0 %v1175
      %v1243 = vpop.f32.mrb[0].mxu0
      %v1244 = vadd.f32 0.0, %v1243
      %v1245 = vpop.f32.mrb[0].mxu0
      %v1246 = vadd.f32 0.0, %v1245
      %1247 = vdwg.mxu0
      %v1249 = vsel %vm350, %v1143, 0
      %1251 = vmatprep.subr.mxu0 %v1142
      %1252 = vmatpush1.msra.mxu0 %v1141
      %1253 = vmatprep.subr.mxu0 0.0
      %1254 = vmatpush1.msra.mxu0 0.0
      %1255 = vmatprep.subr.mxu0 0.0
      %1256 = vmatpush1.msra.mxu0 0.0
      %1257 = vmatprep.subr.mxu0 0.0
      %1258 = vmatpush1.msra.mxu0 0.0
      %1259 = vmatprep.subr.mxu0 0.0
      %1260 = vmatpush1.msra.mxu0 0.0
      %1261 = vmatprep.subr.mxu0 0.0
      %1262 = vmatpush1.msra.mxu0 0.0
      %1263 = vmatprep.subr.mxu0 0.0
      %1264 = vmatpush1.msra.mxu0 0.0
      %1265 = vmatprep.subr.mxu0 0.0
      %1266 = vmatpush1.msra.mxu0 0.0
      %1267 = vmatprep.subr.mxu0 0.0
      %1268 = vmatpush1.msra.mxu0 0.0
      %1269 = vmatprep.subr.mxu0 0.0
      %1270 = vmatpush1.msra.mxu0 0.0
      %1271 = vmatprep.subr.mxu0 0.0
      %1272 = vmatpush1.msra.mxu0 0.0
      %1273 = vmatprep.subr.mxu0 0.0
      %1274 = vmatpush1.msra.mxu0 0.0
      %1275 = vmatprep.subr.mxu0 0.0
      %1276 = vmatpush1.msra.mxu0 0.0
      %1277 = vmatprep.subr.mxu0 0.0
      %1278 = vmatpush1.msra.mxu0 0.0
      %1279 = vmatprep.subr.mxu0 0.0
      %1280 = vmatpush1.msra.mxu0 0.0
      %1281 = vmatprep.subr.mxu0 0.0
      %1282 = vmatpush1.msra.mxu0 0.0
      %1283 = vmatprep.subr.mxu0 0.0
      %1284 = vmatpush1.msra.mxu0 0.0
      %1285 = vmatprep.subr.mxu0 0.0
      %1286 = vmatpush1.msra.mxu0 0.0
      %1287 = vmatprep.subr.mxu0 0.0
      %1288 = vmatpush1.msra.mxu0 0.0
      %1289 = vmatprep.subr.mxu0 0.0
      %1290 = vmatpush1.msra.mxu0 0.0
      %1291 = vmatprep.subr.mxu0 0.0
      %1292 = vmatpush1.msra.mxu0 0.0
      %1293 = vmatprep.subr.mxu0 0.0
      %1294 = vmatpush1.msra.mxu0 0.0
      %1295 = vmatprep.subr.mxu0 0.0
      %1296 = vmatpush1.msra.mxu0 0.0
      %1297 = vmatprep.subr.mxu0 0.0
      %1298 = vmatpush1.msra.mxu0 0.0
      %1299 = vmatprep.subr.mxu0 0.0
      %1300 = vmatpush1.msra.mxu0 0.0
      %1301 = vmatprep.subr.mxu0 0.0
      %1302 = vmatpush1.msra.mxu0 0.0
      %1303 = vmatprep.subr.mxu0 0.0
      %1304 = vmatpush1.msra.mxu0 0.0
      %1305 = vmatprep.subr.mxu0 0.0
      %1306 = vmatpush1.msra.mxu0 0.0
      %1307 = vmatprep.subr.mxu0 0.0
      %1308 = vmatpush1.msra.mxu0 0.0
      %1309 = vmatprep.subr.mxu0 0.0
      %1310 = vmatpush1.msra.mxu0 0.0
      %1311 = vmatprep.subr.mxu0 0.0
      %1312 = vmatpush1.msra.mxu0 0.0
      %1313 = vmatprep.subr.mxu0 0.0
      %1314 = vmatpush1.msra.mxu0 0.0
      %1315 = vmatprep.mubr.f32.mxu0 0.0
      %1316 = vmatmul.mubr.f32.gmra.mrb[0].mxu0 %v1249
      %v1317 = vpop.f32.mrb[0].mxu0
      %v1318 = vadd.f32 %v1244, %v1317
      %v1319 = vpop.f32.mrb[0].mxu0
      %v1320 = vadd.f32 %v1246, %v1319
      %1321 = vdwg.mxu0
      %s1322 = scalar_lea.vmem %s4, 4
      %v1323 = vld [vmem:[%s1322] sm:$0x1]
      %v1325 = vsel %vm350, %v1323, 0
      %1327 = vmatprep.subr.mxu0 %v1134
      %1328 = vmatpush1.msra.mxu0 %v1133
      %1329 = vmatprep.subr.mxu0 0.0
      %1330 = vmatpush1.msra.mxu0 0.0
      %1331 = vmatprep.subr.mxu0 0.0
      %1332 = vmatpush1.msra.mxu0 0.0
      %1333 = vmatprep.subr.mxu0 0.0
      %1334 = vmatpush1.msra.mxu0 0.0
      %1335 = vmatprep.subr.mxu0 0.0
      %1336 = vmatpush1.msra.mxu0 0.0
      %1337 = vmatprep.subr.mxu0 0.0
      %1338 = vmatpush1.msra.mxu0 0.0
      %1339 = vmatprep.subr.mxu0 0.0
      %1340 = vmatpush1.msra.mxu0 0.0
      %1341 = vmatprep.subr.mxu0 0.0
      %1342 = vmatpush1.msra.mxu0 0.0
      %1343 = vmatprep.subr.mxu0 0.0
      %1344 = vmatpush1.msra.mxu0 0.0
      %1345 = vmatprep.subr.mxu0 0.0
      %1346 = vmatpush1.msra.mxu0 0.0
      %1347 = vmatprep.subr.mxu0 0.0
      %1348 = vmatpush1.msra.mxu0 0.0
      %1349 = vmatprep.subr.mxu0 0.0
      %1350 = vmatpush1.msra.mxu0 0.0
      %1351 = vmatprep.subr.mxu0 0.0
      %1352 = vmatpush1.msra.mxu0 0.0
      %1353 = vmatprep.subr.mxu0 0.0
      %1354 = vmatpush1.msra.mxu0 0.0
      %1355 = vmatprep.subr.mxu0 0.0
      %1356 = vmatpush1.msra.mxu0 0.0
      %1357 = vmatprep.subr.mxu0 0.0
      %1358 = vmatpush1.msra.mxu0 0.0
      %1359 = vmatprep.subr.mxu0 0.0
      %1360 = vmatpush1.msra.mxu0 0.0
      %1361 = vmatprep.subr.mxu0 0.0
      %1362 = vmatpush1.msra.mxu0 0.0
      %1363 = vmatprep.subr.mxu0 0.0
      %1364 = vmatpush1.msra.mxu0 0.0
      %1365 = vmatprep.subr.mxu0 0.0
      %1366 = vmatpush1.msra.mxu0 0.0
      %1367 = vmatprep.subr.mxu0 0.0
      %1368 = vmatpush1.msra.mxu0 0.0
      %1369 = vmatprep.subr.mxu0 0.0
      %1370 = vmatpush1.msra.mxu0 0.0
      %1371 = vmatprep.subr.mxu0 0.0
      %1372 = vmatpush1.msra.mxu0 0.0
      %1373 = vmatprep.subr.mxu0 0.0
      %1374 = vmatpush1.msra.mxu0 0.0
      %1375 = vmatprep.subr.mxu0 0.0
      %1376 = vmatpush1.msra.mxu0 0.0
      %1377 = vmatprep.subr.mxu0 0.0
      %1378 = vmatpush1.msra.mxu0 0.0
      %1379 = vmatprep.subr.mxu0 0.0
      %1380 = vmatpush1.msra.mxu0 0.0
      %1381 = vmatprep.subr.mxu0 0.0
      %1382 = vmatpush1.msra.mxu0 0.0
      %1383 = vmatprep.subr.mxu0 0.0
      %1384 = vmatpush1.msra.mxu0 0.0
      %1385 = vmatprep.subr.mxu0 0.0
      %1386 = vmatpush1.msra.mxu0 0.0
      %1387 = vmatprep.subr.mxu0 0.0
      %1388 = vmatpush1.msra.mxu0 0.0
      %1389 = vmatprep.subr.mxu0 0.0
      %1390 = vmatpush1.msra.mxu0 0.0
      %1391 = vmatprep.mubr.f32.mxu0 0.0
      %1392 = vmatmul.mubr.f32.gmra.mrb[0].mxu0 %v1325
      %v1393 = vpop.f32.mrb[0].mxu0
      %v1394 = vadd.f32 0.0, %v1393
      %v1395 = vpop.f32.mrb[0].mxu0
      %v1396 = vadd.f32 0.0, %v1395
      %1397 = vdwg.mxu0
      %v1399 = vsel %vm350, %v1153, 0
      %1401 = vmatprep.subr.mxu0 %v1151
      %1402 = vmatpush1.msra.mxu0 %v1150
      %1403 = vmatprep.subr.mxu0 0.0
      %1404 = vmatpush1.msra.mxu0 0.0
      %1405 = vmatprep.subr.mxu0 0.0
      %1406 = vmatpush1.msra.mxu0 0.0
      %1407 = vmatprep.subr.mxu0 0.0
      %1408 = vmatpush1.msra.mxu0 0.0
      %1409 = vmatprep.subr.mxu0 0.0
      %1410 = vmatpush1.msra.mxu0 0.0
      %1411 = vmatprep.subr.mxu0 0.0
      %1412 = vmatpush1.msra.mxu0 0.0
      %1413 = vmatprep.subr.mxu0 0.0
      %1414 = vmatpush1.msra.mxu0 0.0
      %1415 = vmatprep.subr.mxu0 0.0
      %1416 = vmatpush1.msra.mxu0 0.0
      %1417 = vmatprep.subr.mxu0 0.0
      %1418 = vmatpush1.msra.mxu0 0.0
      %1419 = vmatprep.subr.mxu0 0.0
      %1420 = vmatpush1.msra.mxu0 0.0
      %1421 = vmatprep.subr.mxu0 0.0
      %1422 = vmatpush1.msra.mxu0 0.0
      %1423 = vmatprep.subr.mxu0 0.0
      %1424 = vmatpush1.msra.mxu0 0.0
      %1425 = vmatprep.subr.mxu0 0.0
      %1426 = vmatpush1.msra.mxu0 0.0
      %1427 = vmatprep.subr.mxu0 0.0
      %1428 = vmatpush1.msra.mxu0 0.0
      %1429 = vmatprep.subr.mxu0 0.0
      %1430 = vmatpush1.msra.mxu0 0.0
      %1431 = vmatprep.subr.mxu0 0.0
      %1432 = vmatpush1.msra.mxu0 0.0
      %1433 = vmatprep.subr.mxu0 0.0
      %1434 = vmatpush1.msra.mxu0 0.0
      %1435 = vmatprep.subr.mxu0 0.0
      %1436 = vmatpush1.msra.mxu0 0.0
      %1437 = vmatprep.subr.mxu0 0.0
      %1438 = vmatpush1.msra.mxu0 0.0
      %1439 = vmatprep.subr.mxu0 0.0
      %1440 = vmatpush1.msra.mxu0 0.0
      %1441 = vmatprep.subr.mxu0 0.0
      %1442 = vmatpush1.msra.mxu0 0.0
      %1443 = vmatprep.subr.mxu0 0.0
      %1444 = vmatpush1.msra.mxu0 0.0
      %1445 = vmatprep.subr.mxu0 0.0
      %1446 = vmatpush1.msra.mxu0 0.0
      %1447 = vmatprep.subr.mxu0 0.0
      %1448 = vmatpush1.msra.mxu0 0.0
      %1449 = vmatprep.subr.mxu0 0.0
      %1450 = vmatpush1.msra.mxu0 0.0
      %1451 = vmatprep.subr.mxu0 0.0
      %1452 = vmatpush1.msra.mxu0 0.0
      %1453 = vmatprep.subr.mxu0 0.0
      %1454 = vmatpush1.msra.mxu0 0.0
      %1455 = vmatprep.subr.mxu0 0.0
      %1456 = vmatpush1.msra.mxu0 0.0
      %1457 = vmatprep.subr.mxu0 0.0
      %1458 = vmatpush1.msra.mxu0 0.0
      %1459 = vmatprep.subr.mxu0 0.0
      %1460 = vmatpush1.msra.mxu0 0.0
      %1461 = vmatprep.subr.mxu0 0.0
      %1462 = vmatpush1.msra.mxu0 0.0
      %1463 = vmatprep.subr.mxu0 0.0
      %1464 = vmatpush1.msra.mxu0 0.0
      %1465 = vmatprep.mubr.f32.mxu0 0.0
      %1466 = vmatmul.mubr.f32.gmra.mrb[0].mxu0 %v1399
      %v1467 = vpop.f32.mrb[0].mxu0
      %v1468 = vadd.f32 %v1394, %v1467
      %v1469 = vpop.f32.mrb[0].mxu0
      %v1470 = vadd.f32 %v1396, %v1469
      %1471 = vdwg.mxu0
      %1472 = vrot.lane.b32.xlu0 %v1133, 127
      %v1473 = vpop.permute.xlu0 %1472
      %1474 = vrot.lane.b32.xlu0 %v1134, 127
      %v1475 = vpop.permute.xlu0 %1474
      %v1476 = vsel %vm653, %v1473, %v1475
      %v1477 = vsel %vm653, %v1475, %v1473
      %v1478 = vmul.f32 %v1476, %v662
      %v1479 = vmul.f32 %v1477, %v666
      %s1480 = scalar_lea.vmem %s4, 5
      %v1481 = vld [vmem:[%s1480] sm:$0x1]
      %v1483 = vsel %vm350, %v1481, 0
      %1485 = vmatprep.subr.mxu0 %v1479
      %1486 = vmatpush1.msra.mxu0 %v1478
      %1487 = vmatprep.subr.mxu0 0.0
      %1488 = vmatpush1.msra.mxu0 0.0
      %1489 = vmatprep.subr.mxu0 0.0
      %1490 = vmatpush1.msra.mxu0 0.0
      %1491 = vmatprep.subr.mxu0 0.0
      %1492 = vmatpush1.msra.mxu0 0.0
      %1493 = vmatprep.subr.mxu0 0.0
      %1494 = vmatpush1.msra.mxu0 0.0
      %1495 = vmatprep.subr.mxu0 0.0
      %1496 = vmatpush1.msra.mxu0 0.0
      %1497 = vmatprep.subr.mxu0 0.0
      %1498 = vmatpush1.msra.mxu0 0.0
      %1499 = vmatprep.subr.mxu0 0.0
      %1500 = vmatpush1.msra.mxu0 0.0
      %1501 = vmatprep.subr.mxu0 0.0
      %1502 = vmatpush1.msra.mxu0 0.0
      %1503 = vmatprep.subr.mxu0 0.0
      %1504 = vmatpush1.msra.mxu0 0.0
      %1505 = vmatprep.subr.mxu0 0.0
      %1506 = vmatpush1.msra.mxu0 0.0
      %1507 = vmatprep.subr.mxu0 0.0
      %1508 = vmatpush1.msra.mxu0 0.0
      %1509 = vmatprep.subr.mxu0 0.0
      %1510 = vmatpush1.msra.mxu0 0.0
      %1511 = vmatprep.subr.mxu0 0.0
      %1512 = vmatpush1.msra.mxu0 0.0
      %1513 = vmatprep.subr.mxu0 0.0
      %1514 = vmatpush1.msra.mxu0 0.0
      %1515 = vmatprep.subr.mxu0 0.0
      %1516 = vmatpush1.msra.mxu0 0.0
      %1517 = vmatprep.subr.mxu0 0.0
      %1518 = vmatpush1.msra.mxu0 0.0
      %1519 = vmatprep.subr.mxu0 0.0
      %1520 = vmatpush1.msra.mxu0 0.0
      %1521 = vmatprep.subr.mxu0 0.0
      %1522 = vmatpush1.msra.mxu0 0.0
      %1523 = vmatprep.subr.mxu0 0.0
      %1524 = vmatpush1.msra.mxu0 0.0
      %1525 = vmatprep.subr.mxu0 0.0
      %1526 = vmatpush1.msra.mxu0 0.0
      %1527 = vmatprep.subr.mxu0 0.0
      %1528 = vmatpush1.msra.mxu0 0.0
      %1529 = vmatprep.subr.mxu0 0.0
      %1530 = vmatpush1.msra.mxu0 0.0
      %1531 = vmatprep.subr.mxu0 0.0
      %1532 = vmatpush1.msra.mxu0 0.0
      %1533 = vmatprep.subr.mxu0 0.0
      %1534 = vmatpush1.msra.mxu0 0.0
      %1535 = vmatprep.subr.mxu0 0.0
      %1536 = vmatpush1.msra.mxu0 0.0
      %1537 = vmatprep.subr.mxu0 0.0
      %1538 = vmatpush1.msra.mxu0 0.0
      %1539 = vmatprep.subr.mxu0 0.0
      %1540 = vmatpush1.msra.mxu0 0.0
      %1541 = vmatprep.subr.mxu0 0.0
      %1542 = vmatpush1.msra.mxu0 0.0
      %1543 = vmatprep.subr.mxu0 0.0
      %1544 = vmatpush1.msra.mxu0 0.0
      %1545 = vmatprep.subr.mxu0 0.0
      %1546 = vmatpush1.msra.mxu0 0.0
      %1547 = vmatprep.subr.mxu0 0.0
      %1548 = vmatpush1.msra.mxu0 0.0
      %1549 = vmatprep.mubr.f32.mxu0 0.0
      %1550 = vmatmul.mubr.f32.gmra.mrb[0].mxu0 %v1483
      %v1551 = vpop.f32.mrb[0].mxu0
      %v1552 = vadd.f32 0.0, %v1551
      %v1553 = vpop.f32.mrb[0].mxu0
      %v1554 = vadd.f32 0.0, %v1553
      %1555 = vdwg.mxu0
      %v1557 = vsel %vm350, %v1163, 0
      %1559 = vmatprep.subr.mxu0 %v1161
      %1560 = vmatpush1.msra.mxu0 %v1160
      %1561 = vmatprep.subr.mxu0 0.0
      %1562 = vmatpush1.msra.mxu0 0.0
      %1563 = vmatprep.subr.mxu0 0.0
      %1564 = vmatpush1.msra.mxu0 0.0
      %1565 = vmatprep.subr.mxu0 0.0
      %1566 = vmatpush1.msra.mxu0 0.0
      %1567 = vmatprep.subr.mxu0 0.0
      %1568 = vmatpush1.msra.mxu0 0.0
      %1569 = vmatprep.subr.mxu0 0.0
      %1570 = vmatpush1.msra.mxu0 0.0
      %1571 = vmatprep.subr.mxu0 0.0
      %1572 = vmatpush1.msra.mxu0 0.0
      %1573 = vmatprep.subr.mxu0 0.0
      %1574 = vmatpush1.msra.mxu0 0.0
      %1575 = vmatprep.subr.mxu0 0.0
      %1576 = vmatpush1.msra.mxu0 0.0
      %1577 = vmatprep.subr.mxu0 0.0
      %1578 = vmatpush1.msra.mxu0 0.0
      %1579 = vmatprep.subr.mxu0 0.0
      %1580 = vmatpush1.msra.mxu0 0.0
      %1581 = vmatprep.subr.mxu0 0.0
      %1582 = vmatpush1.msra.mxu0 0.0
      %1583 = vmatprep.subr.mxu0 0.0
      %1584 = vmatpush1.msra.mxu0 0.0
      %1585 = vmatprep.subr.mxu0 0.0
      %1586 = vmatpush1.msra.mxu0 0.0
      %1587 = vmatprep.subr.mxu0 0.0
      %1588 = vmatpush1.msra.mxu0 0.0
      %1589 = vmatprep.subr.mxu0 0.0
      %1590 = vmatpush1.msra.mxu0 0.0
      %1591 = vmatprep.subr.mxu0 0.0
      %1592 = vmatpush1.msra.mxu0 0.0
      %1593 = vmatprep.subr.mxu0 0.0
      %1594 = vmatpush1.msra.mxu0 0.0
      %1595 = vmatprep.subr.mxu0 0.0
      %1596 = vmatpush1.msra.mxu0 0.0
      %1597 = vmatprep.subr.mxu0 0.0
      %1598 = vmatpush1.msra.mxu0 0.0
      %1599 = vmatprep.subr.mxu0 0.0
      %1600 = vmatpush1.msra.mxu0 0.0
      %1601 = vmatprep.subr.mxu0 0.0
      %1602 = vmatpush1.msra.mxu0 0.0
      %1603 = vmatprep.subr.mxu0 0.0
      %1604 = vmatpush1.msra.mxu0 0.0
      %1605 = vmatprep.subr.mxu0 0.0
      %1606 = vmatpush1.msra.mxu0 0.0
      %1607 = vmatprep.subr.mxu0 0.0
      %1608 = vmatpush1.msra.mxu0 0.0
      %1609 = vmatprep.subr.mxu0 0.0
      %1610 = vmatpush1.msra.mxu0 0.0
      %1611 = vmatprep.subr.mxu0 0.0
      %1612 = vmatpush1.msra.mxu0 0.0
      %1613 = vmatprep.subr.mxu0 0.0
      %1614 = vmatpush1.msra.mxu0 0.0
      %1615 = vmatprep.subr.mxu0 0.0
      %1616 = vmatpush1.msra.mxu0 0.0
      %1617 = vmatprep.subr.mxu0 0.0
      %1618 = vmatpush1.msra.mxu0 0.0
      %1619 = vmatprep.subr.mxu0 0.0
      %1620 = vmatpush1.msra.mxu0 0.0
      %1621 = vmatprep.subr.mxu0 0.0
      %1622 = vmatpush1.msra.mxu0 0.0
      %1623 = vmatprep.mubr.f32.mxu0 0.0
      %1624 = vmatmul.mubr.f32.gmra.mrb[0].mxu0 %v1557
      %v1625 = vpop.f32.mrb[0].mxu0
      %v1626 = vadd.f32 %v1552, %v1625
      %v1627 = vpop.f32.mrb[0].mxu0
      %v1628 = vadd.f32 %v1554, %v1627
      %1629 = vdwg.mxu0
      %1630 = vrot.lane.b32.xlu0 %v1133, 113
      %v1631 = vpop.permute.xlu0 %1630
      %1632 = vrot.lane.b32.xlu0 %v1134, 113
      %v1633 = vpop.permute.xlu0 %1632
      %v1634 = vsel %vm825, %v1631, %v1633
      %v1635 = vsel %vm825, %v1633, %v1631
      %v1636 = vmul.f32 %v1634, %v834
      %v1637 = vmul.f32 %v1635, %v838
      %s1638 = scalar_lea.vmem %s4, 6
      %v1639 = vld [vmem:[%s1638] sm:$0x1]
      %v1641 = vsel %vm350, %v1639, 0
      %1643 = vmatprep.subr.mxu0 %v1637
      %1644 = vmatpush1.msra.mxu0 %v1636
      %1645 = vmatprep.subr.mxu0 0.0
      %1646 = vmatpush1.msra.mxu0 0.0
      %1647 = vmatprep.subr.mxu0 0.0
      %1648 = vmatpush1.msra.mxu0 0.0
      %1649 = vmatprep.subr.mxu0 0.0
      %1650 = vmatpush1.msra.mxu0 0.0
      %1651 = vmatprep.subr.mxu0 0.0
      %1652 = vmatpush1.msra.mxu0 0.0
      %1653 = vmatprep.subr.mxu0 0.0
      %1654 = vmatpush1.msra.mxu0 0.0
      %1655 = vmatprep.subr.mxu0 0.0
      %1656 = vmatpush1.msra.mxu0 0.0
      %1657 = vmatprep.subr.mxu0 0.0
      %1658 = vmatpush1.msra.mxu0 0.0
      %1659 = vmatprep.subr.mxu0 0.0
      %1660 = vmatpush1.msra.mxu0 0.0
      %1661 = vmatprep.subr.mxu0 0.0
      %1662 = vmatpush1.msra.mxu0 0.0
      %1663 = vmatprep.subr.mxu0 0.0
      %1664 = vmatpush1.msra.mxu0 0.0
      %1665 = vmatprep.subr.mxu0 0.0
      %1666 = vmatpush1.msra.mxu0 0.0
      %1667 = vmatprep.subr.mxu0 0.0
      %1668 = vmatpush1.msra.mxu0 0.0
      %1669 = vmatprep.subr.mxu0 0.0
      %1670 = vmatpush1.msra.mxu0 0.0
      %1671 = vmatprep.subr.mxu0 0.0
      %1672 = vmatpush1.msra.mxu0 0.0
      %1673 = vmatprep.subr.mxu0 0.0
      %1674 = vmatpush1.msra.mxu0 0.0
      %1675 = vmatprep.subr.mxu0 0.0
      %1676 = vmatpush1.msra.mxu0 0.0
      %1677 = vmatprep.subr.mxu0 0.0
      %1678 = vmatpush1.msra.mxu0 0.0
      %1679 = vmatprep.subr.mxu0 0.0
      %1680 = vmatpush1.msra.mxu0 0.0
      %1681 = vmatprep.subr.mxu0 0.0
      %1682 = vmatpush1.msra.mxu0 0.0
      %1683 = vmatprep.subr.mxu0 0.0
      %1684 = vmatpush1.msra.mxu0 0.0
      %1685 = vmatprep.subr.mxu0 0.0
      %1686 = vmatpush1.msra.mxu0 0.0
      %1687 = vmatprep.subr.mxu0 0.0
      %1688 = vmatpush1.msra.mxu0 0.0
      %1689 = vmatprep.subr.mxu0 0.0
      %1690 = vmatpush1.msra.mxu0 0.0
      %1691 = vmatprep.subr.mxu0 0.0
      %1692 = vmatpush1.msra.mxu0 0.0
      %1693 = vmatprep.subr.mxu0 0.0
      %1694 = vmatpush1.msra.mxu0 0.0
      %1695 = vmatprep.subr.mxu0 0.0
      %1696 = vmatpush1.msra.mxu0 0.0
      %1697 = vmatprep.subr.mxu0 0.0
      %1698 = vmatpush1.msra.mxu0 0.0
      %1699 = vmatprep.subr.mxu0 0.0
      %1700 = vmatpush1.msra.mxu0 0.0
      %1701 = vmatprep.subr.mxu0 0.0
      %1702 = vmatpush1.msra.mxu0 0.0
      %1703 = vmatprep.subr.mxu0 0.0
      %1704 = vmatpush1.msra.mxu0 0.0
      %1705 = vmatprep.subr.mxu0 0.0
      %1706 = vmatpush1.msra.mxu0 0.0
      %1707 = vmatprep.mubr.f32.mxu0 0.0
      %1708 = vmatmul.mubr.f32.gmra.mrb[0].mxu0 %v1641
      %v1709 = vpop.f32.mrb[0].mxu0
      %v1710 = vadd.f32 0.0, %v1709
      %v1711 = vpop.f32.mrb[0].mxu0
      %v1712 = vadd.f32 0.0, %v1711
      %1713 = vdwg.mxu0
      %v1714 = vadd.f32 %v1318, %v1710
      %v1715 = vadd.f32 %v1320, %v1712
      %1716 = vrot.lane.b32.xlu0 %v1133, 112
      %v1717 = vpop.permute.xlu0 %1716
      %1718 = vrot.lane.b32.xlu0 %v1134, 112
      %v1719 = vpop.permute.xlu0 %1718
      %v1720 = vsel %vm925, %v1717, %v1719
      %v1721 = vsel %vm925, %v1719, %v1717
      %v1722 = vmul.f32 %v1720, %v934
      %v1723 = vmul.f32 %v1721, %v938
      %s1724 = scalar_lea.vmem %s4, 7
      %v1725 = vld [vmem:[%s1724] sm:$0x1]
      %v1727 = vsel %vm350, %v1725, 0
      %1729 = vmatprep.subr.mxu0 %v1723
      %1730 = vmatpush1.msra.mxu0 %v1722
      %1731 = vmatprep.subr.mxu0 0.0
      %1732 = vmatpush1.msra.mxu0 0.0
      %1733 = vmatprep.subr.mxu0 0.0
      %1734 = vmatpush1.msra.mxu0 0.0
      %1735 = vmatprep.subr.mxu0 0.0
      %1736 = vmatpush1.msra.mxu0 0.0
      %1737 = vmatprep.subr.mxu0 0.0
      %1738 = vmatpush1.msra.mxu0 0.0
      %1739 = vmatprep.subr.mxu0 0.0
      %1740 = vmatpush1.msra.mxu0 0.0
      %1741 = vmatprep.subr.mxu0 0.0
      %1742 = vmatpush1.msra.mxu0 0.0
      %1743 = vmatprep.subr.mxu0 0.0
      %1744 = vmatpush1.msra.mxu0 0.0
      %1745 = vmatprep.subr.mxu0 0.0
      %1746 = vmatpush1.msra.mxu0 0.0
      %1747 = vmatprep.subr.mxu0 0.0
      %1748 = vmatpush1.msra.mxu0 0.0
      %1749 = vmatprep.subr.mxu0 0.0
      %1750 = vmatpush1.msra.mxu0 0.0
      %1751 = vmatprep.subr.mxu0 0.0
      %1752 = vmatpush1.msra.mxu0 0.0
      %1753 = vmatprep.subr.mxu0 0.0
      %1754 = vmatpush1.msra.mxu0 0.0
      %1755 = vmatprep.subr.mxu0 0.0
      %1756 = vmatpush1.msra.mxu0 0.0
      %1757 = vmatprep.subr.mxu0 0.0
      %1758 = vmatpush1.msra.mxu0 0.0
      %1759 = vmatprep.subr.mxu0 0.0
      %1760 = vmatpush1.msra.mxu0 0.0
      %1761 = vmatprep.subr.mxu0 0.0
      %1762 = vmatpush1.msra.mxu0 0.0
      %1763 = vmatprep.subr.mxu0 0.0
      %1764 = vmatpush1.msra.mxu0 0.0
      %1765 = vmatprep.subr.mxu0 0.0
      %1766 = vmatpush1.msra.mxu0 0.0
      %1767 = vmatprep.subr.mxu0 0.0
      %1768 = vmatpush1.msra.mxu0 0.0
      %1769 = vmatprep.subr.mxu0 0.0
      %1770 = vmatpush1.msra.mxu0 0.0
      %1771 = vmatprep.subr.mxu0 0.0
      %1772 = vmatpush1.msra.mxu0 0.0
      %1773 = vmatprep.subr.mxu0 0.0
      %1774 = vmatpush1.msra.mxu0 0.0
      %1775 = vmatprep.subr.mxu0 0.0
      %1776 = vmatpush1.msra.mxu0 0.0
      %1777 = vmatprep.subr.mxu0 0.0
      %1778 = vmatpush1.msra.mxu0 0.0
      %1779 = vmatprep.subr.mxu0 0.0
      %1780 = vmatpush1.msra.mxu0 0.0
      %1781 = vmatprep.subr.mxu0 0.0
      %1782 = vmatpush1.msra.mxu0 0.0
      %1783 = vmatprep.subr.mxu0 0.0
      %1784 = vmatpush1.msra.mxu0 0.0
      %1785 = vmatprep.subr.mxu0 0.0
      %1786 = vmatpush1.msra.mxu0 0.0
      %1787 = vmatprep.subr.mxu0 0.0
      %1788 = vmatpush1.msra.mxu0 0.0
      %1789 = vmatprep.subr.mxu0 0.0
      %1790 = vmatpush1.msra.mxu0 0.0
      %1791 = vmatprep.subr.mxu0 0.0
      %1792 = vmatpush1.msra.mxu0 0.0
      %1793 = vmatprep.mubr.f32.mxu0 0.0
      %1794 = vmatmul.mubr.f32.gmra.mrb[0].mxu0 %v1727
      %v1795 = vpop.f32.mrb[0].mxu0
      %v1796 = vadd.f32 0.0, %v1795
      %v1797 = vpop.f32.mrb[0].mxu0
      %v1798 = vadd.f32 0.0, %v1797
      %1799 = vdwg.mxu0
      %v1800 = vadd.f32 %v1468, %v1796
      %v1801 = vadd.f32 %v1470, %v1798
      %1802 = vrot.lane.b32.xlu0 %v1133, 111
      %v1803 = vpop.permute.xlu0 %1802
      %1804 = vrot.lane.b32.xlu0 %v1134, 111
      %v1805 = vpop.permute.xlu0 %1804
      %v1806 = vsel %vm1025, %v1803, %v1805
      %v1807 = vsel %vm1025, %v1805, %v1803
      %v1808 = vmul.f32 %v1806, %v1034
      %v1809 = vmul.f32 %v1807, %v1038
      %s1810 = scalar_lea.vmem %s4, 8
      %v1811 = vld [vmem:[%s1810] sm:$0x1]
      %v1813 = vsel %vm350, %v1811, 0
      %1815 = vmatprep.subr.mxu0 %v1809
      %1816 = vmatpush1.msra.mxu0 %v1808
      %1817 = vmatprep.subr.mxu0 0.0
      %1818 = vmatpush1.msra.mxu0 0.0
      %1819 = vmatprep.subr.mxu0 0.0
      %1820 = vmatpush1.msra.mxu0 0.0
      %1821 = vmatprep.subr.mxu0 0.0
      %1822 = vmatpush1.msra.mxu0 0.0
      %1823 = vmatprep.subr.mxu0 0.0
      %1824 = vmatpush1.msra.mxu0 0.0
      %1825 = vmatprep.subr.mxu0 0.0
      %1826 = vmatpush1.msra.mxu0 0.0
      %1827 = vmatprep.subr.mxu0 0.0
      %1828 = vmatpush1.msra.mxu0 0.0
      %1829 = vmatprep.subr.mxu0 0.0
      %1830 = vmatpush1.msra.mxu0 0.0
      %1831 = vmatprep.subr.mxu0 0.0
      %1832 = vmatpush1.msra.mxu0 0.0
      %1833 = vmatprep.subr.mxu0 0.0
      %1834 = vmatpush1.msra.mxu0 0.0
      %1835 = vmatprep.subr.mxu0 0.0
      %1836 = vmatpush1.msra.mxu0 0.0
      %1837 = vmatprep.subr.mxu0 0.0
      %1838 = vmatpush1.msra.mxu0 0.0
      %1839 = vmatprep.subr.mxu0 0.0
      %1840 = vmatpush1.msra.mxu0 0.0
      %1841 = vmatprep.subr.mxu0 0.0
      %1842 = vmatpush1.msra.mxu0 0.0
      %1843 = vmatprep.subr.mxu0 0.0
      %1844 = vmatpush1.msra.mxu0 0.0
      %1845 = vmatprep.subr.mxu0 0.0
      %1846 = vmatpush1.msra.mxu0 0.0
      %1847 = vmatprep.subr.mxu0 0.0
      %1848 = vmatpush1.msra.mxu0 0.0
      %1849 = vmatprep.subr.mxu0 0.0
      %1850 = vmatpush1.msra.mxu0 0.0
      %1851 = vmatprep.subr.mxu0 0.0
      %1852 = vmatpush1.msra.mxu0 0.0
      %1853 = vmatprep.subr.mxu0 0.0
      %1854 = vmatpush1.msra.mxu0 0.0
      %1855 = vmatprep.subr.mxu0 0.0
      %1856 = vmatpush1.msra.mxu0 0.0
      %1857 = vmatprep.subr.mxu0 0.0
      %1858 = vmatpush1.msra.mxu0 0.0
      %1859 = vmatprep.subr.mxu0 0.0
      %1860 = vmatpush1.msra.mxu0 0.0
      %1861 = vmatprep.subr.mxu0 0.0
      %1862 = vmatpush1.msra.mxu0 0.0
      %1863 = vmatprep.subr.mxu0 0.0
      %1864 = vmatpush1.msra.mxu0 0.0
      %1865 = vmatprep.subr.mxu0 0.0
      %1866 = vmatpush1.msra.mxu0 0.0
      %1867 = vmatprep.subr.mxu0 0.0
      %1868 = vmatpush1.msra.mxu0 0.0
      %1869 = vmatprep.subr.mxu0 0.0
      %1870 = vmatpush1.msra.mxu0 0.0
      %1871 = vmatprep.subr.mxu0 0.0
      %1872 = vmatpush1.msra.mxu0 0.0
      %1873 = vmatprep.subr.mxu0 0.0
      %1874 = vmatpush1.msra.mxu0 0.0
      %1875 = vmatprep.subr.mxu0 0.0
      %1876 = vmatpush1.msra.mxu0 0.0
      %1877 = vmatprep.subr.mxu0 0.0
      %1878 = vmatpush1.msra.mxu0 0.0
      %1879 = vmatprep.mubr.f32.mxu0 0.0
      %1880 = vmatmul.mubr.f32.gmra.mrb[0].mxu0 %v1813
      %v1881 = vpop.f32.mrb[0].mxu0
      %v1882 = vadd.f32 0.0, %v1881
      %v1883 = vpop.f32.mrb[0].mxu0
      %v1884 = vadd.f32 0.0, %v1883
      %1885 = vdwg.mxu0
      %v1886 = vadd.f32 %v1626, %v1882
      %v1887 = vadd.f32 %v1628, %v1884
      %v1888 = vadd.f32 %v1714, %v1800
      %v1889 = vadd.f32 %v1715, %v1801
      %v1890 = vld [vmem:[%s5] sm:$0x1]
      %1892 = vset.pattern.permute.xlu0 0
      %1893 = vperm.xlu0 %1892, %v1890
      %v1894 = vpop.permute.xlu0 %1893
      %v1896 = vlaneseq
      %v1897 = vshrl.u32 %v1896, 7
      %v1898 = vsub.s32 0, %v1897
      %v1899 = vrot.slane %v1894, %v1898
      %v1900 = vadd.f32 %v1886, %v1899
      %v1901 = vadd.f32 %v1887, %v1899
      %v1902 = vadd.f32 %v1888, %v1900
      %v1903 = vadd.f32 %v1889, %v1901
      %vm1904 = vcmp.gt.f32.partialorder %v1902, 0.0
      %vm1905 = vcmp.gt.f32.partialorder %v1903, 0.0
      %v1906 = vsel %vm1904, 1, 0
      %v1907 = vsel %vm1905, 1, 0
      %v1908 = vcvt.s32.f32 %v1906
      %v1909 = vcvt.s32.f32 %v1907
      %v1910 = vlaneseq
      %v1911 = vshrl.u32 %v1910, 7
      %v1912 = vsub.s32 0, %v1911
      %v1913 = vrot.slane %v1908, %v1912
      %v1914 = vlaneseq
      %v1915 = vshrl.u32 %v1914, 7
      %v1916 = vsub.s32 0, %v1915
      %v1917 = vrot.slane %v1909, %v1916
      %v1918 = vmul.f32 %v252, %v1913
      %v1919 = vmul.f32 %v253, %v1917
      %1920 = vrot.lane.b32.xlu0 %v1918, 17
      %v1921 = vpop.permute.xlu0 %1920
      %1922 = vrot.lane.b32.xlu0 %v1919, 17
      %v1923 = vpop.permute.xlu0 %1922
      %v1924 = vsel %vm260, %v1921, %v1923
      %v1925 = vsel %vm260, %v1923, %v1921
      %v1926 = vmul.f32 %v1925, %v268
      %v1927 = vmul.f32 %v1924, %v272
      %s1928 = scalar_lea.vmem %s2, 72
      %v1929 = vld [vmem:[%s1928] sm:$0xff]
      %1930 = vrot.lane.b32.xlu0 %v1918, 16
      %v1931 = vpop.permute.xlu0 %1930
      %1932 = vrot.lane.b32.xlu0 %v1919, 16
      %v1933 = vpop.permute.xlu0 %1932
      %v1934 = vsel %vm282, %v1931, %v1933
      %v1935 = vsel %vm282, %v1933, %v1931
      %v1936 = vmul.f32 %v1935, %v291
      %v1937 = vmul.f32 %v1934, %v295
      %s1938 = scalar_lea.vmem %s2, 80
      %v1939 = vld [vmem:[%s1938] sm:$0xff]
      %1940 = vrot.lane.b32.xlu0 %v1918, 15
      %v1941 = vpop.permute.xlu0 %1940
      %1942 = vrot.lane.b32.xlu0 %v1919, 15
      %v1943 = vpop.permute.xlu0 %1942
      %v1944 = vsel %vm306, %v1941, %v1943
      %v1945 = vsel %vm306, %v1943, %v1941
      %v1946 = vmul.f32 %v1945, %v315
      %v1947 = vmul.f32 %v1944, %v319
      %s1948 = scalar_lea.vmem %s2, 88
      %v1949 = vld [vmem:[%s1948] sm:$0xff]
      %1950 = vrot.lane.b32.xlu0 %v1918, 1
      %v1951 = vpop.permute.xlu0 %1950
      %1952 = vrot.lane.b32.xlu0 %v1919, 1
      %v1953 = vpop.permute.xlu0 %1952
      %v1954 = vsel %vm330, %v1951, %v1953
      %v1955 = vsel %vm330, %v1953, %v1951
      %v1956 = vmul.f32 %v1955, %v339
      %v1957 = vmul.f32 %v1954, %v343
      %s1958 = scalar_lea.vmem %s2, 96
      %v1959 = vld [vmem:[%s1958] sm:$0xff]
      %v1961 = vsel %vm350, %v1959, 0
      %1963 = vmatprep.subr.mxu0 %v1957
      %1964 = vmatpush1.msra.mxu0 %v1956
      %1965 = vmatprep.subr.mxu0 0.0
      %1966 = vmatpush1.msra.mxu0 0.0
      %1967 = vmatprep.subr.mxu0 0.0
      %1968 = vmatpush1.msra.mxu0 0.0
      %1969 = vmatprep.subr.mxu0 0.0
      %1970 = vmatpush1.msra.mxu0 0.0
      %1971 = vmatprep.subr.mxu0 0.0
      %1972 = vmatpush1.msra.mxu0 0.0
      %1973 = vmatprep.subr.mxu0 0.0
      %1974 = vmatpush1.msra.mxu0 0.0
      %1975 = vmatprep.subr.mxu0 0.0
      %1976 = vmatpush1.msra.mxu0 0.0
      %1977 = vmatprep.subr.mxu0 0.0
      %1978 = vmatpush1.msra.mxu0 0.0
      %1979 = vmatprep.subr.mxu0 0.0
      %1980 = vmatpush1.msra.mxu0 0.0
      %1981 = vmatprep.subr.mxu0 0.0
      %1982 = vmatpush1.msra.mxu0 0.0
      %1983 = vmatprep.subr.mxu0 0.0
      %1984 = vmatpush1.msra.mxu0 0.0
      %1985 = vmatprep.subr.mxu0 0.0
      %1986 = vmatpush1.msra.mxu0 0.0
      %1987 = vmatprep.subr.mxu0 0.0
      %1988 = vmatpush1.msra.mxu0 0.0
      %1989 = vmatprep.subr.mxu0 0.0
      %1990 = vmatpush1.msra.mxu0 0.0
      %1991 = vmatprep.subr.mxu0 0.0
      %1992 = vmatpush1.msra.mxu0 0.0
      %1993 = vmatprep.subr.mxu0 0.0
      %1994 = vmatpush1.msra.mxu0 0.0
      %1995 = vmatprep.subr.mxu0 0.0
      %1996 = vmatpush1.msra.mxu0 0.0
      %1997 = vmatprep.subr.mxu0 0.0
      %1998 = vmatpush1.msra.mxu0 0.0
      %1999 = vmatprep.subr.mxu0 0.0
      %2000 = vmatpush1.msra.mxu0 0.0
      %2001 = vmatprep.subr.mxu0 0.0
      %2002 = vmatpush1.msra.mxu0 0.0
      %2003 = vmatprep.subr.mxu0 0.0
      %2004 = vmatpush1.msra.mxu0 0.0
      %2005 = vmatprep.subr.mxu0 0.0
      %2006 = vmatpush1.msra.mxu0 0.0
      %2007 = vmatprep.subr.mxu0 0.0
      %2008 = vmatpush1.msra.mxu0 0.0
      %2009 = vmatprep.subr.mxu0 0.0
      %2010 = vmatpush1.msra.mxu0 0.0
      %2011 = vmatprep.subr.mxu0 0.0
      %2012 = vmatpush1.msra.mxu0 0.0
      %2013 = vmatprep.subr.mxu0 0.0
      %2014 = vmatpush1.msra.mxu0 0.0
      %2015 = vmatprep.subr.mxu0 0.0
      %2016 = vmatpush1.msra.mxu0 0.0
      %2017 = vmatprep.subr.mxu0 0.0
      %2018 = vmatpush1.msra.mxu0 0.0
      %2019 = vmatprep.subr.mxu0 0.0
      %2020 = vmatpush1.msra.mxu0 0.0
      %2021 = vmatprep.subr.mxu0 0.0
      %2022 = vmatpush1.msra.mxu0 0.0
      %2023 = vmatprep.subr.mxu0 0.0
      %2024 = vmatpush1.msra.mxu0 0.0
      %2025 = vmatprep.subr.mxu0 0.0
      %2026 = vmatpush1.msra.mxu0 0.0
      %2027 = vmatprep.mubr.f32.mxu0 0.0
      %2028 = vmatmul.mubr.f32.gmra.mrb[0].mxu0 %v1961
      %v2029 = vpop.f32.mrb[0].mxu0
      %v2030 = vadd.f32 0.0, %v2029
      %v2031 = vpop.f32.mrb[0].mxu0
      %v2032 = vadd.f32 0.0, %v2031
      %2033 = vdwg.mxu0
      %v2035 = vsel %vm350, %v1929, 0
      %2037 = vmatprep.subr.mxu0 %v1927
      %2038 = vmatpush1.msra.mxu0 %v1926
      %2039 = vmatprep.subr.mxu0 0.0
      %2040 = vmatpush1.msra.mxu0 0.0
      %2041 = vmatprep.subr.mxu0 0.0
      %2042 = vmatpush1.msra.mxu0 0.0
      %2043 = vmatprep.subr.mxu0 0.0
      %2044 = vmatpush1.msra.mxu0 0.0
      %2045 = vmatprep.subr.mxu0 0.0
      %2046 = vmatpush1.msra.mxu0 0.0
      %2047 = vmatprep.subr.mxu0 0.0
      %2048 = vmatpush1.msra.mxu0 0.0
      %2049 = vmatprep.subr.mxu0 0.0
      %2050 = vmatpush1.msra.mxu0 0.0
      %2051 = vmatprep.subr.mxu0 0.0
      %2052 = vmatpush1.msra.mxu0 0.0
      %2053 = vmatprep.subr.mxu0 0.0
      %2054 = vmatpush1.msra.mxu0 0.0
      %2055 = vmatprep.subr.mxu0 0.0
      %2056 = vmatpush1.msra.mxu0 0.0
      %2057 = vmatprep.subr.mxu0 0.0
      %2058 = vmatpush1.msra.mxu0 0.0
      %2059 = vmatprep.subr.mxu0 0.0
      %2060 = vmatpush1.msra.mxu0 0.0
      %2061 = vmatprep.subr.mxu0 0.0
      %2062 = vmatpush1.msra.mxu0 0.0
      %2063 = vmatprep.subr.mxu0 0.0
      %2064 = vmatpush1.msra.mxu0 0.0
      %2065 = vmatprep.subr.mxu0 0.0
      %2066 = vmatpush1.msra.mxu0 0.0
      %2067 = vmatprep.subr.mxu0 0.0
      %2068 = vmatpush1.msra.mxu0 0.0
      %2069 = vmatprep.subr.mxu0 0.0
      %2070 = vmatpush1.msra.mxu0 0.0
      %2071 = vmatprep.subr.mxu0 0.0
      %2072 = vmatpush1.msra.mxu0 0.0
      %2073 = vmatprep.subr.mxu0 0.0
      %2074 = vmatpush1.msra.mxu0 0.0
      %2075 = vmatprep.subr.mxu0 0.0
      %2076 = vmatpush1.msra.mxu0 0.0
      %2077 = vmatprep.subr.mxu0 0.0
      %2078 = vmatpush1.msra.mxu0 0.0
      %2079 = vmatprep.subr.mxu0 0.0
      %2080 = vmatpush1.msra.mxu0 0.0
      %2081 = vmatprep.subr.mxu0 0.0
      %2082 = vmatpush1.msra.mxu0 0.0
      %2083 = vmatprep.subr.mxu0 0.0
      %2084 = vmatpush1.msra.mxu0 0.0
      %2085 = vmatprep.subr.mxu0 0.0
      %2086 = vmatpush1.msra.mxu0 0.0
      %2087 = vmatprep.subr.mxu0 0.0
      %2088 = vmatpush1.msra.mxu0 0.0
      %2089 = vmatprep.subr.mxu0 0.0
      %2090 = vmatpush1.msra.mxu0 0.0
      %2091 = vmatprep.subr.mxu0 0.0
      %2092 = vmatpush1.msra.mxu0 0.0
      %2093 = vmatprep.subr.mxu0 0.0
      %2094 = vmatpush1.msra.mxu0 0.0
      %2095 = vmatprep.subr.mxu0 0.0
      %2096 = vmatpush1.msra.mxu0 0.0
      %2097 = vmatprep.subr.mxu0 0.0
      %2098 = vmatpush1.msra.mxu0 0.0
      %2099 = vmatprep.subr.mxu0 0.0
      %2100 = vmatpush1.msra.mxu0 0.0
      %2101 = vmatprep.mubr.f32.mxu0 0.0
      %2102 = vmatmul.mubr.f32.gmra.mrb[0].mxu0 %v2035
      %v2103 = vpop.f32.mrb[0].mxu0
      %v2104 = vadd.f32 %v2030, %v2103
      %v2105 = vpop.f32.mrb[0].mxu0
      %v2106 = vadd.f32 %v2032, %v2105
      %2107 = vdwg.mxu0
      %s2108 = scalar_lea.vmem %s2, 104
      %v2109 = vld [vmem:[%s2108] sm:$0xff]
      %v2111 = vsel %vm350, %v2109, 0
      %2113 = vmatprep.subr.mxu0 %v1919
      %2114 = vmatpush1.msra.mxu0 %v1918
      %2115 = vmatprep.subr.mxu0 0.0
      %2116 = vmatpush1.msra.mxu0 0.0
      %2117 = vmatprep.subr.mxu0 0.0
      %2118 = vmatpush1.msra.mxu0 0.0
      %2119 = vmatprep.subr.mxu0 0.0
      %2120 = vmatpush1.msra.mxu0 0.0
      %2121 = vmatprep.subr.mxu0 0.0
      %2122 = vmatpush1.msra.mxu0 0.0
      %2123 = vmatprep.subr.mxu0 0.0
      %2124 = vmatpush1.msra.mxu0 0.0
      %2125 = vmatprep.subr.mxu0 0.0
      %2126 = vmatpush1.msra.mxu0 0.0
      %2127 = vmatprep.subr.mxu0 0.0
      %2128 = vmatpush1.msra.mxu0 0.0
      %2129 = vmatprep.subr.mxu0 0.0
      %2130 = vmatpush1.msra.mxu0 0.0
      %2131 = vmatprep.subr.mxu0 0.0
      %2132 = vmatpush1.msra.mxu0 0.0
      %2133 = vmatprep.subr.mxu0 0.0
      %2134 = vmatpush1.msra.mxu0 0.0
      %2135 = vmatprep.subr.mxu0 0.0
      %2136 = vmatpush1.msra.mxu0 0.0
      %2137 = vmatprep.subr.mxu0 0.0
      %2138 = vmatpush1.msra.mxu0 0.0
      %2139 = vmatprep.subr.mxu0 0.0
      %2140 = vmatpush1.msra.mxu0 0.0
      %2141 = vmatprep.subr.mxu0 0.0
      %2142 = vmatpush1.msra.mxu0 0.0
      %2143 = vmatprep.subr.mxu0 0.0
      %2144 = vmatpush1.msra.mxu0 0.0
      %2145 = vmatprep.subr.mxu0 0.0
      %2146 = vmatpush1.msra.mxu0 0.0
      %2147 = vmatprep.subr.mxu0 0.0
      %2148 = vmatpush1.msra.mxu0 0.0
      %2149 = vmatprep.subr.mxu0 0.0
      %2150 = vmatpush1.msra.mxu0 0.0
      %2151 = vmatprep.subr.mxu0 0.0
      %2152 = vmatpush1.msra.mxu0 0.0
      %2153 = vmatprep.subr.mxu0 0.0
      %2154 = vmatpush1.msra.mxu0 0.0
      %2155 = vmatprep.subr.mxu0 0.0
      %2156 = vmatpush1.msra.mxu0 0.0
      %2157 = vmatprep.subr.mxu0 0.0
      %2158 = vmatpush1.msra.mxu0 0.0
      %2159 = vmatprep.subr.mxu0 0.0
      %2160 = vmatpush1.msra.mxu0 0.0
      %2161 = vmatprep.subr.mxu0 0.0
      %2162 = vmatpush1.msra.mxu0 0.0
      %2163 = vmatprep.subr.mxu0 0.0
      %2164 = vmatpush1.msra.mxu0 0.0
      %2165 = vmatprep.subr.mxu0 0.0
      %2166 = vmatpush1.msra.mxu0 0.0
      %2167 = vmatprep.subr.mxu0 0.0
      %2168 = vmatpush1.msra.mxu0 0.0
      %2169 = vmatprep.subr.mxu0 0.0
      %2170 = vmatpush1.msra.mxu0 0.0
      %2171 = vmatprep.subr.mxu0 0.0
      %2172 = vmatpush1.msra.mxu0 0.0
      %2173 = vmatprep.subr.mxu0 0.0
      %2174 = vmatpush1.msra.mxu0 0.0
      %2175 = vmatprep.subr.mxu0 0.0
      %2176 = vmatpush1.msra.mxu0 0.0
      %2177 = vmatprep.mubr.f32.mxu0 0.0
      %2178 = vmatmul.mubr.f32.gmra.mrb[0].mxu0 %v2111
      %v2179 = vpop.f32.mrb[0].mxu0
      %v2180 = vadd.f32 0.0, %v2179
      %v2181 = vpop.f32.mrb[0].mxu0
      %v2182 = vadd.f32 0.0, %v2181
      %2183 = vdwg.mxu0
      %v2185 = vsel %vm350, %v1939, 0
      %2187 = vmatprep.subr.mxu0 %v1937
      %2188 = vmatpush1.msra.mxu0 %v1936
      %2189 = vmatprep.subr.mxu0 0.0
      %2190 = vmatpush1.msra.mxu0 0.0
      %2191 = vmatprep.subr.mxu0 0.0
      %2192 = vmatpush1.msra.mxu0 0.0
      %2193 = vmatprep.subr.mxu0 0.0
      %2194 = vmatpush1.msra.mxu0 0.0
      %2195 = vmatprep.subr.mxu0 0.0
      %2196 = vmatpush1.msra.mxu0 0.0
      %2197 = vmatprep.subr.mxu0 0.0
      %2198 = vmatpush1.msra.mxu0 0.0
      %2199 = vmatprep.subr.mxu0 0.0
      %2200 = vmatpush1.msra.mxu0 0.0
      %2201 = vmatprep.subr.mxu0 0.0
      %2202 = vmatpush1.msra.mxu0 0.0
      %2203 = vmatprep.subr.mxu0 0.0
      %2204 = vmatpush1.msra.mxu0 0.0
      %2205 = vmatprep.subr.mxu0 0.0
      %2206 = vmatpush1.msra.mxu0 0.0
      %2207 = vmatprep.subr.mxu0 0.0
      %2208 = vmatpush1.msra.mxu0 0.0
      %2209 = vmatprep.subr.mxu0 0.0
      %2210 = vmatpush1.msra.mxu0 0.0
      %2211 = vmatprep.subr.mxu0 0.0
      %2212 = vmatpush1.msra.mxu0 0.0
      %2213 = vmatprep.subr.mxu0 0.0
      %2214 = vmatpush1.msra.mxu0 0.0
      %2215 = vmatprep.subr.mxu0 0.0
      %2216 = vmatpush1.msra.mxu0 0.0
      %2217 = vmatprep.subr.mxu0 0.0
      %2218 = vmatpush1.msra.mxu0 0.0
      %2219 = vmatprep.subr.mxu0 0.0
      %2220 = vmatpush1.msra.mxu0 0.0
      %2221 = vmatprep.subr.mxu0 0.0
      %2222 = vmatpush1.msra.mxu0 0.0
      %2223 = vmatprep.subr.mxu0 0.0
      %2224 = vmatpush1.msra.mxu0 0.0
      %2225 = vmatprep.subr.mxu0 0.0
      %2226 = vmatpush1.msra.mxu0 0.0
      %2227 = vmatprep.subr.mxu0 0.0
      %2228 = vmatpush1.msra.mxu0 0.0
      %2229 = vmatprep.subr.mxu0 0.0
      %2230 = vmatpush1.msra.mxu0 0.0
      %2231 = vmatprep.subr.mxu0 0.0
      %2232 = vmatpush1.msra.mxu0 0.0
      %2233 = vmatprep.subr.mxu0 0.0
      %2234 = vmatpush1.msra.mxu0 0.0
      %2235 = vmatprep.subr.mxu0 0.0
      %2236 = vmatpush1.msra.mxu0 0.0
      %2237 = vmatprep.subr.mxu0 0.0
      %2238 = vmatpush1.msra.mxu0 0.0
      %2239 = vmatprep.subr.mxu0 0.0
      %2240 = vmatpush1.msra.mxu0 0.0
      %2241 = vmatprep.subr.mxu0 0.0
      %2242 = vmatpush1.msra.mxu0 0.0
      %2243 = vmatprep.subr.mxu0 0.0
      %2244 = vmatpush1.msra.mxu0 0.0
      %2245 = vmatprep.subr.mxu0 0.0
      %2246 = vmatpush1.msra.mxu0 0.0
      %2247 = vmatprep.subr.mxu0 0.0
      %2248 = vmatpush1.msra.mxu0 0.0
      %2249 = vmatprep.subr.mxu0 0.0
      %2250 = vmatpush1.msra.mxu0 0.0
      %2251 = vmatprep.mubr.f32.mxu0 0.0
      %2252 = vmatmul.mubr.f32.gmra.mrb[0].mxu0 %v2185
      %v2253 = vpop.f32.mrb[0].mxu0
      %v2254 = vadd.f32 %v2180, %v2253
      %v2255 = vpop.f32.mrb[0].mxu0
      %v2256 = vadd.f32 %v2182, %v2255
      %2257 = vdwg.mxu0
      %2258 = vrot.lane.b32.xlu0 %v1918, 127
      %v2259 = vpop.permute.xlu0 %2258
      %2260 = vrot.lane.b32.xlu0 %v1919, 127
      %v2261 = vpop.permute.xlu0 %2260
      %v2262 = vsel %vm653, %v2259, %v2261
      %v2263 = vsel %vm653, %v2261, %v2259
      %v2264 = vmul.f32 %v2262, %v662
      %v2265 = vmul.f32 %v2263, %v666
      %s2266 = scalar_lea.vmem %s2, 112
      %v2267 = vld [vmem:[%s2266] sm:$0xff]
      %v2269 = vsel %vm350, %v2267, 0
      %2271 = vmatprep.subr.mxu0 %v2265
      %2272 = vmatpush1.msra.mxu0 %v2264
      %2273 = vmatprep.subr.mxu0 0.0
      %2274 = vmatpush1.msra.mxu0 0.0
      %2275 = vmatprep.subr.mxu0 0.0
      %2276 = vmatpush1.msra.mxu0 0.0
      %2277 = vmatprep.subr.mxu0 0.0
      %2278 = vmatpush1.msra.mxu0 0.0
      %2279 = vmatprep.subr.mxu0 0.0
      %2280 = vmatpush1.msra.mxu0 0.0
      %2281 = vmatprep.subr.mxu0 0.0
      %2282 = vmatpush1.msra.mxu0 0.0
      %2283 = vmatprep.subr.mxu0 0.0
      %2284 = vmatpush1.msra.mxu0 0.0
      %2285 = vmatprep.subr.mxu0 0.0
      %2286 = vmatpush1.msra.mxu0 0.0
      %2287 = vmatprep.subr.mxu0 0.0
      %2288 = vmatpush1.msra.mxu0 0.0
      %2289 = vmatprep.subr.mxu0 0.0
      %2290 = vmatpush1.msra.mxu0 0.0
      %2291 = vmatprep.subr.mxu0 0.0
      %2292 = vmatpush1.msra.mxu0 0.0
      %2293 = vmatprep.subr.mxu0 0.0
      %2294 = vmatpush1.msra.mxu0 0.0
      %2295 = vmatprep.subr.mxu0 0.0
      %2296 = vmatpush1.msra.mxu0 0.0
      %2297 = vmatprep.subr.mxu0 0.0
      %2298 = vmatpush1.msra.mxu0 0.0
      %2299 = vmatprep.subr.mxu0 0.0
      %2300 = vmatpush1.msra.mxu0 0.0
      %2301 = vmatprep.subr.mxu0 0.0
      %2302 = vmatpush1.msra.mxu0 0.0
      %2303 = vmatprep.subr.mxu0 0.0
      %2304 = vmatpush1.msra.mxu0 0.0
      %2305 = vmatprep.subr.mxu0 0.0
      %2306 = vmatpush1.msra.mxu0 0.0
      %2307 = vmatprep.subr.mxu0 0.0
      %2308 = vmatpush1.msra.mxu0 0.0
      %2309 = vmatprep.subr.mxu0 0.0
      %2310 = vmatpush1.msra.mxu0 0.0
      %2311 = vmatprep.subr.mxu0 0.0
      %2312 = vmatpush1.msra.mxu0 0.0
      %2313 = vmatprep.subr.mxu0 0.0
      %2314 = vmatpush1.msra.mxu0 0.0
      %2315 = vmatprep.subr.mxu0 0.0
      %2316 = vmatpush1.msra.mxu0 0.0
      %2317 = vmatprep.subr.mxu0 0.0
      %2318 = vmatpush1.msra.mxu0 0.0
      %2319 = vmatprep.subr.mxu0 0.0
      %2320 = vmatpush1.msra.mxu0 0.0
      %2321 = vmatprep.subr.mxu0 0.0
      %2322 = vmatpush1.msra.mxu0 0.0
      %2323 = vmatprep.subr.mxu0 0.0
      %2324 = vmatpush1.msra.mxu0 0.0
      %2325 = vmatprep.subr.mxu0 0.0
      %2326 = vmatpush1.msra.mxu0 0.0
      %2327 = vmatprep.subr.mxu0 0.0
      %2328 = vmatpush1.msra.mxu0 0.0
      %2329 = vmatprep.subr.mxu0 0.0
      %2330 = vmatpush1.msra.mxu0 0.0
      %2331 = vmatprep.subr.mxu0 0.0
      %2332 = vmatpush1.msra.mxu0 0.0
      %2333 = vmatprep.subr.mxu0 0.0
      %2334 = vmatpush1.msra.mxu0 0.0
      %2335 = vmatprep.mubr.f32.mxu0 0.0
      %2336 = vmatmul.mubr.f32.gmra.mrb[0].mxu0 %v2269
      %v2337 = vpop.f32.mrb[0].mxu0
      %v2338 = vadd.f32 0.0, %v2337
      %v2339 = vpop.f32.mrb[0].mxu0
      %v2340 = vadd.f32 0.0, %v2339
      %2341 = vdwg.mxu0
      %v2343 = vsel %vm350, %v1949, 0
      %2345 = vmatprep.subr.mxu0 %v1947
      %2346 = vmatpush1.msra.mxu0 %v1946
      %2347 = vmatprep.subr.mxu0 0.0
      %2348 = vmatpush1.msra.mxu0 0.0
      %2349 = vmatprep.subr.mxu0 0.0
      %2350 = vmatpush1.msra.mxu0 0.0
      %2351 = vmatprep.subr.mxu0 0.0
      %2352 = vmatpush1.msra.mxu0 0.0
      %2353 = vmatprep.subr.mxu0 0.0
      %2354 = vmatpush1.msra.mxu0 0.0
      %2355 = vmatprep.subr.mxu0 0.0
      %2356 = vmatpush1.msra.mxu0 0.0
      %2357 = vmatprep.subr.mxu0 0.0
      %2358 = vmatpush1.msra.mxu0 0.0
      %2359 = vmatprep.subr.mxu0 0.0
      %2360 = vmatpush1.msra.mxu0 0.0
      %2361 = vmatprep.subr.mxu0 0.0
      %2362 = vmatpush1.msra.mxu0 0.0
      %2363 = vmatprep.subr.mxu0 0.0
      %2364 = vmatpush1.msra.mxu0 0.0
      %2365 = vmatprep.subr.mxu0 0.0
      %2366 = vmatpush1.msra.mxu0 0.0
      %2367 = vmatprep.subr.mxu0 0.0
      %2368 = vmatpush1.msra.mxu0 0.0
      %2369 = vmatprep.subr.mxu0 0.0
      %2370 = vmatpush1.msra.mxu0 0.0
      %2371 = vmatprep.subr.mxu0 0.0
      %2372 = vmatpush1.msra.mxu0 0.0
      %2373 = vmatprep.subr.mxu0 0.0
      %2374 = vmatpush1.msra.mxu0 0.0
      %2375 = vmatprep.subr.mxu0 0.0
      %2376 = vmatpush1.msra.mxu0 0.0
      %2377 = vmatprep.subr.mxu0 0.0
      %2378 = vmatpush1.msra.mxu0 0.0
      %2379 = vmatprep.subr.mxu0 0.0
      %2380 = vmatpush1.msra.mxu0 0.0
      %2381 = vmatprep.subr.mxu0 0.0
      %2382 = vmatpush1.msra.mxu0 0.0
      %2383 = vmatprep.subr.mxu0 0.0
      %2384 = vmatpush1.msra.mxu0 0.0
      %2385 = vmatprep.subr.mxu0 0.0
      %2386 = vmatpush1.msra.mxu0 0.0
      %2387 = vmatprep.subr.mxu0 0.0
      %2388 = vmatpush1.msra.mxu0 0.0
      %2389 = vmatprep.subr.mxu0 0.0
      %2390 = vmatpush1.msra.mxu0 0.0
      %2391 = vmatprep.subr.mxu0 0.0
      %2392 = vmatpush1.msra.mxu0 0.0
      %2393 = vmatprep.subr.mxu0 0.0
      %2394 = vmatpush1.msra.mxu0 0.0
      %2395 = vmatprep.subr.mxu0 0.0
      %2396 = vmatpush1.msra.mxu0 0.0
      %2397 = vmatprep.subr.mxu0 0.0
      %2398 = vmatpush1.msra.mxu0 0.0
      %2399 = vmatprep.subr.mxu0 0.0
      %2400 = vmatpush1.msra.mxu0 0.0
      %2401 = vmatprep.subr.mxu0 0.0
      %2402 = vmatpush1.msra.mxu0 0.0
      %2403 = vmatprep.subr.mxu0 0.0
      %2404 = vmatpush1.msra.mxu0 0.0
      %2405 = vmatprep.subr.mxu0 0.0
      %2406 = vmatpush1.msra.mxu0 0.0
      %2407 = vmatprep.subr.mxu0 0.0
      %2408 = vmatpush1.msra.mxu0 0.0
      %2409 = vmatprep.mubr.f32.mxu0 0.0
      %2410 = vmatmul.mubr.f32.gmra.mrb[0].mxu0 %v2343
      %v2411 = vpop.f32.mrb[0].mxu0
      %v2412 = vadd.f32 %v2338, %v2411
      %v2413 = vpop.f32.mrb[0].mxu0
      %v2414 = vadd.f32 %v2340, %v2413
      %2415 = vdwg.mxu0
      %2416 = vrot.lane.b32.xlu0 %v1918, 113
      %v2417 = vpop.permute.xlu0 %2416
      %2418 = vrot.lane.b32.xlu0 %v1919, 113
      %v2419 = vpop.permute.xlu0 %2418
      %v2420 = vsel %vm825, %v2417, %v2419
      %v2421 = vsel %vm825, %v2419, %v2417
      %v2422 = vmul.f32 %v2420, %v834
      %v2423 = vmul.f32 %v2421, %v838
      %s2424 = scalar_lea.vmem %s2, 120
      %v2425 = vld [vmem:[%s2424] sm:$0xff]
      %v2427 = vsel %vm350, %v2425, 0
      %2429 = vmatprep.subr.mxu0 %v2423
      %2430 = vmatpush1.msra.mxu0 %v2422
      %2431 = vmatprep.subr.mxu0 0.0
      %2432 = vmatpush1.msra.mxu0 0.0
      %2433 = vmatprep.subr.mxu0 0.0
      %2434 = vmatpush1.msra.mxu0 0.0
      %2435 = vmatprep.subr.mxu0 0.0
      %2436 = vmatpush1.msra.mxu0 0.0
      %2437 = vmatprep.subr.mxu0 0.0
      %2438 = vmatpush1.msra.mxu0 0.0
      %2439 = vmatprep.subr.mxu0 0.0
      %2440 = vmatpush1.msra.mxu0 0.0
      %2441 = vmatprep.subr.mxu0 0.0
      %2442 = vmatpush1.msra.mxu0 0.0
      %2443 = vmatprep.subr.mxu0 0.0
      %2444 = vmatpush1.msra.mxu0 0.0
      %2445 = vmatprep.subr.mxu0 0.0
      %2446 = vmatpush1.msra.mxu0 0.0
      %2447 = vmatprep.subr.mxu0 0.0
      %2448 = vmatpush1.msra.mxu0 0.0
      %2449 = vmatprep.subr.mxu0 0.0
      %2450 = vmatpush1.msra.mxu0 0.0
      %2451 = vmatprep.subr.mxu0 0.0
      %2452 = vmatpush1.msra.mxu0 0.0
      %2453 = vmatprep.subr.mxu0 0.0
      %2454 = vmatpush1.msra.mxu0 0.0
      %2455 = vmatprep.subr.mxu0 0.0
      %2456 = vmatpush1.msra.mxu0 0.0
      %2457 = vmatprep.subr.mxu0 0.0
      %2458 = vmatpush1.msra.mxu0 0.0
      %2459 = vmatprep.subr.mxu0 0.0
      %2460 = vmatpush1.msra.mxu0 0.0
      %2461 = vmatprep.subr.mxu0 0.0
      %2462 = vmatpush1.msra.mxu0 0.0
      %2463 = vmatprep.subr.mxu0 0.0
      %2464 = vmatpush1.msra.mxu0 0.0
      %2465 = vmatprep.subr.mxu0 0.0
      %2466 = vmatpush1.msra.mxu0 0.0
      %2467 = vmatprep.subr.mxu0 0.0
      %2468 = vmatpush1.msra.mxu0 0.0
      %2469 = vmatprep.subr.mxu0 0.0
      %2470 = vmatpush1.msra.mxu0 0.0
      %2471 = vmatprep.subr.mxu0 0.0
      %2472 = vmatpush1.msra.mxu0 0.0
      %2473 = vmatprep.subr.mxu0 0.0
      %2474 = vmatpush1.msra.mxu0 0.0
      %2475 = vmatprep.subr.mxu0 0.0
      %2476 = vmatpush1.msra.mxu0 0.0
      %2477 = vmatprep.subr.mxu0 0.0
      %2478 = vmatpush1.msra.mxu0 0.0
      %2479 = vmatprep.subr.mxu0 0.0
      %2480 = vmatpush1.msra.mxu0 0.0
      %2481 = vmatprep.subr.mxu0 0.0
      %2482 = vmatpush1.msra.mxu0 0.0
      %2483 = vmatprep.subr.mxu0 0.0
      %2484 = vmatpush1.msra.mxu0 0.0
      %2485 = vmatprep.subr.mxu0 0.0
      %2486 = vmatpush1.msra.mxu0 0.0
      %2487 = vmatprep.subr.mxu0 0.0
      %2488 = vmatpush1.msra.mxu0 0.0
      %2489 = vmatprep.subr.mxu0 0.0
      %2490 = vmatpush1.msra.mxu0 0.0
      %2491 = vmatprep.subr.mxu0 0.0
      %2492 = vmatpush1.msra.mxu0 0.0
      %2493 = vmatprep.mubr.f32.mxu0 0.0
      %2494 = vmatmul.mubr.f32.gmra.mrb[0].mxu0 %v2427
      %v2495 = vpop.f32.mrb[0].mxu0
      %v2496 = vadd.f32 0.0, %v2495
      %v2497 = vpop.f32.mrb[0].mxu0
      %v2498 = vadd.f32 0.0, %v2497
      %2499 = vdwg.mxu0
      %v2500 = vadd.f32 %v2104, %v2496
      %v2501 = vadd.f32 %v2106, %v2498
      %2502 = vrot.lane.b32.xlu0 %v1918, 112
      %v2503 = vpop.permute.xlu0 %2502
      %2504 = vrot.lane.b32.xlu0 %v1919, 112
      %v2505 = vpop.permute.xlu0 %2504
      %v2506 = vsel %vm925, %v2503, %v2505
      %v2507 = vsel %vm925, %v2505, %v2503
      %v2508 = vmul.f32 %v2506, %v934
      %v2509 = vmul.f32 %v2507, %v938
      %s2510 = scalar_lea.vmem %s2, 128
      %v2511 = vld [vmem:[%s2510] sm:$0xff]
      %v2513 = vsel %vm350, %v2511, 0
      %2515 = vmatprep.subr.mxu0 %v2509
      %2516 = vmatpush1.msra.mxu0 %v2508
      %2517 = vmatprep.subr.mxu0 0.0
      %2518 = vmatpush1.msra.mxu0 0.0
      %2519 = vmatprep.subr.mxu0 0.0
      %2520 = vmatpush1.msra.mxu0 0.0
      %2521 = vmatprep.subr.mxu0 0.0
      %2522 = vmatpush1.msra.mxu0 0.0
      %2523 = vmatprep.subr.mxu0 0.0
      %2524 = vmatpush1.msra.mxu0 0.0
      %2525 = vmatprep.subr.mxu0 0.0
      %2526 = vmatpush1.msra.mxu0 0.0
      %2527 = vmatprep.subr.mxu0 0.0
      %2528 = vmatpush1.msra.mxu0 0.0
      %2529 = vmatprep.subr.mxu0 0.0
      %2530 = vmatpush1.msra.mxu0 0.0
      %2531 = vmatprep.subr.mxu0 0.0
      %2532 = vmatpush1.msra.mxu0 0.0
      %2533 = vmatprep.subr.mxu0 0.0
      %2534 = vmatpush1.msra.mxu0 0.0
      %2535 = vmatprep.subr.mxu0 0.0
      %2536 = vmatpush1.msra.mxu0 0.0
      %2537 = vmatprep.subr.mxu0 0.0
      %2538 = vmatpush1.msra.mxu0 0.0
      %2539 = vmatprep.subr.mxu0 0.0
      %2540 = vmatpush1.msra.mxu0 0.0
      %2541 = vmatprep.subr.mxu0 0.0
      %2542 = vmatpush1.msra.mxu0 0.0
      %2543 = vmatprep.subr.mxu0 0.0
      %2544 = vmatpush1.msra.mxu0 0.0
      %2545 = vmatprep.subr.mxu0 0.0
      %2546 = vmatpush1.msra.mxu0 0.0
      %2547 = vmatprep.subr.mxu0 0.0
      %2548 = vmatpush1.msra.mxu0 0.0
      %2549 = vmatprep.subr.mxu0 0.0
      %2550 = vmatpush1.msra.mxu0 0.0
      %2551 = vmatprep.subr.mxu0 0.0
      %2552 = vmatpush1.msra.mxu0 0.0
      %2553 = vmatprep.subr.mxu0 0.0
      %2554 = vmatpush1.msra.mxu0 0.0
      %2555 = vmatprep.subr.mxu0 0.0
      %2556 = vmatpush1.msra.mxu0 0.0
      %2557 = vmatprep.subr.mxu0 0.0
      %2558 = vmatpush1.msra.mxu0 0.0
      %2559 = vmatprep.subr.mxu0 0.0
      %2560 = vmatpush1.msra.mxu0 0.0
      %2561 = vmatprep.subr.mxu0 0.0
      %2562 = vmatpush1.msra.mxu0 0.0
      %2563 = vmatprep.subr.mxu0 0.0
      %2564 = vmatpush1.msra.mxu0 0.0
      %2565 = vmatprep.subr.mxu0 0.0
      %2566 = vmatpush1.msra.mxu0 0.0
      %2567 = vmatprep.subr.mxu0 0.0
      %2568 = vmatpush1.msra.mxu0 0.0
      %2569 = vmatprep.subr.mxu0 0.0
      %2570 = vmatpush1.msra.mxu0 0.0
      %2571 = vmatprep.subr.mxu0 0.0
      %2572 = vmatpush1.msra.mxu0 0.0
      %2573 = vmatprep.subr.mxu0 0.0
      %2574 = vmatpush1.msra.mxu0 0.0
      %2575 = vmatprep.subr.mxu0 0.0
      %2576 = vmatpush1.msra.mxu0 0.0
      %2577 = vmatprep.subr.mxu0 0.0
      %2578 = vmatpush1.msra.mxu0 0.0
      %2579 = vmatprep.mubr.f32.mxu0 0.0
      %2580 = vmatmul.mubr.f32.gmra.mrb[0].mxu0 %v2513
      %v2581 = vpop.f32.mrb[0].mxu0
      %v2582 = vadd.f32 0.0, %v2581
      %v2583 = vpop.f32.mrb[0].mxu0
      %v2584 = vadd.f32 0.0, %v2583
      %2585 = vdwg.mxu0
      %v2586 = vadd.f32 %v2254, %v2582
      %v2587 = vadd.f32 %v2256, %v2584
      %2588 = vrot.lane.b32.xlu0 %v1918, 111
      %v2589 = vpop.permute.xlu0 %2588
      %2590 = vrot.lane.b32.xlu0 %v1919, 111
      %v2591 = vpop.permute.xlu0 %2590
      %v2592 = vsel %vm1025, %v2589, %v2591
      %v2593 = vsel %vm1025, %v2591, %v2589
      %v2594 = vmul.f32 %v2592, %v1034
      %v2595 = vmul.f32 %v2593, %v1038
      %s2596 = scalar_lea.vmem %s2, 136
      %v2597 = vld [vmem:[%s2596] sm:$0xff]
      %v2599 = vsel %vm350, %v2597, 0
      %2601 = vmatprep.subr.mxu0 %v2595
      %2602 = vmatpush1.msra.mxu0 %v2594
      %2603 = vmatprep.subr.mxu0 0.0
      %2604 = vmatpush1.msra.mxu0 0.0
      %2605 = vmatprep.subr.mxu0 0.0
      %2606 = vmatpush1.msra.mxu0 0.0
      %2607 = vmatprep.subr.mxu0 0.0
      %2608 = vmatpush1.msra.mxu0 0.0
      %2609 = vmatprep.subr.mxu0 0.0
      %2610 = vmatpush1.msra.mxu0 0.0
      %2611 = vmatprep.subr.mxu0 0.0
      %2612 = vmatpush1.msra.mxu0 0.0
      %2613 = vmatprep.subr.mxu0 0.0
      %2614 = vmatpush1.msra.mxu0 0.0
      %2615 = vmatprep.subr.mxu0 0.0
      %2616 = vmatpush1.msra.mxu0 0.0
      %2617 = vmatprep.subr.mxu0 0.0
      %2618 = vmatpush1.msra.mxu0 0.0
      %2619 = vmatprep.subr.mxu0 0.0
      %2620 = vmatpush1.msra.mxu0 0.0
      %2621 = vmatprep.subr.mxu0 0.0
      %2622 = vmatpush1.msra.mxu0 0.0
      %2623 = vmatprep.subr.mxu0 0.0
      %2624 = vmatpush1.msra.mxu0 0.0
      %2625 = vmatprep.subr.mxu0 0.0
      %2626 = vmatpush1.msra.mxu0 0.0
      %2627 = vmatprep.subr.mxu0 0.0
      %2628 = vmatpush1.msra.mxu0 0.0
      %2629 = vmatprep.subr.mxu0 0.0
      %2630 = vmatpush1.msra.mxu0 0.0
      %2631 = vmatprep.subr.mxu0 0.0
      %2632 = vmatpush1.msra.mxu0 0.0
      %2633 = vmatprep.subr.mxu0 0.0
      %2634 = vmatpush1.msra.mxu0 0.0
      %2635 = vmatprep.subr.mxu0 0.0
      %2636 = vmatpush1.msra.mxu0 0.0
      %2637 = vmatprep.subr.mxu0 0.0
      %2638 = vmatpush1.msra.mxu0 0.0
      %2639 = vmatprep.subr.mxu0 0.0
      %2640 = vmatpush1.msra.mxu0 0.0
      %2641 = vmatprep.subr.mxu0 0.0
      %2642 = vmatpush1.msra.mxu0 0.0
      %2643 = vmatprep.subr.mxu0 0.0
      %2644 = vmatpush1.msra.mxu0 0.0
      %2645 = vmatprep.subr.mxu0 0.0
      %2646 = vmatpush1.msra.mxu0 0.0
      %2647 = vmatprep.subr.mxu0 0.0
      %2648 = vmatpush1.msra.mxu0 0.0
      %2649 = vmatprep.subr.mxu0 0.0
      %2650 = vmatpush1.msra.mxu0 0.0
      %2651 = vmatprep.subr.mxu0 0.0
      %2652 = vmatpush1.msra.mxu0 0.0
      %2653 = vmatprep.subr.mxu0 0.0
      %2654 = vmatpush1.msra.mxu0 0.0
      %2655 = vmatprep.subr.mxu0 0.0
      %2656 = vmatpush1.msra.mxu0 0.0
      %2657 = vmatprep.subr.mxu0 0.0
      %2658 = vmatpush1.msra.mxu0 0.0
      %2659 = vmatprep.subr.mxu0 0.0
      %2660 = vmatpush1.msra.mxu0 0.0
      %2661 = vmatprep.subr.mxu0 0.0
      %2662 = vmatpush1.msra.mxu0 0.0
      %2663 = vmatprep.subr.mxu0 0.0
      %2664 = vmatpush1.msra.mxu0 0.0
      %2665 = vmatprep.mubr.f32.mxu0 0.0
      %2666 = vmatmul.mubr.f32.gmra.mrb[0].mxu0 %v2599
      %v2667 = vpop.f32.mrb[0].mxu0
      %v2668 = vadd.f32 0.0, %v2667
      %v2669 = vpop.f32.mrb[0].mxu0
      %v2670 = vadd.f32 0.0, %v2669
      %2671 = vdwg.mxu0
      %v2672 = vadd.f32 %v2412, %v2668
      %v2673 = vadd.f32 %v2414, %v2670
      %v2674 = vadd.f32 %v2500, %v2586
      %v2675 = vadd.f32 %v2501, %v2587
      %s2676 = scalar_lea.vmem %s3, 8
      %v2677 = vld [vmem:[%s2676] sm:$0xff]
      %2679 = vset.pattern.permute.xlu0 0
      %2680 = vperm.xlu0 %2679, %v2677
      %v2681 = vpop.permute.xlu0 %2680
      %v2683 = vadd.f32 %v2672, %v2681
      %v2684 = vadd.f32 %v2673, %v2681
      %v2685 = vadd.f32 %v2674, %v2683
      %v2686 = vadd.f32 %v2675, %v2684
      %v2687 = vmax.f32 %v2685, 0.0
      %v2688 = vmax.f32 %v2686, 0.0
      %2689 = vrot.lane.b32.xlu0 %v2687, 17
      %v2690 = vpop.permute.xlu0 %2689
      %2691 = vrot.lane.b32.xlu0 %v2688, 17
      %v2692 = vpop.permute.xlu0 %2691
      %v2693 = vsel %vm260, %v2690, %v2692
      %v2694 = vsel %vm260, %v2692, %v2690
      %v2695 = vmul.f32 %v2694, %v268
      %v2696 = vmul.f32 %v2693, %v272
      %s2697 = scalar_lea.vmem %s4, 9
      %v2698 = vld [vmem:[%s2697] sm:$0x1]
      %2699 = vrot.lane.b32.xlu0 %v2687, 16
      %v2700 = vpop.permute.xlu0 %2699
      %2701 = vrot.lane.b32.xlu0 %v2688, 16
      %v2702 = vpop.permute.xlu0 %2701
      %v2703 = vsel %vm282, %v2700, %v2702
      %v2704 = vsel %vm282, %v2702, %v2700
      %v2705 = vmul.f32 %v2704, %v291
      %v2706 = vmul.f32 %v2703, %v295
      %s2707 = scalar_lea.vmem %s4, 10
      %v2708 = vld [vmem:[%s2707] sm:$0x1]
      %2709 = vrot.lane.b32.xlu0 %v2687, 15
      %v2710 = vpop.permute.xlu0 %2709
      %2711 = vrot.lane.b32.xlu0 %v2688, 15
      %v2712 = vpop.permute.xlu0 %2711
      %v2713 = vsel %vm306, %v2710, %v2712
      %v2714 = vsel %vm306, %v2712, %v2710
      %v2715 = vmul.f32 %v2714, %v315
      %v2716 = vmul.f32 %v2713, %v319
      %s2717 = scalar_lea.vmem %s4, 11
      %v2718 = vld [vmem:[%s2717] sm:$0x1]
      %2719 = vrot.lane.b32.xlu0 %v2687, 1
      %v2720 = vpop.permute.xlu0 %2719
      %2721 = vrot.lane.b32.xlu0 %v2688, 1
      %v2722 = vpop.permute.xlu0 %2721
      %v2723 = vsel %vm330, %v2720, %v2722
      %v2724 = vsel %vm330, %v2722, %v2720
      %v2725 = vmul.f32 %v2724, %v339
      %v2726 = vmul.f32 %v2723, %v343
      %s2727 = scalar_lea.vmem %s4, 12
      %v2728 = vld [vmem:[%s2727] sm:$0x1]
      %v2730 = vsel %vm350, %v2728, 0
      %2732 = vmatprep.subr.mxu0 %v2726
      %2733 = vmatpush1.msra.mxu0 %v2725
      %2734 = vmatprep.subr.mxu0 0.0
      %2735 = vmatpush1.msra.mxu0 0.0
      %2736 = vmatprep.subr.mxu0 0.0
      %2737 = vmatpush1.msra.mxu0 0.0
      %2738 = vmatprep.subr.mxu0 0.0
      %2739 = vmatpush1.msra.mxu0 0.0
      %2740 = vmatprep.subr.mxu0 0.0
      %2741 = vmatpush1.msra.mxu0 0.0
      %2742 = vmatprep.subr.mxu0 0.0
      %2743 = vmatpush1.msra.mxu0 0.0
      %2744 = vmatprep.subr.mxu0 0.0
      %2745 = vmatpush1.msra.mxu0 0.0
      %2746 = vmatprep.subr.mxu0 0.0
      %2747 = vmatpush1.msra.mxu0 0.0
      %2748 = vmatprep.subr.mxu0 0.0
      %2749 = vmatpush1.msra.mxu0 0.0
      %2750 = vmatprep.subr.mxu0 0.0
      %2751 = vmatpush1.msra.mxu0 0.0
      %2752 = vmatprep.subr.mxu0 0.0
      %2753 = vmatpush1.msra.mxu0 0.0
      %2754 = vmatprep.subr.mxu0 0.0
      %2755 = vmatpush1.msra.mxu0 0.0
      %2756 = vmatprep.subr.mxu0 0.0
      %2757 = vmatpush1.msra.mxu0 0.0
      %2758 = vmatprep.subr.mxu0 0.0
      %2759 = vmatpush1.msra.mxu0 0.0
      %2760 = vmatprep.subr.mxu0 0.0
      %2761 = vmatpush1.msra.mxu0 0.0
      %2762 = vmatprep.subr.mxu0 0.0
      %2763 = vmatpush1.msra.mxu0 0.0
      %2764 = vmatprep.subr.mxu0 0.0
      %2765 = vmatpush1.msra.mxu0 0.0
      %2766 = vmatprep.subr.mxu0 0.0
      %2767 = vmatpush1.msra.mxu0 0.0
      %2768 = vmatprep.subr.mxu0 0.0
      %2769 = vmatpush1.msra.mxu0 0.0
      %2770 = vmatprep.subr.mxu0 0.0
      %2771 = vmatpush1.msra.mxu0 0.0
      %2772 = vmatprep.subr.mxu0 0.0
      %2773 = vmatpush1.msra.mxu0 0.0
      %2774 = vmatprep.subr.mxu0 0.0
      %2775 = vmatpush1.msra.mxu0 0.0
      %2776 = vmatprep.subr.mxu0 0.0
      %2777 = vmatpush1.msra.mxu0 0.0
      %2778 = vmatprep.subr.mxu0 0.0
      %2779 = vmatpush1.msra.mxu0 0.0
      %2780 = vmatprep.subr.mxu0 0.0
      %2781 = vmatpush1.msra.mxu0 0.0
      %2782 = vmatprep.subr.mxu0 0.0
      %2783 = vmatpush1.msra.mxu0 0.0
      %2784 = vmatprep.subr.mxu0 0.0
      %2785 = vmatpush1.msra.mxu0 0.0
      %2786 = vmatprep.subr.mxu0 0.0
      %2787 = vmatpush1.msra.mxu0 0.0
      %2788 = vmatprep.subr.mxu0 0.0
      %2789 = vmatpush1.msra.mxu0 0.0
      %2790 = vmatprep.subr.mxu0 0.0
      %2791 = vmatpush1.msra.mxu0 0.0
      %2792 = vmatprep.subr.mxu0 0.0
      %2793 = vmatpush1.msra.mxu0 0.0
      %2794 = vmatprep.subr.mxu0 0.0
      %2795 = vmatpush1.msra.mxu0 0.0
      %2796 = vmatprep.mubr.f32.mxu0 0.0
      %2797 = vmatmul.mubr.f32.gmra.mrb[0].mxu0 %v2730
      %v2798 = vpop.f32.mrb[0].mxu0
      %v2799 = vadd.f32 0.0, %v2798
      %v2800 = vpop.f32.mrb[0].mxu0
      %v2801 = vadd.f32 0.0, %v2800
      %2802 = vdwg.mxu0
      %v2804 = vsel %vm350, %v2698, 0
      %2806 = vmatprep.subr.mxu0 %v2696
      %2807 = vmatpush1.msra.mxu0 %v2695
      %2808 = vmatprep.subr.mxu0 0.0
      %2809 = vmatpush1.msra.mxu0 0.0
      %2810 = vmatprep.subr.mxu0 0.0
      %2811 = vmatpush1.msra.mxu0 0.0
      %2812 = vmatprep.subr.mxu0 0.0
      %2813 = vmatpush1.msra.mxu0 0.0
      %2814 = vmatprep.subr.mxu0 0.0
      %2815 = vmatpush1.msra.mxu0 0.0
      %2816 = vmatprep.subr.mxu0 0.0
      %2817 = vmatpush1.msra.mxu0 0.0
      %2818 = vmatprep.subr.mxu0 0.0
      %2819 = vmatpush1.msra.mxu0 0.0
      %2820 = vmatprep.subr.mxu0 0.0
      %2821 = vmatpush1.msra.mxu0 0.0
      %2822 = vmatprep.subr.mxu0 0.0
      %2823 = vmatpush1.msra.mxu0 0.0
      %2824 = vmatprep.subr.mxu0 0.0
      %2825 = vmatpush1.msra.mxu0 0.0
      %2826 = vmatprep.subr.mxu0 0.0
      %2827 = vmatpush1.msra.mxu0 0.0
      %2828 = vmatprep.subr.mxu0 0.0
      %2829 = vmatpush1.msra.mxu0 0.0
      %2830 = vmatprep.subr.mxu0 0.0
      %2831 = vmatpush1.msra.mxu0 0.0
      %2832 = vmatprep.subr.mxu0 0.0
      %2833 = vmatpush1.msra.mxu0 0.0
      %2834 = vmatprep.subr.mxu0 0.0
      %2835 = vmatpush1.msra.mxu0 0.0
      %2836 = vmatprep.subr.mxu0 0.0
      %2837 = vmatpush1.msra.mxu0 0.0
      %2838 = vmatprep.subr.mxu0 0.0
      %2839 = vmatpush1.msra.mxu0 0.0
      %2840 = vmatprep.subr.mxu0 0.0
      %2841 = vmatpush1.msra.mxu0 0.0
      %2842 = vmatprep.subr.mxu0 0.0
      %2843 = vmatpush1.msra.mxu0 0.0
      %2844 = vmatprep.subr.mxu0 0.0
      %2845 = vmatpush1.msra.mxu0 0.0
      %2846 = vmatprep.subr.mxu0 0.0
      %2847 = vmatpush1.msra.mxu0 0.0
      %2848 = vmatprep.subr.mxu0 0.0
      %2849 = vmatpush1.msra.mxu0 0.0
      %2850 = vmatprep.subr.mxu0 0.0
      %2851 = vmatpush1.msra.mxu0 0.0
      %2852 = vmatprep.subr.mxu0 0.0
      %2853 = vmatpush1.msra.mxu0 0.0
      %2854 = vmatprep.subr.mxu0 0.0
      %2855 = vmatpush1.msra.mxu0 0.0
      %2856 = vmatprep.subr.mxu0 0.0
      %2857 = vmatpush1.msra.mxu0 0.0
      %2858 = vmatprep.subr.mxu0 0.0
      %2859 = vmatpush1.msra.mxu0 0.0
      %2860 = vmatprep.subr.mxu0 0.0
      %2861 = vmatpush1.msra.mxu0 0.0
      %2862 = vmatprep.subr.mxu0 0.0
      %2863 = vmatpush1.msra.mxu0 0.0
      %2864 = vmatprep.subr.mxu0 0.0
      %2865 = vmatpush1.msra.mxu0 0.0
      %2866 = vmatprep.subr.mxu0 0.0
      %2867 = vmatpush1.msra.mxu0 0.0
      %2868 = vmatprep.subr.mxu0 0.0
      %2869 = vmatpush1.msra.mxu0 0.0
      %2870 = vmatprep.mubr.f32.mxu0 0.0
      %2871 = vmatmul.mubr.f32.gmra.mrb[0].mxu0 %v2804
      %v2872 = vpop.f32.mrb[0].mxu0
      %v2873 = vadd.f32 %v2799, %v2872
      %v2874 = vpop.f32.mrb[0].mxu0
      %v2875 = vadd.f32 %v2801, %v2874
      %2876 = vdwg.mxu0
      %s2877 = scalar_lea.vmem %s4, 13
      %v2878 = vld [vmem:[%s2877] sm:$0x1]
      %v2880 = vsel %vm350, %v2878, 0
      %2882 = vmatprep.subr.mxu0 %v2688
      %2883 = vmatpush1.msra.mxu0 %v2687
      %2884 = vmatprep.subr.mxu0 0.0
      %2885 = vmatpush1.msra.mxu0 0.0
      %2886 = vmatprep.subr.mxu0 0.0
      %2887 = vmatpush1.msra.mxu0 0.0
      %2888 = vmatprep.subr.mxu0 0.0
      %2889 = vmatpush1.msra.mxu0 0.0
      %2890 = vmatprep.subr.mxu0 0.0
      %2891 = vmatpush1.msra.mxu0 0.0
      %2892 = vmatprep.subr.mxu0 0.0
      %2893 = vmatpush1.msra.mxu0 0.0
      %2894 = vmatprep.subr.mxu0 0.0
      %2895 = vmatpush1.msra.mxu0 0.0
      %2896 = vmatprep.subr.mxu0 0.0
      %2897 = vmatpush1.msra.mxu0 0.0
      %2898 = vmatprep.subr.mxu0 0.0
      %2899 = vmatpush1.msra.mxu0 0.0
      %2900 = vmatprep.subr.mxu0 0.0
      %2901 = vmatpush1.msra.mxu0 0.0
      %2902 = vmatprep.subr.mxu0 0.0
      %2903 = vmatpush1.msra.mxu0 0.0
      %2904 = vmatprep.subr.mxu0 0.0
      %2905 = vmatpush1.msra.mxu0 0.0
      %2906 = vmatprep.subr.mxu0 0.0
      %2907 = vmatpush1.msra.mxu0 0.0
      %2908 = vmatprep.subr.mxu0 0.0
      %2909 = vmatpush1.msra.mxu0 0.0
      %2910 = vmatprep.subr.mxu0 0.0
      %2911 = vmatpush1.msra.mxu0 0.0
      %2912 = vmatprep.subr.mxu0 0.0
      %2913 = vmatpush1.msra.mxu0 0.0
      %2914 = vmatprep.subr.mxu0 0.0
      %2915 = vmatpush1.msra.mxu0 0.0
      %2916 = vmatprep.subr.mxu0 0.0
      %2917 = vmatpush1.msra.mxu0 0.0
      %2918 = vmatprep.subr.mxu0 0.0
      %2919 = vmatpush1.msra.mxu0 0.0
      %2920 = vmatprep.subr.mxu0 0.0
      %2921 = vmatpush1.msra.mxu0 0.0
      %2922 = vmatprep.subr.mxu0 0.0
      %2923 = vmatpush1.msra.mxu0 0.0
      %2924 = vmatprep.subr.mxu0 0.0
      %2925 = vmatpush1.msra.mxu0 0.0
      %2926 = vmatprep.subr.mxu0 0.0
      %2927 = vmatpush1.msra.mxu0 0.0
      %2928 = vmatprep.subr.mxu0 0.0
      %2929 = vmatpush1.msra.mxu0 0.0
      %2930 = vmatprep.subr.mxu0 0.0
      %2931 = vmatpush1.msra.mxu0 0.0
      %2932 = vmatprep.subr.mxu0 0.0
      %2933 = vmatpush1.msra.mxu0 0.0
      %2934 = vmatprep.subr.mxu0 0.0
      %2935 = vmatpush1.msra.mxu0 0.0
      %2936 = vmatprep.subr.mxu0 0.0
      %2937 = vmatpush1.msra.mxu0 0.0
      %2938 = vmatprep.subr.mxu0 0.0
      %2939 = vmatpush1.msra.mxu0 0.0
      %2940 = vmatprep.subr.mxu0 0.0
      %2941 = vmatpush1.msra.mxu0 0.0
      %2942 = vmatprep.subr.mxu0 0.0
      %2943 = vmatpush1.msra.mxu0 0.0
      %2944 = vmatprep.subr.mxu0 0.0
      %2945 = vmatpush1.msra.mxu0 0.0
      %2946 = vmatprep.mubr.f32.mxu0 0.0
      %2947 = vmatmul.mubr.f32.gmra.mrb[0].mxu0 %v2880
      %v2948 = vpop.f32.mrb[0].mxu0
      %v2949 = vadd.f32 0.0, %v2948
      %v2950 = vpop.f32.mrb[0].mxu0
      %v2951 = vadd.f32 0.0, %v2950
      %2952 = vdwg.mxu0
      %v2954 = vsel %vm350, %v2708, 0
      %2956 = vmatprep.subr.mxu0 %v2706
      %2957 = vmatpush1.msra.mxu0 %v2705
      %2958 = vmatprep.subr.mxu0 0.0
      %2959 = vmatpush1.msra.mxu0 0.0
      %2960 = vmatprep.subr.mxu0 0.0
      %2961 = vmatpush1.msra.mxu0 0.0
      %2962 = vmatprep.subr.mxu0 0.0
      %2963 = vmatpush1.msra.mxu0 0.0
      %2964 = vmatprep.subr.mxu0 0.0
      %2965 = vmatpush1.msra.mxu0 0.0
      %2966 = vmatprep.subr.mxu0 0.0
      %2967 = vmatpush1.msra.mxu0 0.0
      %2968 = vmatprep.subr.mxu0 0.0
      %2969 = vmatpush1.msra.mxu0 0.0
      %2970 = vmatprep.subr.mxu0 0.0
      %2971 = vmatpush1.msra.mxu0 0.0
      %2972 = vmatprep.subr.mxu0 0.0
      %2973 = vmatpush1.msra.mxu0 0.0
      %2974 = vmatprep.subr.mxu0 0.0
      %2975 = vmatpush1.msra.mxu0 0.0
      %2976 = vmatprep.subr.mxu0 0.0
      %2977 = vmatpush1.msra.mxu0 0.0
      %2978 = vmatprep.subr.mxu0 0.0
      %2979 = vmatpush1.msra.mxu0 0.0
      %2980 = vmatprep.subr.mxu0 0.0
      %2981 = vmatpush1.msra.mxu0 0.0
      %2982 = vmatprep.subr.mxu0 0.0
      %2983 = vmatpush1.msra.mxu0 0.0
      %2984 = vmatprep.subr.mxu0 0.0
      %2985 = vmatpush1.msra.mxu0 0.0
      %2986 = vmatprep.subr.mxu0 0.0
      %2987 = vmatpush1.msra.mxu0 0.0
      %2988 = vmatprep.subr.mxu0 0.0
      %2989 = vmatpush1.msra.mxu0 0.0
      %2990 = vmatprep.subr.mxu0 0.0
      %2991 = vmatpush1.msra.mxu0 0.0
      %2992 = vmatprep.subr.mxu0 0.0
      %2993 = vmatpush1.msra.mxu0 0.0
      %2994 = vmatprep.subr.mxu0 0.0
      %2995 = vmatpush1.msra.mxu0 0.0
      %2996 = vmatprep.subr.mxu0 0.0
      %2997 = vmatpush1.msra.mxu0 0.0
      %2998 = vmatprep.subr.mxu0 0.0
      %2999 = vmatpush1.msra.mxu0 0.0
      %3000 = vmatprep.subr.mxu0 0.0
      %3001 = vmatpush1.msra.mxu0 0.0
      %3002 = vmatprep.subr.mxu0 0.0
      %3003 = vmatpush1.msra.mxu0 0.0
      %3004 = vmatprep.subr.mxu0 0.0
      %3005 = vmatpush1.msra.mxu0 0.0
      %3006 = vmatprep.subr.mxu0 0.0
      %3007 = vmatpush1.msra.mxu0 0.0
      %3008 = vmatprep.subr.mxu0 0.0
      %3009 = vmatpush1.msra.mxu0 0.0
      %3010 = vmatprep.subr.mxu0 0.0
      %3011 = vmatpush1.msra.mxu0 0.0
      %3012 = vmatprep.subr.mxu0 0.0
      %3013 = vmatpush1.msra.mxu0 0.0
      %3014 = vmatprep.subr.mxu0 0.0
      %3015 = vmatpush1.msra.mxu0 0.0
      %3016 = vmatprep.subr.mxu0 0.0
      %3017 = vmatpush1.msra.mxu0 0.0
      %3018 = vmatprep.subr.mxu0 0.0
      %3019 = vmatpush1.msra.mxu0 0.0
      %3020 = vmatprep.mubr.f32.mxu0 0.0
      %3021 = vmatmul.mubr.f32.gmra.mrb[0].mxu0 %v2954
      %v3022 = vpop.f32.mrb[0].mxu0
      %v3023 = vadd.f32 %v2949, %v3022
      %v3024 = vpop.f32.mrb[0].mxu0
      %v3025 = vadd.f32 %v2951, %v3024
      %3026 = vdwg.mxu0
      %3027 = vrot.lane.b32.xlu0 %v2687, 127
      %v3028 = vpop.permute.xlu0 %3027
      %3029 = vrot.lane.b32.xlu0 %v2688, 127
      %v3030 = vpop.permute.xlu0 %3029
      %v3031 = vsel %vm653, %v3028, %v3030
      %v3032 = vsel %vm653, %v3030, %v3028
      %v3033 = vmul.f32 %v3031, %v662
      %v3034 = vmul.f32 %v3032, %v666
      %s3035 = scalar_lea.vmem %s4, 14
      %v3036 = vld [vmem:[%s3035] sm:$0x1]
      %v3038 = vsel %vm350, %v3036, 0
      %3040 = vmatprep.subr.mxu0 %v3034
      %3041 = vmatpush1.msra.mxu0 %v3033
      %3042 = vmatprep.subr.mxu0 0.0
      %3043 = vmatpush1.msra.mxu0 0.0
      %3044 = vmatprep.subr.mxu0 0.0
      %3045 = vmatpush1.msra.mxu0 0.0
      %3046 = vmatprep.subr.mxu0 0.0
      %3047 = vmatpush1.msra.mxu0 0.0
      %3048 = vmatprep.subr.mxu0 0.0
      %3049 = vmatpush1.msra.mxu0 0.0
      %3050 = vmatprep.subr.mxu0 0.0
      %3051 = vmatpush1.msra.mxu0 0.0
      %3052 = vmatprep.subr.mxu0 0.0
      %3053 = vmatpush1.msra.mxu0 0.0
      %3054 = vmatprep.subr.mxu0 0.0
      %3055 = vmatpush1.msra.mxu0 0.0
      %3056 = vmatprep.subr.mxu0 0.0
      %3057 = vmatpush1.msra.mxu0 0.0
      %3058 = vmatprep.subr.mxu0 0.0
      %3059 = vmatpush1.msra.mxu0 0.0
      %3060 = vmatprep.subr.mxu0 0.0
      %3061 = vmatpush1.msra.mxu0 0.0
      %3062 = vmatprep.subr.mxu0 0.0
      %3063 = vmatpush1.msra.mxu0 0.0
      %3064 = vmatprep.subr.mxu0 0.0
      %3065 = vmatpush1.msra.mxu0 0.0
      %3066 = vmatprep.subr.mxu0 0.0
      %3067 = vmatpush1.msra.mxu0 0.0
      %3068 = vmatprep.subr.mxu0 0.0
      %3069 = vmatpush1.msra.mxu0 0.0
      %3070 = vmatprep.subr.mxu0 0.0
      %3071 = vmatpush1.msra.mxu0 0.0
      %3072 = vmatprep.subr.mxu0 0.0
      %3073 = vmatpush1.msra.mxu0 0.0
      %3074 = vmatprep.subr.mxu0 0.0
      %3075 = vmatpush1.msra.mxu0 0.0
      %3076 = vmatprep.subr.mxu0 0.0
      %3077 = vmatpush1.msra.mxu0 0.0
      %3078 = vmatprep.subr.mxu0 0.0
      %3079 = vmatpush1.msra.mxu0 0.0
      %3080 = vmatprep.subr.mxu0 0.0
      %3081 = vmatpush1.msra.mxu0 0.0
      %3082 = vmatprep.subr.mxu0 0.0
      %3083 = vmatpush1.msra.mxu0 0.0
      %3084 = vmatprep.subr.mxu0 0.0
      %3085 = vmatpush1.msra.mxu0 0.0
      %3086 = vmatprep.subr.mxu0 0.0
      %3087 = vmatpush1.msra.mxu0 0.0
      %3088 = vmatprep.subr.mxu0 0.0
      %3089 = vmatpush1.msra.mxu0 0.0
      %3090 = vmatprep.subr.mxu0 0.0
      %3091 = vmatpush1.msra.mxu0 0.0
      %3092 = vmatprep.subr.mxu0 0.0
      %3093 = vmatpush1.msra.mxu0 0.0
      %3094 = vmatprep.subr.mxu0 0.0
      %3095 = vmatpush1.msra.mxu0 0.0
      %3096 = vmatprep.subr.mxu0 0.0
      %3097 = vmatpush1.msra.mxu0 0.0
      %3098 = vmatprep.subr.mxu0 0.0
      %3099 = vmatpush1.msra.mxu0 0.0
      %3100 = vmatprep.subr.mxu0 0.0
      %3101 = vmatpush1.msra.mxu0 0.0
      %3102 = vmatprep.subr.mxu0 0.0
      %3103 = vmatpush1.msra.mxu0 0.0
      %3104 = vmatprep.mubr.f32.mxu0 0.0
      %3105 = vmatmul.mubr.f32.gmra.mrb[0].mxu0 %v3038
      %v3106 = vpop.f32.mrb[0].mxu0
      %v3107 = vadd.f32 0.0, %v3106
      %v3108 = vpop.f32.mrb[0].mxu0
      %v3109 = vadd.f32 0.0, %v3108
      %3110 = vdwg.mxu0
      %v3112 = vsel %vm350, %v2718, 0
      %3114 = vmatprep.subr.mxu0 %v2716
      %3115 = vmatpush1.msra.mxu0 %v2715
      %3116 = vmatprep.subr.mxu0 0.0
      %3117 = vmatpush1.msra.mxu0 0.0
      %3118 = vmatprep.subr.mxu0 0.0
      %3119 = vmatpush1.msra.mxu0 0.0
      %3120 = vmatprep.subr.mxu0 0.0
      %3121 = vmatpush1.msra.mxu0 0.0
      %3122 = vmatprep.subr.mxu0 0.0
      %3123 = vmatpush1.msra.mxu0 0.0
      %3124 = vmatprep.subr.mxu0 0.0
      %3125 = vmatpush1.msra.mxu0 0.0
      %3126 = vmatprep.subr.mxu0 0.0
      %3127 = vmatpush1.msra.mxu0 0.0
      %3128 = vmatprep.subr.mxu0 0.0
      %3129 = vmatpush1.msra.mxu0 0.0
      %3130 = vmatprep.subr.mxu0 0.0
      %3131 = vmatpush1.msra.mxu0 0.0
      %3132 = vmatprep.subr.mxu0 0.0
      %3133 = vmatpush1.msra.mxu0 0.0
      %3134 = vmatprep.subr.mxu0 0.0
      %3135 = vmatpush1.msra.mxu0 0.0
      %3136 = vmatprep.subr.mxu0 0.0
      %3137 = vmatpush1.msra.mxu0 0.0
      %3138 = vmatprep.subr.mxu0 0.0
      %3139 = vmatpush1.msra.mxu0 0.0
      %3140 = vmatprep.subr.mxu0 0.0
      %3141 = vmatpush1.msra.mxu0 0.0
      %3142 = vmatprep.subr.mxu0 0.0
      %3143 = vmatpush1.msra.mxu0 0.0
      %3144 = vmatprep.subr.mxu0 0.0
      %3145 = vmatpush1.msra.mxu0 0.0
      %3146 = vmatprep.subr.mxu0 0.0
      %3147 = vmatpush1.msra.mxu0 0.0
      %3148 = vmatprep.subr.mxu0 0.0
      %3149 = vmatpush1.msra.mxu0 0.0
      %3150 = vmatprep.subr.mxu0 0.0
      %3151 = vmatpush1.msra.mxu0 0.0
      %3152 = vmatprep.subr.mxu0 0.0
      %3153 = vmatpush1.msra.mxu0 0.0
      %3154 = vmatprep.subr.mxu0 0.0
      %3155 = vmatpush1.msra.mxu0 0.0
      %3156 = vmatprep.subr.mxu0 0.0
      %3157 = vmatpush1.msra.mxu0 0.0
      %3158 = vmatprep.subr.mxu0 0.0
      %3159 = vmatpush1.msra.mxu0 0.0
      %3160 = vmatprep.subr.mxu0 0.0
      %3161 = vmatpush1.msra.mxu0 0.0
      %3162 = vmatprep.subr.mxu0 0.0
      %3163 = vmatpush1.msra.mxu0 0.0
      %3164 = vmatprep.subr.mxu0 0.0
      %3165 = vmatpush1.msra.mxu0 0.0
      %3166 = vmatprep.subr.mxu0 0.0
      %3167 = vmatpush1.msra.mxu0 0.0
      %3168 = vmatprep.subr.mxu0 0.0
      %3169 = vmatpush1.msra.mxu0 0.0
      %3170 = vmatprep.subr.mxu0 0.0
      %3171 = vmatpush1.msra.mxu0 0.0
      %3172 = vmatprep.subr.mxu0 0.0
      %3173 = vmatpush1.msra.mxu0 0.0
      %3174 = vmatprep.subr.mxu0 0.0
      %3175 = vmatpush1.msra.mxu0 0.0
      %3176 = vmatprep.subr.mxu0 0.0
      %3177 = vmatpush1.msra.mxu0 0.0
      %3178 = vmatprep.mubr.f32.mxu0 0.0
      %3179 = vmatmul.mubr.f32.gmra.mrb[0].mxu0 %v3112
      %v3180 = vpop.f32.mrb[0].mxu0
      %v3181 = vadd.f32 %v3107, %v3180
      %v3182 = vpop.f32.mrb[0].mxu0
      %v3183 = vadd.f32 %v3109, %v3182
      %3184 = vdwg.mxu0
      %3185 = vrot.lane.b32.xlu0 %v2687, 113
      %v3186 = vpop.permute.xlu0 %3185
      %3187 = vrot.lane.b32.xlu0 %v2688, 113
      %v3188 = vpop.permute.xlu0 %3187
      %v3189 = vsel %vm825, %v3186, %v3188
      %v3190 = vsel %vm825, %v3188, %v3186
      %v3191 = vmul.f32 %v3189, %v834
      %v3192 = vmul.f32 %v3190, %v838
      %s3193 = scalar_lea.vmem %s4, 15
      %v3194 = vld [vmem:[%s3193] sm:$0x1]
      %v3196 = vsel %vm350, %v3194, 0
      %3198 = vmatprep.subr.mxu0 %v3192
      %3199 = vmatpush1.msra.mxu0 %v3191
      %3200 = vmatprep.subr.mxu0 0.0
      %3201 = vmatpush1.msra.mxu0 0.0
      %3202 = vmatprep.subr.mxu0 0.0
      %3203 = vmatpush1.msra.mxu0 0.0
      %3204 = vmatprep.subr.mxu0 0.0
      %3205 = vmatpush1.msra.mxu0 0.0
      %3206 = vmatprep.subr.mxu0 0.0
      %3207 = vmatpush1.msra.mxu0 0.0
      %3208 = vmatprep.subr.mxu0 0.0
      %3209 = vmatpush1.msra.mxu0 0.0
      %3210 = vmatprep.subr.mxu0 0.0
      %3211 = vmatpush1.msra.mxu0 0.0
      %3212 = vmatprep.subr.mxu0 0.0
      %3213 = vmatpush1.msra.mxu0 0.0
      %3214 = vmatprep.subr.mxu0 0.0
      %3215 = vmatpush1.msra.mxu0 0.0
      %3216 = vmatprep.subr.mxu0 0.0
      %3217 = vmatpush1.msra.mxu0 0.0
      %3218 = vmatprep.subr.mxu0 0.0
      %3219 = vmatpush1.msra.mxu0 0.0
      %3220 = vmatprep.subr.mxu0 0.0
      %3221 = vmatpush1.msra.mxu0 0.0
      %3222 = vmatprep.subr.mxu0 0.0
      %3223 = vmatpush1.msra.mxu0 0.0
      %3224 = vmatprep.subr.mxu0 0.0
      %3225 = vmatpush1.msra.mxu0 0.0
      %3226 = vmatprep.subr.mxu0 0.0
      %3227 = vmatpush1.msra.mxu0 0.0
      %3228 = vmatprep.subr.mxu0 0.0
      %3229 = vmatpush1.msra.mxu0 0.0
      %3230 = vmatprep.subr.mxu0 0.0
      %3231 = vmatpush1.msra.mxu0 0.0
      %3232 = vmatprep.subr.mxu0 0.0
      %3233 = vmatpush1.msra.mxu0 0.0
      %3234 = vmatprep.subr.mxu0 0.0
      %3235 = vmatpush1.msra.mxu0 0.0
      %3236 = vmatprep.subr.mxu0 0.0
      %3237 = vmatpush1.msra.mxu0 0.0
      %3238 = vmatprep.subr.mxu0 0.0
      %3239 = vmatpush1.msra.mxu0 0.0
      %3240 = vmatprep.subr.mxu0 0.0
      %3241 = vmatpush1.msra.mxu0 0.0
      %3242 = vmatprep.subr.mxu0 0.0
      %3243 = vmatpush1.msra.mxu0 0.0
      %3244 = vmatprep.subr.mxu0 0.0
      %3245 = vmatpush1.msra.mxu0 0.0
      %3246 = vmatprep.subr.mxu0 0.0
      %3247 = vmatpush1.msra.mxu0 0.0
      %3248 = vmatprep.subr.mxu0 0.0
      %3249 = vmatpush1.msra.mxu0 0.0
      %3250 = vmatprep.subr.mxu0 0.0
      %3251 = vmatpush1.msra.mxu0 0.0
      %3252 = vmatprep.subr.mxu0 0.0
      %3253 = vmatpush1.msra.mxu0 0.0
      %3254 = vmatprep.subr.mxu0 0.0
      %3255 = vmatpush1.msra.mxu0 0.0
      %3256 = vmatprep.subr.mxu0 0.0
      %3257 = vmatpush1.msra.mxu0 0.0
      %3258 = vmatprep.subr.mxu0 0.0
      %3259 = vmatpush1.msra.mxu0 0.0
      %3260 = vmatprep.subr.mxu0 0.0
      %3261 = vmatpush1.msra.mxu0 0.0
      %3262 = vmatprep.mubr.f32.mxu0 0.0
      %3263 = vmatmul.mubr.f32.gmra.mrb[0].mxu0 %v3196
      %v3264 = vpop.f32.mrb[0].mxu0
      %v3265 = vadd.f32 0.0, %v3264
      %v3266 = vpop.f32.mrb[0].mxu0
      %v3267 = vadd.f32 0.0, %v3266
      %3268 = vdwg.mxu0
      %v3269 = vadd.f32 %v2873, %v3265
      %v3270 = vadd.f32 %v2875, %v3267
      %3271 = vrot.lane.b32.xlu0 %v2687, 112
      %v3272 = vpop.permute.xlu0 %3271
      %3273 = vrot.lane.b32.xlu0 %v2688, 112
      %v3274 = vpop.permute.xlu0 %3273
      %v3275 = vsel %vm925, %v3272, %v3274
      %v3276 = vsel %vm925, %v3274, %v3272
      %v3277 = vmul.f32 %v3275, %v934
      %v3278 = vmul.f32 %v3276, %v938
      %s3279 = scalar_lea.vmem %s4, 16
      %v3280 = vld [vmem:[%s3279] sm:$0x1]
      %v3282 = vsel %vm350, %v3280, 0
      %3284 = vmatprep.subr.mxu0 %v3278
      %3285 = vmatpush1.msra.mxu0 %v3277
      %3286 = vmatprep.subr.mxu0 0.0
      %3287 = vmatpush1.msra.mxu0 0.0
      %3288 = vmatprep.subr.mxu0 0.0
      %3289 = vmatpush1.msra.mxu0 0.0
      %3290 = vmatprep.subr.mxu0 0.0
      %3291 = vmatpush1.msra.mxu0 0.0
      %3292 = vmatprep.subr.mxu0 0.0
      %3293 = vmatpush1.msra.mxu0 0.0
      %3294 = vmatprep.subr.mxu0 0.0
      %3295 = vmatpush1.msra.mxu0 0.0
      %3296 = vmatprep.subr.mxu0 0.0
      %3297 = vmatpush1.msra.mxu0 0.0
      %3298 = vmatprep.subr.mxu0 0.0
      %3299 = vmatpush1.msra.mxu0 0.0
      %3300 = vmatprep.subr.mxu0 0.0
      %3301 = vmatpush1.msra.mxu0 0.0
      %3302 = vmatprep.subr.mxu0 0.0
      %3303 = vmatpush1.msra.mxu0 0.0
      %3304 = vmatprep.subr.mxu0 0.0
      %3305 = vmatpush1.msra.mxu0 0.0
      %3306 = vmatprep.subr.mxu0 0.0
      %3307 = vmatpush1.msra.mxu0 0.0
      %3308 = vmatprep.subr.mxu0 0.0
      %3309 = vmatpush1.msra.mxu0 0.0
      %3310 = vmatprep.subr.mxu0 0.0
      %3311 = vmatpush1.msra.mxu0 0.0
      %3312 = vmatprep.subr.mxu0 0.0
      %3313 = vmatpush1.msra.mxu0 0.0
      %3314 = vmatprep.subr.mxu0 0.0
      %3315 = vmatpush1.msra.mxu0 0.0
      %3316 = vmatprep.subr.mxu0 0.0
      %3317 = vmatpush1.msra.mxu0 0.0
      %3318 = vmatprep.subr.mxu0 0.0
      %3319 = vmatpush1.msra.mxu0 0.0
      %3320 = vmatprep.subr.mxu0 0.0
      %3321 = vmatpush1.msra.mxu0 0.0
      %3322 = vmatprep.subr.mxu0 0.0
      %3323 = vmatpush1.msra.mxu0 0.0
      %3324 = vmatprep.subr.mxu0 0.0
      %3325 = vmatpush1.msra.mxu0 0.0
      %3326 = vmatprep.subr.mxu0 0.0
      %3327 = vmatpush1.msra.mxu0 0.0
      %3328 = vmatprep.subr.mxu0 0.0
      %3329 = vmatpush1.msra.mxu0 0.0
      %3330 = vmatprep.subr.mxu0 0.0
      %3331 = vmatpush1.msra.mxu0 0.0
      %3332 = vmatprep.subr.mxu0 0.0
      %3333 = vmatpush1.msra.mxu0 0.0
      %3334 = vmatprep.subr.mxu0 0.0
      %3335 = vmatpush1.msra.mxu0 0.0
      %3336 = vmatprep.subr.mxu0 0.0
      %3337 = vmatpush1.msra.mxu0 0.0
      %3338 = vmatprep.subr.mxu0 0.0
      %3339 = vmatpush1.msra.mxu0 0.0
      %3340 = vmatprep.subr.mxu0 0.0
      %3341 = vmatpush1.msra.mxu0 0.0
      %3342 = vmatprep.subr.mxu0 0.0
      %3343 = vmatpush1.msra.mxu0 0.0
      %3344 = vmatprep.subr.mxu0 0.0
      %3345 = vmatpush1.msra.mxu0 0.0
      %3346 = vmatprep.subr.mxu0 0.0
      %3347 = vmatpush1.msra.mxu0 0.0
      %3348 = vmatprep.mubr.f32.mxu0 0.0
      %3349 = vmatmul.mubr.f32.gmra.mrb[0].mxu0 %v3282
      %v3350 = vpop.f32.mrb[0].mxu0
      %v3351 = vadd.f32 0.0, %v3350
      %v3352 = vpop.f32.mrb[0].mxu0
      %v3353 = vadd.f32 0.0, %v3352
      %3354 = vdwg.mxu0
      %v3355 = vadd.f32 %v3023, %v3351
      %v3356 = vadd.f32 %v3025, %v3353
      %3357 = vrot.lane.b32.xlu0 %v2687, 111
      %v3358 = vpop.permute.xlu0 %3357
      %3359 = vrot.lane.b32.xlu0 %v2688, 111
      %v3360 = vpop.permute.xlu0 %3359
      %v3361 = vsel %vm1025, %v3358, %v3360
      %v3362 = vsel %vm1025, %v3360, %v3358
      %v3363 = vmul.f32 %v3361, %v1034
      %v3364 = vmul.f32 %v3362, %v1038
      %s3365 = scalar_lea.vmem %s4, 17
      %v3366 = vld [vmem:[%s3365] sm:$0x1]
      %v3368 = vsel %vm350, %v3366, 0
      %3370 = vmatprep.subr.mxu0 %v3364
      %3371 = vmatpush1.msra.mxu0 %v3363
      %3372 = vmatprep.subr.mxu0 0.0
      %3373 = vmatpush1.msra.mxu0 0.0
      %3374 = vmatprep.subr.mxu0 0.0
      %3375 = vmatpush1.msra.mxu0 0.0
      %3376 = vmatprep.subr.mxu0 0.0
      %3377 = vmatpush1.msra.mxu0 0.0
      %3378 = vmatprep.subr.mxu0 0.0
      %3379 = vmatpush1.msra.mxu0 0.0
      %3380 = vmatprep.subr.mxu0 0.0
      %3381 = vmatpush1.msra.mxu0 0.0
      %3382 = vmatprep.subr.mxu0 0.0
      %3383 = vmatpush1.msra.mxu0 0.0
      %3384 = vmatprep.subr.mxu0 0.0
      %3385 = vmatpush1.msra.mxu0 0.0
      %3386 = vmatprep.subr.mxu0 0.0
      %3387 = vmatpush1.msra.mxu0 0.0
      %3388 = vmatprep.subr.mxu0 0.0
      %3389 = vmatpush1.msra.mxu0 0.0
      %3390 = vmatprep.subr.mxu0 0.0
      %3391 = vmatpush1.msra.mxu0 0.0
      %3392 = vmatprep.subr.mxu0 0.0
      %3393 = vmatpush1.msra.mxu0 0.0
      %3394 = vmatprep.subr.mxu0 0.0
      %3395 = vmatpush1.msra.mxu0 0.0
      %3396 = vmatprep.subr.mxu0 0.0
      %3397 = vmatpush1.msra.mxu0 0.0
      %3398 = vmatprep.subr.mxu0 0.0
      %3399 = vmatpush1.msra.mxu0 0.0
      %3400 = vmatprep.subr.mxu0 0.0
      %3401 = vmatpush1.msra.mxu0 0.0
      %3402 = vmatprep.subr.mxu0 0.0
      %3403 = vmatpush1.msra.mxu0 0.0
      %3404 = vmatprep.subr.mxu0 0.0
      %3405 = vmatpush1.msra.mxu0 0.0
      %3406 = vmatprep.subr.mxu0 0.0
      %3407 = vmatpush1.msra.mxu0 0.0
      %3408 = vmatprep.subr.mxu0 0.0
      %3409 = vmatpush1.msra.mxu0 0.0
      %3410 = vmatprep.subr.mxu0 0.0
      %3411 = vmatpush1.msra.mxu0 0.0
      %3412 = vmatprep.subr.mxu0 0.0
      %3413 = vmatpush1.msra.mxu0 0.0
      %3414 = vmatprep.subr.mxu0 0.0
      %3415 = vmatpush1.msra.mxu0 0.0
      %3416 = vmatprep.subr.mxu0 0.0
      %3417 = vmatpush1.msra.mxu0 0.0
      %3418 = vmatprep.subr.mxu0 0.0
      %3419 = vmatpush1.msra.mxu0 0.0
      %3420 = vmatprep.subr.mxu0 0.0
      %3421 = vmatpush1.msra.mxu0 0.0
      %3422 = vmatprep.subr.mxu0 0.0
      %3423 = vmatpush1.msra.mxu0 0.0
      %3424 = vmatprep.subr.mxu0 0.0
      %3425 = vmatpush1.msra.mxu0 0.0
      %3426 = vmatprep.subr.mxu0 0.0
      %3427 = vmatpush1.msra.mxu0 0.0
      %3428 = vmatprep.subr.mxu0 0.0
      %3429 = vmatpush1.msra.mxu0 0.0
      %3430 = vmatprep.subr.mxu0 0.0
      %3431 = vmatpush1.msra.mxu0 0.0
      %3432 = vmatprep.subr.mxu0 0.0
      %3433 = vmatpush1.msra.mxu0 0.0
      %3434 = vmatprep.mubr.f32.mxu0 0.0
      %3435 = vmatmul.mubr.f32.gmra.mrb[0].mxu0 %v3368
      %v3436 = vpop.f32.mrb[0].mxu0
      %v3437 = vadd.f32 0.0, %v3436
      %v3438 = vpop.f32.mrb[0].mxu0
      %v3439 = vadd.f32 0.0, %v3438
      %3440 = vdwg.mxu0
      %v3441 = vadd.f32 %v3181, %v3437
      %v3442 = vadd.f32 %v3183, %v3439
      %v3443 = vadd.f32 %v3269, %v3355
      %v3444 = vadd.f32 %v3270, %v3356
      %s3445 = scalar_lea.vmem %s5, 1
      %v3446 = vld [vmem:[%s3445] sm:$0x1]
      %3448 = vset.pattern.permute.xlu0 0
      %3449 = vperm.xlu0 %3448, %v3446
      %v3450 = vpop.permute.xlu0 %3449
      %v3452 = vlaneseq
      %v3453 = vshrl.u32 %v3452, 7
      %v3454 = vsub.s32 0, %v3453
      %v3455 = vrot.slane %v3450, %v3454
      %v3456 = vadd.f32 %v3441, %v3455
      %v3457 = vadd.f32 %v3442, %v3455
      %v3458 = vadd.f32 %v3443, %v3456
      %v3459 = vadd.f32 %v3444, %v3457
      %v3462 = vrot.slane %v3458, 7
      %v3463 = vrot.slane %v3459, 7
      %vm3466 = vcmask 1040384
      %v3467 = vsel %vm3466, %v1902, %v3462
      %v3468 = vsel %vm3466, %v1903, %v3463
      %v3471 = vcombine.low %v3467, %v3468
      %v3473 = vunpack.c.l.s4 1983009808
      %v3474 = vunpack.c.0.s8 %v3473
      %v3475 = vlaneseq
      %v3476 = vshrl.u32 %v3475, 7
      %v3477 = vsub.s32 %v3474, %v3476
      %v3478 = vrot.slane %v3471, %v3477
      %3480 = vst [vmem:[%s251] sm:$0xf] %v3478
      %p3481 = scmp.lt.s32.totalorder %s17, 1
      %s3482 = scalar_select %p3481, %s17, 1
      %s3483 = smul.addr %s3482, 2
      %s3484 = smul.addr %s3483, 2
      %s3485 = scalar_lea.vmem %s6, %s3484
      // Predicated region
      $region45: #{_lambda_.1} parent=43 // pred_check
        %p3486 = pneg %p166
      $region46: #{_lambda_.1} parent=43 // pred_check_branch
        %3488 = sbr.rel (%p3486) target = $region48
      $region47: #{_lambda_.1} parent=43 // pred_region
        _
      $region48: #{_lambda_.1} parent=43 // pred_fallthru
        _
    $region44: #{_lambda_.1} parent=5 // pred_fallthru
      _
    %p3489 = scmp.le.s32.totalorder 2, %s12
    // Predicated region
    $region49: #{_lambda_.1} parent=5 // pred_check
      %p3490 = pneg %p3489
    $region50: #{_lambda_.1} parent=5 // pred_check_branch
      %3492 = sbr.rel (%p3490) target = $region52
    $region51: #{_lambda_.1} parent=5 // pred_region
      %s3493 = ssub.s32 %s12, 2
      // Predicated region
      $region53: #{_lambda_.1} parent=51 // pred_check
        %p3494 = pneg %p172
      $region54: #{_lambda_.1} parent=51 // pred_check_branch
        %3496 = sbr.rel (%p3494) target = $region56
      $region55: #{_lambda_.1} parent=51 // pred_region
        %p3497 = scmp.lt.s32.totalorder %s18, 1
        %s3498 = scalar_select %p3497, %s18, 1
        %s3499 = smul.addr %s3498, 2
        %s3500 = smul.addr %s3499, 2
        %s3501 = scalar_lea.vmem %s6, %s3500
      $region56: #{_lambda_.1} parent=51 // pred_fallthru
        _
    $region52: #{_lambda_.1} parent=5 // pred_fallthru
      _
  $region6: #{_lambda_.1} parent=0 // loop_footer
    %s16 = sadd.s32 1, %s12
  $region7: #{_lambda_.1} parent=0 // loop_footer_branch
    %11 = sbr.rel target = $region3
  $region8: #{_lambda_.1} parent=0 // loop_exit
    _

</llo_original>
